<compile_context>
chip_gen: v5e
topology: v5e:2x2
jax: 0.10.0
libtpu: 0.0.40
codegen_flags: <defaults>
</compile_context>

<pallas_src>
import functools

import jax
import jax.numpy as jnp
import numpy as np
from jax import lax
from jax.experimental import pallas as pl
from jax.experimental.pallas import tpu as pltpu


def _sage_kernel(adj_ref, deg_ref, xw_ref, bg_ref, w1_ref, b1_ref, w2_ref, b2_ref,
                 emb_ref, pen_ref,
                 s2_sc, ge_sc, gram_sc, sa_sc,
                 *, n_tiles, tile):
    i = pl.program_id(0)                      # adjacency row-tile index
    row0 = pl.multiple_of(i * tile, tile)

    @pl.when(i == 0)
    def _init():
        ge_sc[...] = jnp.zeros_like(ge_sc)    # assign^T @ h
        gram_sc[...] = jnp.zeros_like(gram_sc)  # assign^T @ assign
        sa_sc[...] = jnp.zeros_like(sa_sc)    # (d2*assign)^T @ A

    a_tile = adj_ref[...]                     # (tile, N) bf16 raw adjacency rows
    d1_rows = deg_ref[:, 0:1]                 # (tile, 1) D_hat^-1/2 (GCN norm, self loops)
    d2_rows = deg_ref[:, 1:2]                 # (tile, 1) D^-1/2     (Laplacian norm)

    # ---- GCNConv rows: h = d1 * (A @ xw + xw_rows) + bg, with xw = d1 * (X @ Wg) --------
    agg = jnp.dot(a_tile, xw_ref[...], preferred_element_type=jnp.float32)   # (tile, D)
    if n_tiles == 1:
        xw_self = xw_ref[...]
    else:
        xw_self = xw_ref[pl.ds(row0, tile), :]
    agg = agg + xw_self.astype(jnp.float32)
    h = d1_rows * agg + bg_ref[...]                                          # (tile, D)

    # ---- MLP + softmax assignment -------------------------------------------------------
    a1 = jnp.tanh(jnp.dot(h, w1_ref[...], preferred_element_type=jnp.float32) + b1_ref[...])
    logits = jnp.dot(a1, w2_ref[...], preferred_element_type=jnp.float32) + b2_ref[...]
    logits = logits - jnp.max(logits, axis=1, keepdims=True)
    e = jnp.exp(logits)
    assign = e * pl.reciprocal(jnp.sum(e, axis=1, keepdims=True), approx=True)  # (tile, C) f32

    s2_rows = d2_rows * assign                                               # (tile, C) f32

    # ---- graph-level accumulators (contract the node axis) ------------------------------
    ge_sc[...] += lax.dot_general(assign, h, (((0,), (0,)), ((), ())),
                                  preferred_element_type=jnp.float32)        # (C, D)
    gram_sc[...] += lax.dot_general(assign, assign, (((0,), (0,)), ((), ())),
                                    preferred_element_type=jnp.float32)      # (C, C)
    # bf16 cast only pairs the tiny (tile, C) operand with the already-bf16 adjacency tile;
    # accumulation and stored state remain f32.
    sa_sc[...] += lax.dot_general(s2_rows.astype(jnp.bfloat16), a_tile,
                                  (((0,), (0,)), ((), ())),
                                  preferred_element_type=jnp.float32)        # (C, N)

    # lane-dense (C, tile) store of the scaled assignment (resident for the finalize dot)
    s2_t = jnp.transpose(s2_rows)                                            # (C, tile)
    if n_tiles == 1:
        s2_sc[...] = s2_t
    else:
        s2_sc[:, pl.ds(row0, tile)] = s2_t

    # ---- finalize on the last tile -------------------------------------------------------
    @pl.when(i == n_tiles - 1)
    def _finalize():
        # pooled = assign^T assign - (d2*assign)^T A (d2*assign)  ==  assign^T L assign
        pooled = gram_sc[...] - lax.dot_general(sa_sc[...], s2_sc[...],
                                                (((1,), (1,)), ((), ())),
                                                preferred_element_type=jnp.float32)
        # F.normalize(p=1, dim=1): exact divide (runs once on a (C, C) tile).
        row_l1 = jnp.sum(jnp.abs(pooled), axis=1, keepdims=True)
        norm_adj = pooled / jnp.maximum(row_l1, 1e-12)
        c = norm_adj.shape[0]
        eye = (lax.broadcasted_iota(jnp.int32, (c, c), 0) ==
               lax.broadcasted_iota(jnp.int32, (c, c), 1)).astype(jnp.float32)
        diag = jnp.sum(norm_adj * eye, axis=1, keepdims=True)                # (C, 1)
        pen_ref[...] = jnp.full((1, 1), jnp.mean((diag - 1.0) ** 2), jnp.float32)
        emb_ref[...] = jnp.mean(ge_sc[...], axis=0, keepdims=True)           # (1, D)


def sage_forward(adj, x, wg, bg, w1, b1, w2, b2, *, tile_rows=None):
    """adj: raw dense (N, N) weighted adjacency (no self loops). Weights are (in, out)."""
    n, f = x.shape
    d_gcn = wg.shape[1]
    h1 = w1.shape[1]
    c = w2.shape[1]
    assert adj.shape == (n, n)

    # degree^-1/2 vectors: col 0 with self loops (GCNConv norm), col 1 without (Laplacian).
    deg = jnp.sum(adj, axis=1)
    d1 = (deg + 1.0) ** -0.5
    d2 = jnp.where(deg > 0, deg ** -0.5, 0.0)
    deg_scale = jnp.stack([d1, d2], axis=1).astype(jnp.float32)              # (N, 2)

    # Hoisted GCN projection (removes a per-tile (tile,F)x(F,D) matmul and the xs scratch).
    xw = (d1[:, None] * (x.astype(jnp.float32) @ wg)).astype(jnp.bfloat16)   # (N, D)

    # ---- per-generation VMEM budget and adjacency row tile --------------------------------
    try:
        phys_vmem = int(pltpu.get_tpu_info().vmem_capacity_bytes)
    except Exception:
        phys_vmem = 64 * 1024 * 1024          # conservative fallback (v7x size)
    vmem_limit = max(min(phys_vmem - (16 << 20), 96 << 20), 32 << 20)

    resident_bytes = (n * d_gcn * 2                          # xw (bf16)
                      + 2 * 8 * n * 4                        # (C,N) scratches, sublane-padded
                      + 4 * (d_gcn * h1 + h1 * c + d_gcn + h1 + c)
                      + (1 << 20))                           # slack for small buffers
    if tile_rows is None:
        budget = max(vmem_limit - resident_bytes - (4 << 20), 1 << 20)
        max_rows = budget // (2 * 2 * n)                     # double-buffered bf16 rows
        if max_rows >= n:
            tile = n
        else:
            tile = (max_rows // 128) * 128
            while tile >= 128 and n % tile != 0:
                tile -= 128
            assert tile >= 128, "adjacency row tile could not be aligned; pad N"
    else:
        tile = min(tile_rows, n)
    assert n % tile == 0 and (tile == n or tile % 128 == 0), "row tile must divide N (x128)"
    n_tiles = n // tile

    adj_bf16 = adj.astype(jnp.bfloat16)       # halves the O(N^2) HBM stream; f32 accumulate

    flops = int(2 * n * n * (d_gcn + c)
                + 2 * n * (d_gcn * h1 + h1 * c + c * d_gcn + c * c)
                + 2 * c * n * c)
    bytes_accessed = int(n * n * 2                           # adjacency streamed ONCE
                         + n * (d_gcn * 2 + 2 * 4)           # xw + degree vectors
                         + 4 * (d_gcn * h1 + h1 * c + d_gcn + h1 + c)
                         + 4 * (d_gcn + 1))
    cost = pl.CostEstimate(flops=flops, transcendentals=int(n * (h1 + c)),
                           bytes_accessed=bytes_accessed)

    const = lambda i: (0, 0)
    kernel = functools.partial(_sage_kernel, n_tiles=n_tiles, tile=tile)
    out = pl.pallas_call(
        kernel,
        grid=(n_tiles,),
        in_specs=[
            pl.BlockSpec((tile, n), lambda i: (i, 0)),       # adjacency row tiles (streamed)
            pl.BlockSpec((tile, 2), lambda i: (i, 0)),       # degree^-1/2 rows (streamed)
            pl.BlockSpec((n, d_gcn), const),                 # d1 * (X @ Wg), resident
            pl.BlockSpec((1, d_gcn), const),                 # GCN bias
            pl.BlockSpec((d_gcn, h1), const),                # FC1 weight
            pl.BlockSpec((1, h1), const),                    # FC1 bias
            pl.BlockSpec((h1, c), const),                    # FC2 weight
            pl.BlockSpec((1, c), const),                     # FC2 bias
        ],
        out_specs=(
            pl.BlockSpec((1, d_gcn), const),                 # graph embedding
            pl.BlockSpec((1, 1), const),                     # positive penalty (scalar)
        ),
        out_shape=(
            jax.ShapeDtypeStruct((1, d_gcn), jnp.float32),
            jax.ShapeDtypeStruct((1, 1), jnp.float32),
        ),
        scratch_shapes=[
            pltpu.VMEM((c, n), jnp.float32),        # D^-1/2 * assignment (lane-dense, f32)
            pltpu.VMEM((c, d_gcn), jnp.float32),    # assign^T @ h accumulator
            pltpu.VMEM((c, c), jnp.float32),        # assign^T @ assign accumulator
            pltpu.VMEM((c, n), jnp.float32),        # (d2*assign)^T @ A accumulator
        ],
        compiler_params=pltpu.CompilerParams(
            dimension_semantics=("arbitrary",),
            vmem_limit_bytes=int(vmem_limit),       # 48 MiB on v7x, 96 MiB on v5e/v6e
        ),
        cost_estimate=cost,
    )(adj_bf16, deg_scale, xw, bg, w1, b1, w2, b2)

    graph_embedding, pos_penalty = out
    return graph_embedding, pos_penalty[0, 0]


# ---------------------------------------------------------------------------
# plain-JAX glue + f32 reference (on the same bf16-quantized adjacency stream)
# ---------------------------------------------------------------------------
def build_dense_adjacency(edge_index, edge_weight, n):
    src, dst = edge_index[0], edge_index[1]
    return jnp.zeros((n, n), jnp.float32).at[src, dst].add(edge_weight)


def sage_reference(adj, x, wg, bg, w1, b1, w2, b2):
    n = adj.shape[0]
    adj_q = adj.astype(jnp.bfloat16).astype(jnp.float32)   # match the kernel's bf16 stream
    deg = jnp.sum(adj, axis=1)
    d1 = (deg + 1.0) ** -0.5
    d2 = jnp.where(deg > 0, deg ** -0.5, 0.0)
    a_norm = d1[:, None] * (adj_q + jnp.eye(n, dtype=jnp.float32)) * d1[None, :]
    lap = jnp.eye(n, dtype=jnp.float32) - d2[:, None] * adj_q * d2[None, :]
    h = a_norm @ (x @ wg) + bg
    a1 = jnp.tanh(h @ w1 + b1)
    assign = jax.nn.softmax(a1 @ w2 + b2, axis=1)
    new_adj = assign.T @ lap @ assign
    norm_adj = new_adj / jnp.maximum(jnp.sum(jnp.abs(new_adj), axis=1, keepdims=True), 1e-12)
    diag = jnp.diagonal(norm_adj)
    pos_penalty = jnp.mean((diag - 1.0) ** 2)
    emb = jnp.mean(assign.T @ h, axis=0, keepdims=True)
    return emb, pos_penalty


if __name__ == "__main__":
    # shapes implied by the module (first_gcn_dimensions == second_gcn_dimensions)
    N = 512                     # nodes
    F = 16                      # num_features
    D_GCN = 32                  # first/second_gcn_dimensions
    H1 = 16                     # first_dense_neurons
    C = 2                       # second_dense_neurons (clusters; EYE = ones(2))

    key = jax.random.PRNGKey(0)
    kx, kwg, kw1, kw2, kew = jax.random.split(key, 5)

    # ring graph, symmetric weights, no isolated nodes
    src = jnp.arange(N, dtype=jnp.int32)
    dst = (src + 1) % N
    edge_index = jnp.stack([jnp.concatenate([src, dst]),
                            jnp.concatenate([dst, src])], axis=0)            # (2, 2N)
    w_half = jax.random.uniform(kew, (N,), minval=0.5, maxval=1.5)
    edge_weight = jnp.concatenate([w_half, w_half]).astype(jnp.float32)

    x = jax.random.normal(kx, (N, F), dtype=jnp.float32)

    # deterministic synthetic parameters (torch Linear stores (out,in); we store (in,out))
    wg = 0.1 * jax.random.normal(kwg, (F, D_GCN), dtype=jnp.float32)
    bg = jnp.zeros((1, D_GCN), jnp.float32)
    w1 = 0.1 * jax.random.normal(kw1, (D_GCN, H1), dtype=jnp.float32)
    b1 = jnp.full((1, H1), 0.01, jnp.float32)
    w2 = 0.1 * jax.random.normal(kw2, (H1, C), dtype=jnp.float32)
    b2 = jnp.full((1, C), 0.01, jnp.float32)

    adj = build_dense_adjacency(edge_index, edge_weight, N)

    graph_embedding, pos_penalty = sage_forward(adj, x, wg, bg, w1, b1, w2, b2)
    jax.block_until_ready((graph_embedding, pos_penalty))

    assert graph_embedding.shape == (1, D_GCN)
    assert jnp.isfinite(graph_embedding).all() and jnp.isfinite(pos_penalty)

    emb_exp, pen_exp = sage_reference(adj, x, wg, bg, w1, b1, w2, b2)
    np.testing.assert_allclose(np.asarray(graph_embedding), np.asarray(emb_exp),
                               rtol=1e-1, atol=5e-2)
    np.testing.assert_allclose(float(pos_penalty), float(pen_exp),
                               rtol=2e-1, atol=3e-2)
    print("KERNEL_OK")
</pallas_src>

<mosaic_0001>
module attributes {stable_mosaic.version = 11 : i64} {
  func.func @_sage_kernel(%arg0: i32, %arg1: memref<512x512xbf16, #tpu.memory_space<vmem>>, %arg2: memref<512x2xf32, #tpu.memory_space<vmem>>, %arg3: memref<512x32xbf16, #tpu.memory_space<vmem>>, %arg4: memref<1x32xf32, #tpu.memory_space<vmem>>, %arg5: memref<32x16xf32, #tpu.memory_space<vmem>>, %arg6: memref<1x16xf32, #tpu.memory_space<vmem>>, %arg7: memref<16x2xf32, #tpu.memory_space<vmem>>, %arg8: memref<1x2xf32, #tpu.memory_space<vmem>>, %arg9: memref<1x32xf32, #tpu.memory_space<vmem>>, %arg10: memref<1x1xf32, #tpu.memory_space<vmem>>, %arg11: memref<2x512xf32, #tpu.memory_space<vmem>>, %arg12: memref<2x32xf32, #tpu.memory_space<vmem>>, %arg13: memref<2x2xf32, #tpu.memory_space<vmem>>, %arg14: memref<2x512xf32, #tpu.memory_space<vmem>>) attributes {dimension_semantics = [#tpu.dimension_semantics<arbitrary>], iteration_bounds = array<i64: 1>, scalar_prefetch = 0 : i64, scratch_operands = 4 : i64, tpu.core_type = #tpu.core_type<tc>, window_params = [{transform_indices = @transform_0, window_bounds = array<i64: 512, 512>}, {transform_indices = @transform_1, window_bounds = array<i64: 512, 2>}, {pipeline_mode = #tpu.pipeline_mode<synchronous>, transform_indices = @transform_2, window_bounds = array<i64: 512, 32>}, {pipeline_mode = #tpu.pipeline_mode<synchronous>, transform_indices = @transform_3, window_bounds = array<i64: 1, 32>}, {pipeline_mode = #tpu.pipeline_mode<synchronous>, transform_indices = @transform_4, window_bounds = array<i64: 32, 16>}, {pipeline_mode = #tpu.pipeline_mode<synchronous>, transform_indices = @transform_5, window_bounds = array<i64: 1, 16>}, {pipeline_mode = #tpu.pipeline_mode<synchronous>, transform_indices = @transform_6, window_bounds = array<i64: 16, 2>}, {pipeline_mode = #tpu.pipeline_mode<synchronous>, transform_indices = @transform_7, window_bounds = array<i64: 1, 2>}, {pipeline_mode = #tpu.pipeline_mode<synchronous>, transform_indices = @transform_8, window_bounds = array<i64: 1, 32>}, {pipeline_mode = #tpu.pipeline_mode<synchronous>, transform_indices = @transform_9, window_bounds = array<i64: 1, 1>}]} {
    %c0_i32 = arith.constant 0 : i32
    %0 = arith.cmpi eq, %arg0, %c0_i32 : i32
    %1 = arith.extui %0 : i1 to i32
    %c0_i32_0 = arith.constant 0 : i32
    %2 = arith.cmpi ne, %1, %c0_i32_0 : i32
    scf.if %2 {
      %cst_42 = arith.constant 0.000000e+00 : f32
      %57 = vector.broadcast %cst_42 : f32 to vector<2x32xf32>
      %c0_43 = arith.constant 0 : index
      %c0_44 = arith.constant 0 : index
      %58 = vector.load %arg12[%c0_43, %c0_44] : memref<2x32xf32, #tpu.memory_space<vmem>>, vector<2x32xf32>
      tpu.vector_store %arg12[%c0_43, %c0_44], %57 {strides = array<i32>} : memref<2x32xf32, #tpu.memory_space<vmem>>, vector<2x32xf32>,
      %cst_45 = arith.constant 0.000000e+00 : f32
      %59 = vector.broadcast %cst_45 : f32 to vector<2x2xf32>
      %c0_46 = arith.constant 0 : index
      %c0_47 = arith.constant 0 : index
      %60 = vector.load %arg13[%c0_46, %c0_47] : memref<2x2xf32, #tpu.memory_space<vmem>>, vector<2x2xf32>
      tpu.vector_store %arg13[%c0_46, %c0_47], %59 {strides = array<i32>} : memref<2x2xf32, #tpu.memory_space<vmem>>, vector<2x2xf32>,
      %cst_48 = arith.constant 0.000000e+00 : f32
      %61 = vector.broadcast %cst_48 : f32 to vector<2x512xf32>
      %c0_49 = arith.constant 0 : index
      %c0_50 = arith.constant 0 : index
      %62 = vector.load %arg14[%c0_49, %c0_50] : memref<2x512xf32, #tpu.memory_space<vmem>>, vector<2x512xf32>
      tpu.vector_store %arg14[%c0_49, %c0_50], %61 {strides = array<i32>} : memref<2x512xf32, #tpu.memory_space<vmem>>, vector<2x512xf32>,
    } else {
    }
    %c0 = arith.constant 0 : index
    %c0_1 = arith.constant 0 : index
    %3 = vector.load %arg1[%c0, %c0_1] : memref<512x512xbf16, #tpu.memory_space<vmem>>, vector<512x512xbf16>
    %c0_2 = arith.constant 0 : index
    %c0_3 = arith.constant 0 : index
    %4 = vector.load %arg2[%c0_2, %c0_3] : memref<512x2xf32, #tpu.memory_space<vmem>>, vector<512x1xf32>
    %c0_4 = arith.constant 0 : index
    %c1 = arith.constant 1 : index
    %5 = vector.load %arg2[%c0_4, %c1] : memref<512x2xf32, #tpu.memory_space<vmem>>, vector<512x1xf32>
    %c0_5 = arith.constant 0 : index
    %c0_6 = arith.constant 0 : index
    %6 = vector.load %arg3[%c0_5, %c0_6] : memref<512x32xbf16, #tpu.memory_space<vmem>>, vector<512x32xbf16>
    %cst = arith.constant dense<0.000000e+00> : vector<512x32xf32>
    %7 = tpu.matmul %3, %6, %cst {dimension_numbers = #tpu.dot_dimension_numbers<[1], [0], [0], [1], [0, 0, 1, 1], [], []>} : vector<512x512xbf16>, vector<512x32xbf16>, vector<512x32xf32> -> vector<512x32xf32>
    %c0_7 = arith.constant 0 : index
    %c0_8 = arith.constant 0 : index
    %8 = vector.load %arg3[%c0_7, %c0_8] : memref<512x32xbf16, #tpu.memory_space<vmem>>, vector<512x32xbf16>
    %9 = arith.extf %8 : vector<512x32xbf16> to vector<512x32xf32>
    %10 = arith.addf %7, %9 : vector<512x32xf32>
    %11 = vector.broadcast %4 : vector<512x1xf32> to vector<512x32xf32>
    %12 = arith.mulf %11, %10 : vector<512x32xf32>
    %c0_9 = arith.constant 0 : index
    %c0_10 = arith.constant 0 : index
    %13 = vector.load %arg4[%c0_9, %c0_10] : memref<1x32xf32, #tpu.memory_space<vmem>>, vector<1x32xf32>
    %14 = vector.broadcast %13 : vector<1x32xf32> to vector<512x32xf32>
    %15 = arith.addf %12, %14 : vector<512x32xf32>
    %c0_11 = arith.constant 0 : index
    %c0_12 = arith.constant 0 : index
    %16 = vector.load %arg5[%c0_11, %c0_12] : memref<32x16xf32, #tpu.memory_space<vmem>>, vector<32x16xf32>
    %cst_13 = arith.constant dense<0.000000e+00> : vector<512x16xf32>
    %17 = tpu.matmul %15, %16, %cst_13 {dimension_numbers = #tpu.dot_dimension_numbers<[1], [0], [0], [1], [0, 0, 1, 1], [], []>} : vector<512x32xf32>, vector<32x16xf32>, vector<512x16xf32> -> vector<512x16xf32>
    %c0_14 = arith.constant 0 : index
    %c0_15 = arith.constant 0 : index
    %18 = vector.load %arg6[%c0_14, %c0_15] : memref<1x16xf32, #tpu.memory_space<vmem>>, vector<1x16xf32>
    %19 = vector.broadcast %18 : vector<1x16xf32> to vector<512x16xf32>
    %20 = arith.addf %17, %19 : vector<512x16xf32>
    %21 = math.tanh %20 : vector<512x16xf32>
    %c0_16 = arith.constant 0 : index
    %c0_17 = arith.constant 0 : index
    %22 = vector.load %arg7[%c0_16, %c0_17] : memref<16x2xf32, #tpu.memory_space<vmem>>, vector<16x2xf32>
    %cst_18 = arith.constant dense<0.000000e+00> : vector<512x2xf32>
    %23 = tpu.matmul %21, %22, %cst_18 {dimension_numbers = #tpu.dot_dimension_numbers<[1], [0], [0], [1], [0, 0, 1, 1], [], []>} : vector<512x16xf32>, vector<16x2xf32>, vector<512x2xf32> -> vector<512x2xf32>
    %c0_19 = arith.constant 0 : index
    %c0_20 = arith.constant 0 : index
    %24 = vector.load %arg8[%c0_19, %c0_20] : memref<1x2xf32, #tpu.memory_space<vmem>>, vector<1x2xf32>
    %25 = vector.broadcast %24 : vector<1x2xf32> to vector<512x2xf32>
    %26 = arith.addf %23, %25 : vector<512x2xf32>
    %cst_21 = arith.constant dense<0xFF800000> : vector<512xf32>
    %27 = vector.multi_reduction <maximumf>, %26, %cst_21 [1] : vector<512x2xf32> to vector<512xf32>
    %28 = vector.shape_cast %27 : vector<512xf32> to vector<512x1xf32>
    %29 = vector.broadcast %28 : vector<512x1xf32> to vector<512x2xf32>
    %30 = arith.subf %26, %29 : vector<512x2xf32>
    %31 = math.exp %30 : vector<512x2xf32>
    %cst_22 = arith.constant dense<0.000000e+00> : vector<512xf32>
    %32 = vector.multi_reduction <add>, %31, %cst_22 [1] : vector<512x2xf32> to vector<512xf32>
    %33 = vector.shape_cast %32 : vector<512xf32> to vector<512x1xf32>
    %34 = tpu.reciprocal %33 {approx = true} : vector<512x1xf32> -> vector<512x1xf32>
    %35 = vector.broadcast %34 : vector<512x1xf32> to vector<512x2xf32>
    %36 = arith.mulf %31, %35 : vector<512x2xf32>
    %37 = vector.broadcast %5 : vector<512x1xf32> to vector<512x2xf32>
    %38 = arith.mulf %37, %36 : vector<512x2xf32>
    %c0_23 = arith.constant 0 : index
    %c0_24 = arith.constant 0 : index
    %39 = vector.load %arg12[%c0_23, %c0_24] : memref<2x32xf32, #tpu.memory_space<vmem>>, vector<2x32xf32>
    %cst_25 = arith.constant dense<0.000000e+00> : vector<2x32xf32>
    %40 = tpu.matmul %36, %15, %cst_25 {dimension_numbers = #tpu.dot_dimension_numbers<[0], [0], [1], [1], [0, 1, 1, 1], [], []>} : vector<512x2xf32>, vector<512x32xf32>, vector<2x32xf32> -> vector<2x32xf32>
    %41 = arith.addf %39, %40 : vector<2x32xf32>
    %c0_26 = arith.constant 0 : index
    %c0_27 = arith.constant 0 : index
    %42 = vector.load %arg12[%c0_26, %c0_27] : memref<2x32xf32, #tpu.memory_space<vmem>>, vector<2x32xf32>
    tpu.vector_store %arg12[%c0_26, %c0_27], %41 {strides = array<i32>} : memref<2x32xf32, #tpu.memory_space<vmem>>, vector<2x32xf32>,
    %c0_28 = arith.constant 0 : index
    %c0_29 = arith.constant 0 : index
    %43 = vector.load %arg13[%c0_28, %c0_29] : memref<2x2xf32, #tpu.memory_space<vmem>>, vector<2x2xf32>
    %cst_30 = arith.constant dense<0.000000e+00> : vector<2x2xf32>
    %44 = tpu.matmul %36, %36, %cst_30 {dimension_numbers = #tpu.dot_dimension_numbers<[0], [0], [1], [1], [0, 1, 1, 1], [], []>} : vector<512x2xf32>, vector<512x2xf32>, vector<2x2xf32> -> vector<2x2xf32>
    %45 = arith.addf %43, %44 : vector<2x2xf32>
    %c0_31 = arith.constant 0 : index
    %c0_32 = arith.constant 0 : index
    %46 = vector.load %arg13[%c0_31, %c0_32] : memref<2x2xf32, #tpu.memory_space<vmem>>, vector<2x2xf32>
    tpu.vector_store %arg13[%c0_31, %c0_32], %45 {strides = array<i32>} : memref<2x2xf32, #tpu.memory_space<vmem>>, vector<2x2xf32>,
    %c0_33 = arith.constant 0 : index
    %c0_34 = arith.constant 0 : index
    %47 = vector.load %arg14[%c0_33, %c0_34] : memref<2x512xf32, #tpu.memory_space<vmem>>, vector<2x512xf32>
    %48 = arith.truncf %38 : vector<512x2xf32> to vector<512x2xbf16>
    %cst_35 = arith.constant dense<0.000000e+00> : vector<2x512xf32>
    %49 = tpu.matmul %48, %3, %cst_35 {dimension_numbers = #tpu.dot_dimension_numbers<[0], [0], [1], [1], [0, 1, 1, 1], [], []>} : vector<512x2xbf16>, vector<512x512xbf16>, vector<2x512xf32> -> vector<2x512xf32>
    %50 = arith.addf %47, %49 : vector<2x512xf32>
    %c0_36 = arith.constant 0 : index
    %c0_37 = arith.constant 0 : index
    %51 = vector.load %arg14[%c0_36, %c0_37] : memref<2x512xf32, #tpu.memory_space<vmem>>, vector<2x512xf32>
    tpu.vector_store %arg14[%c0_36, %c0_37], %50 {strides = array<i32>} : memref<2x512xf32, #tpu.memory_space<vmem>>, vector<2x512xf32>,
    %52 = tpu.transpose %38, [1, 0] : vector<512x2xf32> -> vector<2x512xf32>
    %c0_38 = arith.constant 0 : index
    %c0_39 = arith.constant 0 : index
    %53 = vector.load %arg11[%c0_38, %c0_39] : memref<2x512xf32, #tpu.memory_space<vmem>>, vector<2x512xf32>
    tpu.vector_store %arg11[%c0_38, %c0_39], %52 {strides = array<i32>} : memref<2x512xf32, #tpu.memory_space<vmem>>, vector<2x512xf32>,
    %c0_i32_40 = arith.constant 0 : i32
    %54 = arith.cmpi eq, %arg0, %c0_i32_40 : i32
    %55 = arith.extui %54 : i1 to i32
    %c0_i32_41 = arith.constant 0 : i32
    %56 = arith.cmpi ne, %55, %c0_i32_41 : i32
    scf.if %56 {
      %c0_42 = arith.constant 0 : index
      %c0_43 = arith.constant 0 : index
      %57 = vector.load %arg13[%c0_42, %c0_43] : memref<2x2xf32, #tpu.memory_space<vmem>>, vector<2x2xf32>
      %c0_44 = arith.constant 0 : index
      %c0_45 = arith.constant 0 : index
      %58 = vector.load %arg14[%c0_44, %c0_45] : memref<2x512xf32, #tpu.memory_space<vmem>>, vector<2x512xf32>
      %c0_46 = arith.constant 0 : index
      %c0_47 = arith.constant 0 : index
      %59 = vector.load %arg11[%c0_46, %c0_47] : memref<2x512xf32, #tpu.memory_space<vmem>>, vector<2x512xf32>
      %cst_48 = arith.constant dense<0.000000e+00> : vector<2x2xf32>
      %60 = tpu.matmul %58, %59, %cst_48 {dimension_numbers = #tpu.dot_dimension_numbers<[1], [1], [0], [0], [0, 0, 1, 0], [], []>} : vector<2x512xf32>, vector<2x512xf32>, vector<2x2xf32> -> vector<2x2xf32>
      %61 = arith.subf %57, %60 : vector<2x2xf32>
      %62 = math.absf %61 : vector<2x2xf32>
      %cst_49 = arith.constant dense<0.000000e+00> : vector<2xf32>
      %63 = vector.multi_reduction <add>, %62, %cst_49 [1] : vector<2x2xf32> to vector<2xf32>
      %64 = vector.shape_cast %63 : vector<2xf32> to vector<2x1xf32>
      %cst_50 = arith.constant 9.99999996E-13 : f32
      %65 = vector.broadcast %cst_50 : f32 to vector<2x1xf32>
      %66 = arith.maximumf %64, %65 : vector<2x1xf32>
      %67 = vector.broadcast %66 : vector<2x1xf32> to vector<2x2xf32>
      %68 = arith.divf %61, %67 : vector<2x2xf32>
      %69 = tpu.iota {dimensions = array<i32: 0>} : vector<2x2xi32>
      %70 = tpu.iota {dimensions = array<i32: 1>} : vector<2x2xi32>
      %71 = arith.cmpi eq, %69, %70 : vector<2x2xi32>
      %72 = arith.extui %71 : vector<2x2xi1> to vector<2x2xi32>
      %73 = arith.sitofp %72 : vector<2x2xi32> to vector<2x2xf32>
      %74 = arith.mulf %68, %73 : vector<2x2xf32>
      %cst_51 = arith.constant dense<0.000000e+00> : vector<2xf32>
      %75 = vector.multi_reduction <add>, %74, %cst_51 [1] : vector<2x2xf32> to vector<2xf32>
      %76 = vector.shape_cast %75 : vector<2xf32> to vector<2x1xf32>
      %cst_52 = arith.constant 1.000000e+00 : f32
      %77 = vector.broadcast %cst_52 : f32 to vector<2x1xf32>
      %78 = arith.subf %76, %77 : vector<2x1xf32>
      %79 = arith.mulf %78, %78 : vector<2x1xf32>
      %80 = vector.shape_cast %79 : vector<2x1xf32> to vector<1x2x1xf32>
      %cst_53 = arith.constant dense<0.000000e+00> : vector<1xf32>
      %81 = vector.multi_reduction <add>, %80, %cst_53 [1, 2] : vector<1x2x1xf32> to vector<1xf32>
      %82 = vector.shape_cast %81 : vector<1xf32> to vector<1x1x1xf32>
      %83 = vector.extract %82[0, 0, 0] : f32 from vector<1x1x1xf32>
      %cst_54 = arith.constant 2.000000e+00 : f32
      %84 = arith.divf %83, %cst_54 : f32
      %85 = vector.broadcast %84 : f32 to vector<1x1xf32>
      %c0_55 = arith.constant 0 : index
      %c0_56 = arith.constant 0 : index
      %86 = vector.load %arg10[%c0_55, %c0_56] : memref<1x1xf32, #tpu.memory_space<vmem>>, vector<1x1xf32>
      tpu.vector_store %arg10[%c0_55, %c0_56], %85 {strides = array<i32>} : memref<1x1xf32, #tpu.memory_space<vmem>>, vector<1x1xf32>,
      %c0_57 = arith.constant 0 : index
      %c0_58 = arith.constant 0 : index
      %87 = vector.load %arg12[%c0_57, %c0_58] : memref<2x32xf32, #tpu.memory_space<vmem>>, vector<2x32xf32>
      %cst_59 = arith.constant dense<0.000000e+00> : vector<32xf32>
      %88 = vector.multi_reduction <add>, %87, %cst_59 [0] : vector<2x32xf32> to vector<32xf32>
      %89 = vector.shape_cast %88 : vector<32xf32> to vector<1x32xf32>
      %cst_60 = arith.constant 2.000000e+00 : f32
      %90 = vector.broadcast %cst_60 : f32 to vector<1x32xf32>
      %91 = arith.divf %89, %90 : vector<1x32xf32>
      %c0_61 = arith.constant 0 : index
      %c0_62 = arith.constant 0 : index
      %92 = vector.load %arg9[%c0_61, %c0_62] : memref<1x32xf32, #tpu.memory_space<vmem>>, vector<1x32xf32>
      tpu.vector_store %arg9[%c0_61, %c0_62], %91 {strides = array<i32>} : memref<1x32xf32, #tpu.memory_space<vmem>>, vector<1x32xf32>,
    } else {
    }
    return
  }
  func.func @transform_0(%arg0: i32) -> (i32, i32) {
    %c0_i32 = arith.constant 0 : i32
    %c0_i32_0 = arith.constant 0 : i32
    return %arg0, %c0_i32 : i32, i32
  }
  func.func @transform_1(%arg0: i32) -> (i32, i32) {
    %c0_i32 = arith.constant 0 : i32
    %c0_i32_0 = arith.constant 0 : i32
    return %arg0, %c0_i32 : i32, i32
  }
  func.func @transform_2(%arg0: i32) -> (i32, i32) {
    %c0_i32 = arith.constant 0 : i32
    %c0_i32_0 = arith.constant 0 : i32
    %c0_i32_1 = arith.constant 0 : i32
    return %c0_i32, %c0_i32_0 : i32, i32
  }
  func.func @transform_3(%arg0: i32) -> (i32, i32) {
    %c0_i32 = arith.constant 0 : i32
    %c0_i32_0 = arith.constant 0 : i32
    %c0_i32_1 = arith.constant 0 : i32
    return %c0_i32, %c0_i32_0 : i32, i32
  }
  func.func @transform_4(%arg0: i32) -> (i32, i32) {
    %c0_i32 = arith.constant 0 : i32
    %c0_i32_0 = arith.constant 0 : i32
    %c0_i32_1 = arith.constant 0 : i32
    return %c0_i32, %c0_i32_0 : i32, i32
  }
  func.func @transform_5(%arg0: i32) -> (i32, i32) {
    %c0_i32 = arith.constant 0 : i32
    %c0_i32_0 = arith.constant 0 : i32
    %c0_i32_1 = arith.constant 0 : i32
    return %c0_i32, %c0_i32_0 : i32, i32
  }
  func.func @transform_6(%arg0: i32) -> (i32, i32) {
    %c0_i32 = arith.constant 0 : i32
    %c0_i32_0 = arith.constant 0 : i32
    %c0_i32_1 = arith.constant 0 : i32
    return %c0_i32, %c0_i32_0 : i32, i32
  }
  func.func @transform_7(%arg0: i32) -> (i32, i32) {
    %c0_i32 = arith.constant 0 : i32
    %c0_i32_0 = arith.constant 0 : i32
    %c0_i32_1 = arith.constant 0 : i32
    return %c0_i32, %c0_i32_0 : i32, i32
  }
  func.func @transform_8(%arg0: i32) -> (i32, i32) {
    %c0_i32 = arith.constant 0 : i32
    %c0_i32_0 = arith.constant 0 : i32
    %c0_i32_1 = arith.constant 0 : i32
    return %c0_i32, %c0_i32_0 : i32, i32
  }
  func.func @transform_9(%arg0: i32) -> (i32, i32) {
    %c0_i32 = arith.constant 0 : i32
    %c0_i32_0 = arith.constant 0 : i32
    %c0_i32_1 = arith.constant 0 : i32
    return %c0_i32, %c0_i32_0 : i32, i32
  }
}

</mosaic_0001>

<llo_original>
// kernel: tpu_custom_call.1
$region0: #{tpu_custom_call.1}
  #allocation0 [shape = 'u32[]', space=smem, size = 0x4, offset = 0x4, fixed_abs, tag = 'smem constant byte address 0x4 - core index']
  #allocation1 [shape = 'u32[72,128]{1,0:T(1,128)}', space=vmem, size = 0x9000, scoped, tag = 'internal scratch']
  #allocation2 [shape = 'f32[2,512]{1,0:T(2,128)}', space=vmem, size = 0x1000, scoped, tag = 'scratch operand']
  #allocation3 [shape = 'f32[2,32]{1,0:T(2,128)}', space=vmem, size = 0x400, scoped, tag = 'scratch operand']
  #allocation4 [shape = 'f32[2,2]{1,0:T(2,128)}', space=vmem, size = 0x400, scoped, tag = 'scratch operand']
  #allocation5 [shape = 'f32[2,512]{1,0:T(2,128)}', space=vmem, size = 0x1000, scoped, tag = 'scratch operand']
  %s0 = inlined_call_operand.hbm [shape: bf16[512,512], index: 0, kind: input, shape index: {}]
  %s1 = inlined_call_operand.vmem [shape: f32[512,2], index: 1, kind: input, shape index: {}]
  %s2 = inlined_call_operand.vmem [shape: bf16[512,32], index: 2, kind: input, shape index: {}]
  %s3 = inlined_call_operand.vmem [shape: f32[1,32], index: 3, kind: input, shape index: {}]
  %s4 = inlined_call_operand.vmem [shape: f32[32,16], index: 4, kind: input, shape index: {}]
  %s5 = inlined_call_operand.vmem [shape: f32[1,16], index: 5, kind: input, shape index: {}]
  %s6 = inlined_call_operand.vmem [shape: f32[16,2], index: 6, kind: input, shape index: {}]
  %s7 = inlined_call_operand.vmem [shape: f32[1,2], index: 7, kind: input, shape index: {}]
  %s8 = inlined_call_operand.hbm [shape: f32[1,32], index: 8, kind: output, shape index: {0}]
  %s9 = inlined_call_operand.hbm [shape: f32[1,1], index: 9, kind: output, shape index: {1}]
  %10 = xla_tuple %s8, %s9
  %s11 = sld [smem:[#allocation0]]
  $region62: #{tpu_custom_call.1} parent=0
    _
  %s13 = ssub.s32 1, %s11
  %s14 = scalar_select 0, %s13, %s11
  $region1: #{tpu_custom_call.1} parent=0
    #allocation6 [shape = 'u8[524288]{0}', space=vmem, size = 0x80000, scoped, tag = 'input window, operand 0, single buffered']
    #allocation7 [shape = 's32[1]{0}', space=sflag, size = 0x4, scoped, tag = 'scoped memory for tpu_custom_call.1']
    #allocation8 [shape = 's32[1]{0}', space=sflag, size = 0x4, scoped, tag = 'scoped memory for tpu_custom_call.1']
    #allocation9 [shape = 'u8[512]{0}', space=vmem, size = 0x400, scoped, tag = 'output window, operand 0, single buffered']
    #allocation10 [shape = 'u8[512]{0}', space=vmem, size = 0x400, scoped, tag = 'output window, operand 1, single buffered']
    #allocation11 [shape = 's32[1]{0}', space=sflag, size = 0x4, scoped, tag = 'scoped memory for tpu_custom_call.1']
    %15 = vsyncpa [#allocation7], 0
    %16 = vsyncpa [#allocation8], 0
    %17 = vsyncpa [#allocation11], 0
    // Predicated region
    $region2: #{tpu_custom_call.1} parent=1 // pred_check
      _
    $region3: #{tpu_custom_call.1} parent=1 // pred_check_branch
      %19 = sbr.rel (0) target = $region5
    $region4: #{tpu_custom_call.1} parent=1 // pred_region
      %21 = vsyncadd [#allocation7], 0
      %s22 = sshll.u32 %s0, 4
      %s23 = int_to_ptr.hbm [resolvable:$true] %s22
      %s24 = sshll.u32 [#allocation6], 4
      %s25 = int_to_ptr.vmem [resolvable:$true] %s24
      %30 = dma.hbm_to_vmem [thread:$0]  %s23, 16384, %s25, [#allocation7], 256, 256, 16
    $region5: #{tpu_custom_call.1} parent=1 // pred_fallthru
      _
    // Predicated region
    $region6: #{tpu_custom_call.1} parent=1 // pred_check
      _
    $region7: #{tpu_custom_call.1} parent=1 // pred_check_branch
      %32 = sbr.rel (0) target = $region9
    $region8: #{tpu_custom_call.1} parent=1 // pred_region
      _
    $region9: #{tpu_custom_call.1} parent=1 // pred_fallthru
      _
    // Predicated region
    $region10: #{tpu_custom_call.1} parent=1 // pred_check
      _
    $region11: #{tpu_custom_call.1} parent=1 // pred_check_branch
      %34 = sbr.rel (0) target = $region13
    $region12: #{tpu_custom_call.1} parent=1 // pred_region
      _
    $region13: #{tpu_custom_call.1} parent=1 // pred_fallthru
      _
    // Predicated region
    $region14: #{tpu_custom_call.1} parent=1 // pred_check
      _
    $region15: #{tpu_custom_call.1} parent=1 // pred_check_branch
      %36 = sbr.rel (0) target = $region17
    $region16: #{tpu_custom_call.1} parent=1 // pred_region
      _
    $region17: #{tpu_custom_call.1} parent=1 // pred_fallthru
      _
    // Predicated region
    $region18: #{tpu_custom_call.1} parent=1 // pred_check
      _
    $region19: #{tpu_custom_call.1} parent=1 // pred_check_branch
      %38 = sbr.rel (0) target = $region21
    $region20: #{tpu_custom_call.1} parent=1 // pred_region
      _
    $region21: #{tpu_custom_call.1} parent=1 // pred_fallthru
      _
    // Predicated region
    $region22: #{tpu_custom_call.1} parent=1 // pred_check
      _
    $region23: #{tpu_custom_call.1} parent=1 // pred_check_branch
      %40 = sbr.rel (0) target = $region25
    $region24: #{tpu_custom_call.1} parent=1 // pred_region
      _
    $region25: #{tpu_custom_call.1} parent=1 // pred_fallthru
      _
    // Predicated region
    $region26: #{tpu_custom_call.1} parent=1 // pred_check
      _
    $region27: #{tpu_custom_call.1} parent=1 // pred_check_branch
      %42 = sbr.rel (0) target = $region29
    $region28: #{tpu_custom_call.1} parent=1 // pred_region
      _
    $region29: #{tpu_custom_call.1} parent=1 // pred_fallthru
      _
    // Predicated region
    $region30: #{tpu_custom_call.1} parent=1 // pred_check
      _
    $region31: #{tpu_custom_call.1} parent=1 // pred_check_branch
      %44 = sbr.rel (0) target = $region33
    $region32: #{tpu_custom_call.1} parent=1 // pred_region
      _
    $region33: #{tpu_custom_call.1} parent=1 // pred_fallthru
      _
    // Predicated region
    $region34: #{tpu_custom_call.1} parent=1 // pred_check
      _
    $region35: #{tpu_custom_call.1} parent=1 // pred_check_branch
      %46 = sbr.rel (0) target = $region37
    $region36: #{tpu_custom_call.1} parent=1 // pred_region
      %48 = dma.done [#allocation7], 16384
    $region37: #{tpu_custom_call.1} parent=1 // pred_fallthru
      _
    %p49 = scmp.eq.s32.totalorder 0, 0
    // Predicated region
    $region38: #{tpu_custom_call.1} parent=1 // pred_check
      %p50 = pneg %p49
    $region39: #{tpu_custom_call.1} parent=1 // pred_check_branch
      %52 = sbr.rel (%p50) target = $region41
    $region40: #{tpu_custom_call.1} parent=1 // pred_region
      %vm53 = vcmask 254976
      %54 = vst.msk [vmem:[#allocation3] sm:$0x3] %vm53, 0.0
      %vm55 = vcmask 9216
      %56 = vst.msk [vmem:[#allocation4] sm:$0x3] %vm55, 0.0
      %57 = vst [vmem:[#allocation5] sm:$0xff] 0.0
    $region41: #{tpu_custom_call.1} parent=1 // pred_fallthru
      _
    %v58 = vld [vmem:[#allocation6] sm:$0xff]
    %v59 = vld [vmem:[#allocation6 + $0x8] sm:$0xff]
    %v60 = vld [vmem:[#allocation6 + $0x10] sm:$0xff]
    %v61 = vld [vmem:[#allocation6 + $0x18] sm:$0xff]
    %v62 = vld [vmem:[#allocation6 + $0x20] sm:$0xff]
    %v63 = vld [vmem:[#allocation6 + $0x28] sm:$0xff]
    %v64 = vld [vmem:[#allocation6 + $0x30] sm:$0xff]
    %v65 = vld [vmem:[#allocation6 + $0x38] sm:$0xff]
    %v66 = vld [vmem:[#allocation6 + $0x40] sm:$0xff]
    %v67 = vld [vmem:[#allocation6 + $0x48] sm:$0xff]
    %v68 = vld [vmem:[#allocation6 + $0x50] sm:$0xff]
    %v69 = vld [vmem:[#allocation6 + $0x58] sm:$0xff]
    %v70 = vld [vmem:[#allocation6 + $0x60] sm:$0xff]
    %v71 = vld [vmem:[#allocation6 + $0x68] sm:$0xff]
    %v72 = vld [vmem:[#allocation6 + $0x70] sm:$0xff]
    %v73 = vld [vmem:[#allocation6 + $0x78] sm:$0xff]
    %v74 = vld [vmem:[#allocation6 + $0x80] sm:$0xff]
    %v75 = vld [vmem:[#allocation6 + $0x88] sm:$0xff]
    %v76 = vld [vmem:[#allocation6 + $0x90] sm:$0xff]
    %v77 = vld [vmem:[#allocation6 + $0x98] sm:$0xff]
    %v78 = vld [vmem:[#allocation6 + $0xa0] sm:$0xff]
    %v79 = vld [vmem:[#allocation6 + $0xa8] sm:$0xff]
    %v80 = vld [vmem:[#allocation6 + $0xb0] sm:$0xff]
    %v81 = vld [vmem:[#allocation6 + $0xb8] sm:$0xff]
    %v82 = vld [vmem:[#allocation6 + $0xc0] sm:$0xff]
    %v83 = vld [vmem:[#allocation6 + $0xc8] sm:$0xff]
    %v84 = vld [vmem:[#allocation6 + $0xd0] sm:$0xff]
    %v85 = vld [vmem:[#allocation6 + $0xd8] sm:$0xff]
    %v86 = vld [vmem:[#allocation6 + $0xe0] sm:$0xff]
    %v87 = vld [vmem:[#allocation6 + $0xe8] sm:$0xff]
    %v88 = vld [vmem:[#allocation6 + $0xf0] sm:$0xff]
    %v89 = vld [vmem:[#allocation6 + $0xf8] sm:$0xff]
    %v90 = vld [vmem:[#allocation6 + $0x100] sm:$0xff]
    %v91 = vld [vmem:[#allocation6 + $0x108] sm:$0xff]
    %v92 = vld [vmem:[#allocation6 + $0x110] sm:$0xff]
    %v93 = vld [vmem:[#allocation6 + $0x118] sm:$0xff]
    %v94 = vld [vmem:[#allocation6 + $0x120] sm:$0xff]
    %v95 = vld [vmem:[#allocation6 + $0x128] sm:$0xff]
    %v96 = vld [vmem:[#allocation6 + $0x130] sm:$0xff]
    %v97 = vld [vmem:[#allocation6 + $0x138] sm:$0xff]
    %v98 = vld [vmem:[#allocation6 + $0x140] sm:$0xff]
    %v99 = vld [vmem:[#allocation6 + $0x148] sm:$0xff]
    %v100 = vld [vmem:[#allocation6 + $0x150] sm:$0xff]
    %v101 = vld [vmem:[#allocation6 + $0x158] sm:$0xff]
    %v102 = vld [vmem:[#allocation6 + $0x160] sm:$0xff]
    %v103 = vld [vmem:[#allocation6 + $0x168] sm:$0xff]
    %v104 = vld [vmem:[#allocation6 + $0x170] sm:$0xff]
    %v105 = vld [vmem:[#allocation6 + $0x178] sm:$0xff]
    %v106 = vld [vmem:[#allocation6 + $0x180] sm:$0xff]
    %v107 = vld [vmem:[#allocation6 + $0x188] sm:$0xff]
    %v108 = vld [vmem:[#allocation6 + $0x190] sm:$0xff]
    %v109 = vld [vmem:[#allocation6 + $0x198] sm:$0xff]
    %v110 = vld [vmem:[#allocation6 + $0x1a0] sm:$0xff]
    %v111 = vld [vmem:[#allocation6 + $0x1a8] sm:$0xff]
    %v112 = vld [vmem:[#allocation6 + $0x1b0] sm:$0xff]
    %v113 = vld [vmem:[#allocation6 + $0x1b8] sm:$0xff]
    %v114 = vld [vmem:[#allocation6 + $0x1c0] sm:$0xff]
    %v115 = vld [vmem:[#allocation6 + $0x1c8] sm:$0xff]
    %v116 = vld [vmem:[#allocation6 + $0x1d0] sm:$0xff]
    %v117 = vld [vmem:[#allocation6 + $0x1d8] sm:$0xff]
    %v118 = vld [vmem:[#allocation6 + $0x1e0] sm:$0xff]
    %v119 = vld [vmem:[#allocation6 + $0x1e8] sm:$0xff]
    %v120 = vld [vmem:[#allocation6 + $0x1f0] sm:$0xff]
    %v121 = vld [vmem:[#allocation6 + $0x1f8] sm:$0xff]
    %v122 = vld [vmem:[#allocation6 + $0x200] sm:$0xff]
    %v123 = vld [vmem:[#allocation6 + $0x208] sm:$0xff]
    %v124 = vld [vmem:[#allocation6 + $0x210] sm:$0xff]
    %v125 = vld [vmem:[#allocation6 + $0x218] sm:$0xff]
    %v126 = vld [vmem:[#allocation6 + $0x220] sm:$0xff]
    %v127 = vld [vmem:[#allocation6 + $0x228] sm:$0xff]
    %v128 = vld [vmem:[#allocation6 + $0x230] sm:$0xff]
    %v129 = vld [vmem:[#allocation6 + $0x238] sm:$0xff]
    %v130 = vld [vmem:[#allocation6 + $0x240] sm:$0xff]
    %v131 = vld [vmem:[#allocation6 + $0x248] sm:$0xff]
    %v132 = vld [vmem:[#allocation6 + $0x250] sm:$0xff]
    %v133 = vld [vmem:[#allocation6 + $0x258] sm:$0xff]
    %v134 = vld [vmem:[#allocation6 + $0x260] sm:$0xff]
    %v135 = vld [vmem:[#allocation6 + $0x268] sm:$0xff]
    %v136 = vld [vmem:[#allocation6 + $0x270] sm:$0xff]
    %v137 = vld [vmem:[#allocation6 + $0x278] sm:$0xff]
    %v138 = vld [vmem:[#allocation6 + $0x280] sm:$0xff]
    %v139 = vld [vmem:[#allocation6 + $0x288] sm:$0xff]
    %v140 = vld [vmem:[#allocation6 + $0x290] sm:$0xff]
    %v141 = vld [vmem:[#allocation6 + $0x298] sm:$0xff]
    %v142 = vld [vmem:[#allocation6 + $0x2a0] sm:$0xff]
    %v143 = vld [vmem:[#allocation6 + $0x2a8] sm:$0xff]
    %v144 = vld [vmem:[#allocation6 + $0x2b0] sm:$0xff]
    %v145 = vld [vmem:[#allocation6 + $0x2b8] sm:$0xff]
    %v146 = vld [vmem:[#allocation6 + $0x2c0] sm:$0xff]
    %v147 = vld [vmem:[#allocation6 + $0x2c8] sm:$0xff]
    %v148 = vld [vmem:[#allocation6 + $0x2d0] sm:$0xff]
    %v149 = vld [vmem:[#allocation6 + $0x2d8] sm:$0xff]
    %v150 = vld [vmem:[#allocation6 + $0x2e0] sm:$0xff]
    %v151 = vld [vmem:[#allocation6 + $0x2e8] sm:$0xff]
    %v152 = vld [vmem:[#allocation6 + $0x2f0] sm:$0xff]
    %v153 = vld [vmem:[#allocation6 + $0x2f8] sm:$0xff]
    %v154 = vld [vmem:[#allocation6 + $0x300] sm:$0xff]
    %v155 = vld [vmem:[#allocation6 + $0x308] sm:$0xff]
    %v156 = vld [vmem:[#allocation6 + $0x310] sm:$0xff]
    %v157 = vld [vmem:[#allocation6 + $0x318] sm:$0xff]
    %v158 = vld [vmem:[#allocation6 + $0x320] sm:$0xff]
    %v159 = vld [vmem:[#allocation6 + $0x328] sm:$0xff]
    %v160 = vld [vmem:[#allocation6 + $0x330] sm:$0xff]
    %v161 = vld [vmem:[#allocation6 + $0x338] sm:$0xff]
    %v162 = vld [vmem:[#allocation6 + $0x340] sm:$0xff]
    %v163 = vld [vmem:[#allocation6 + $0x348] sm:$0xff]
    %v164 = vld [vmem:[#allocation6 + $0x350] sm:$0xff]
    %v165 = vld [vmem:[#allocation6 + $0x358] sm:$0xff]
    %v166 = vld [vmem:[#allocation6 + $0x360] sm:$0xff]
    %v167 = vld [vmem:[#allocation6 + $0x368] sm:$0xff]
    %v168 = vld [vmem:[#allocation6 + $0x370] sm:$0xff]
    %v169 = vld [vmem:[#allocation6 + $0x378] sm:$0xff]
    %v170 = vld [vmem:[#allocation6 + $0x380] sm:$0xff]
    %v171 = vld [vmem:[#allocation6 + $0x388] sm:$0xff]
    %v172 = vld [vmem:[#allocation6 + $0x390] sm:$0xff]
    %v173 = vld [vmem:[#allocation6 + $0x398] sm:$0xff]
    %v174 = vld [vmem:[#allocation6 + $0x3a0] sm:$0xff]
    %v175 = vld [vmem:[#allocation6 + $0x3a8] sm:$0xff]
    %v176 = vld [vmem:[#allocation6 + $0x3b0] sm:$0xff]
    %v177 = vld [vmem:[#allocation6 + $0x3b8] sm:$0xff]
    %v178 = vld [vmem:[#allocation6 + $0x3c0] sm:$0xff]
    %v179 = vld [vmem:[#allocation6 + $0x3c8] sm:$0xff]
    %v180 = vld [vmem:[#allocation6 + $0x3d0] sm:$0xff]
    %v181 = vld [vmem:[#allocation6 + $0x3d8] sm:$0xff]
    %v182 = vld [vmem:[#allocation6 + $0x3e0] sm:$0xff]
    %v183 = vld [vmem:[#allocation6 + $0x3e8] sm:$0xff]
    %v184 = vld [vmem:[#allocation6 + $0x3f0] sm:$0xff]
    %v185 = vld [vmem:[#allocation6 + $0x3f8] sm:$0xff]
    %v186 = vld [vmem:[%s1] sm:$0xff]
    %v187 = vld [vmem:[%s1 + $0x8] sm:$0xff]
    %v188 = vld [vmem:[%s1 + $0x10] sm:$0xff]
    %v189 = vld [vmem:[%s1 + $0x18] sm:$0xff]
    %v190 = vld [vmem:[%s1 + $0x20] sm:$0xff]
    %v191 = vld [vmem:[%s1 + $0x28] sm:$0xff]
    %v192 = vld [vmem:[%s1 + $0x30] sm:$0xff]
    %v193 = vld [vmem:[%s1 + $0x38] sm:$0xff]
    %v194 = vld [vmem:[%s1 + $0x40] sm:$0xff]
    %v195 = vld [vmem:[%s1 + $0x48] sm:$0xff]
    %v196 = vld [vmem:[%s1 + $0x50] sm:$0xff]
    %v197 = vld [vmem:[%s1 + $0x58] sm:$0xff]
    %v198 = vld [vmem:[%s1 + $0x60] sm:$0xff]
    %v199 = vld [vmem:[%s1 + $0x68] sm:$0xff]
    %v200 = vld [vmem:[%s1 + $0x70] sm:$0xff]
    %v201 = vld [vmem:[%s1 + $0x78] sm:$0xff]
    %v202 = vld [vmem:[%s1 + $0x80] sm:$0xff]
    %v203 = vld [vmem:[%s1 + $0x88] sm:$0xff]
    %v204 = vld [vmem:[%s1 + $0x90] sm:$0xff]
    %v205 = vld [vmem:[%s1 + $0x98] sm:$0xff]
    %v206 = vld [vmem:[%s1 + $0xa0] sm:$0xff]
    %v207 = vld [vmem:[%s1 + $0xa8] sm:$0xff]
    %v208 = vld [vmem:[%s1 + $0xb0] sm:$0xff]
    %v209 = vld [vmem:[%s1 + $0xb8] sm:$0xff]
    %v210 = vld [vmem:[%s1 + $0xc0] sm:$0xff]
    %v211 = vld [vmem:[%s1 + $0xc8] sm:$0xff]
    %v212 = vld [vmem:[%s1 + $0xd0] sm:$0xff]
    %v213 = vld [vmem:[%s1 + $0xd8] sm:$0xff]
    %v214 = vld [vmem:[%s1 + $0xe0] sm:$0xff]
    %v215 = vld [vmem:[%s1 + $0xe8] sm:$0xff]
    %v216 = vld [vmem:[%s1 + $0xf0] sm:$0xff]
    %v217 = vld [vmem:[%s1 + $0xf8] sm:$0xff]
    %v218 = vld [vmem:[%s1 + $0x100] sm:$0xff]
    %v219 = vld [vmem:[%s1 + $0x108] sm:$0xff]
    %v220 = vld [vmem:[%s1 + $0x110] sm:$0xff]
    %v221 = vld [vmem:[%s1 + $0x118] sm:$0xff]
    %v222 = vld [vmem:[%s1 + $0x120] sm:$0xff]
    %v223 = vld [vmem:[%s1 + $0x128] sm:$0xff]
    %v224 = vld [vmem:[%s1 + $0x130] sm:$0xff]
    %v225 = vld [vmem:[%s1 + $0x138] sm:$0xff]
    %v226 = vld [vmem:[%s1 + $0x140] sm:$0xff]
    %v227 = vld [vmem:[%s1 + $0x148] sm:$0xff]
    %v228 = vld [vmem:[%s1 + $0x150] sm:$0xff]
    %v229 = vld [vmem:[%s1 + $0x158] sm:$0xff]
    %v230 = vld [vmem:[%s1 + $0x160] sm:$0xff]
    %v231 = vld [vmem:[%s1 + $0x168] sm:$0xff]
    %v232 = vld [vmem:[%s1 + $0x170] sm:$0xff]
    %v233 = vld [vmem:[%s1 + $0x178] sm:$0xff]
    %v234 = vld [vmem:[%s1 + $0x180] sm:$0xff]
    %v235 = vld [vmem:[%s1 + $0x188] sm:$0xff]
    %v236 = vld [vmem:[%s1 + $0x190] sm:$0xff]
    %v237 = vld [vmem:[%s1 + $0x198] sm:$0xff]
    %v238 = vld [vmem:[%s1 + $0x1a0] sm:$0xff]
    %v239 = vld [vmem:[%s1 + $0x1a8] sm:$0xff]
    %v240 = vld [vmem:[%s1 + $0x1b0] sm:$0xff]
    %v241 = vld [vmem:[%s1 + $0x1b8] sm:$0xff]
    %v242 = vld [vmem:[%s1 + $0x1c0] sm:$0xff]
    %v243 = vld [vmem:[%s1 + $0x1c8] sm:$0xff]
    %v244 = vld [vmem:[%s1 + $0x1d0] sm:$0xff]
    %v245 = vld [vmem:[%s1 + $0x1d8] sm:$0xff]
    %v246 = vld [vmem:[%s1 + $0x1e0] sm:$0xff]
    %v247 = vld [vmem:[%s1 + $0x1e8] sm:$0xff]
    %v248 = vld [vmem:[%s1 + $0x1f0] sm:$0xff]
    %v249 = vld [vmem:[%s1 + $0x1f8] sm:$0xff]
    %v250 = vld [vmem:[%s2] sm:$0xf]
    %v251 = vld [vmem:[%s2 + $0x4] sm:$0xf]
    %v252 = vld [vmem:[%s2 + $0x8] sm:$0xf]
    %v253 = vld [vmem:[%s2 + $0xc] sm:$0xf]
    %v254 = vld [vmem:[%s2 + $0x10] sm:$0xf]
    %v255 = vld [vmem:[%s2 + $0x14] sm:$0xf]
    %v256 = vld [vmem:[%s2 + $0x18] sm:$0xf]
    %v257 = vld [vmem:[%s2 + $0x1c] sm:$0xf]
    %v258 = vld [vmem:[%s2 + $0x20] sm:$0xf]
    %v259 = vld [vmem:[%s2 + $0x24] sm:$0xf]
    %v260 = vld [vmem:[%s2 + $0x28] sm:$0xf]
    %v261 = vld [vmem:[%s2 + $0x2c] sm:$0xf]
    %v262 = vld [vmem:[%s2 + $0x30] sm:$0xf]
    %v263 = vld [vmem:[%s2 + $0x34] sm:$0xf]
    %v264 = vld [vmem:[%s2 + $0x38] sm:$0xf]
    %v265 = vld [vmem:[%s2 + $0x3c] sm:$0xf]
    %v266 = vld [vmem:[%s2 + $0x40] sm:$0xf]
    %v267 = vld [vmem:[%s2 + $0x44] sm:$0xf]
    %v268 = vld [vmem:[%s2 + $0x48] sm:$0xf]
    %v269 = vld [vmem:[%s2 + $0x4c] sm:$0xf]
    %v270 = vld [vmem:[%s2 + $0x50] sm:$0xf]
    %v271 = vld [vmem:[%s2 + $0x54] sm:$0xf]
    %v272 = vld [vmem:[%s2 + $0x58] sm:$0xf]
    %v273 = vld [vmem:[%s2 + $0x5c] sm:$0xf]
    %v274 = vld [vmem:[%s2 + $0x60] sm:$0xf]
    %v275 = vld [vmem:[%s2 + $0x64] sm:$0xf]
    %v276 = vld [vmem:[%s2 + $0x68] sm:$0xf]
    %v277 = vld [vmem:[%s2 + $0x6c] sm:$0xf]
    %v278 = vld [vmem:[%s2 + $0x70] sm:$0xf]
    %v279 = vld [vmem:[%s2 + $0x74] sm:$0xf]
    %v280 = vld [vmem:[%s2 + $0x78] sm:$0xf]
    %v281 = vld [vmem:[%s2 + $0x7c] sm:$0xf]
    %v282 = vld [vmem:[%s2 + $0x80] sm:$0xf]
    %v283 = vld [vmem:[%s2 + $0x84] sm:$0xf]
    %v284 = vld [vmem:[%s2 + $0x88] sm:$0xf]
    %v285 = vld [vmem:[%s2 + $0x8c] sm:$0xf]
    %v286 = vld [vmem:[%s2 + $0x90] sm:$0xf]
    %v287 = vld [vmem:[%s2 + $0x94] sm:$0xf]
    %v288 = vld [vmem:[%s2 + $0x98] sm:$0xf]
    %v289 = vld [vmem:[%s2 + $0x9c] sm:$0xf]
    %v290 = vld [vmem:[%s2 + $0xa0] sm:$0xf]
    %v291 = vld [vmem:[%s2 + $0xa4] sm:$0xf]
    %v292 = vld [vmem:[%s2 + $0xa8] sm:$0xf]
    %v293 = vld [vmem:[%s2 + $0xac] sm:$0xf]
    %v294 = vld [vmem:[%s2 + $0xb0] sm:$0xf]
    %v295 = vld [vmem:[%s2 + $0xb4] sm:$0xf]
    %v296 = vld [vmem:[%s2 + $0xb8] sm:$0xf]
    %v297 = vld [vmem:[%s2 + $0xbc] sm:$0xf]
    %v298 = vld [vmem:[%s2 + $0xc0] sm:$0xf]
    %v299 = vld [vmem:[%s2 + $0xc4] sm:$0xf]
    %v300 = vld [vmem:[%s2 + $0xc8] sm:$0xf]
    %v301 = vld [vmem:[%s2 + $0xcc] sm:$0xf]
    %v302 = vld [vmem:[%s2 + $0xd0] sm:$0xf]
    %v303 = vld [vmem:[%s2 + $0xd4] sm:$0xf]
    %v304 = vld [vmem:[%s2 + $0xd8] sm:$0xf]
    %v305 = vld [vmem:[%s2 + $0xdc] sm:$0xf]
    %v306 = vld [vmem:[%s2 + $0xe0] sm:$0xf]
    %v307 = vld [vmem:[%s2 + $0xe4] sm:$0xf]
    %v308 = vld [vmem:[%s2 + $0xe8] sm:$0xf]
    %v309 = vld [vmem:[%s2 + $0xec] sm:$0xf]
    %v310 = vld [vmem:[%s2 + $0xf0] sm:$0xf]
    %v311 = vld [vmem:[%s2 + $0xf4] sm:$0xf]
    %v312 = vld [vmem:[%s2 + $0xf8] sm:$0xf]
    %v313 = vld [vmem:[%s2 + $0xfc] sm:$0xf]
    %v314 = vunpack.c.l.bf16 %v250
    %v315 = vunpack.c.l.bf16 %v251
    %v316 = vunpack.c.l.bf16 %v252
    %v317 = vunpack.c.l.bf16 %v253
    %v318 = vunpack.c.l.bf16 %v254
    %v319 = vunpack.c.l.bf16 %v255
    %v320 = vunpack.c.l.bf16 %v256
    %v321 = vunpack.c.l.bf16 %v257
    %v322 = vunpack.c.l.bf16 %v258
    %v323 = vunpack.c.l.bf16 %v259
    %v324 = vunpack.c.l.bf16 %v260
    %v325 = vunpack.c.l.bf16 %v261
    %v326 = vunpack.c.l.bf16 %v262
    %v327 = vunpack.c.l.bf16 %v263
    %v328 = vunpack.c.l.bf16 %v264
    %v329 = vunpack.c.l.bf16 %v265
    %v330 = vunpack.c.l.bf16 %v266
    %v331 = vunpack.c.l.bf16 %v267
    %v332 = vunpack.c.l.bf16 %v268
    %v333 = vunpack.c.l.bf16 %v269
    %v334 = vunpack.c.l.bf16 %v270
    %v335 = vunpack.c.l.bf16 %v271
    %v336 = vunpack.c.l.bf16 %v272
    %v337 = vunpack.c.l.bf16 %v273
    %v338 = vunpack.c.l.bf16 %v274
    %v339 = vunpack.c.l.bf16 %v275
    %v340 = vunpack.c.l.bf16 %v276
    %v341 = vunpack.c.l.bf16 %v277
    %v342 = vunpack.c.l.bf16 %v278
    %v343 = vunpack.c.l.bf16 %v279
    %v344 = vunpack.c.l.bf16 %v280
    %v345 = vunpack.c.l.bf16 %v281
    %v346 = vunpack.c.l.bf16 %v282
    %v347 = vunpack.c.l.bf16 %v283
    %v348 = vunpack.c.l.bf16 %v284
    %v349 = vunpack.c.l.bf16 %v285
    %v350 = vunpack.c.l.bf16 %v286
    %v351 = vunpack.c.l.bf16 %v287
    %v352 = vunpack.c.l.bf16 %v288
    %v353 = vunpack.c.l.bf16 %v289
    %v354 = vunpack.c.l.bf16 %v290
    %v355 = vunpack.c.l.bf16 %v291
    %v356 = vunpack.c.l.bf16 %v292
    %v357 = vunpack.c.l.bf16 %v293
    %v358 = vunpack.c.l.bf16 %v294
    %v359 = vunpack.c.l.bf16 %v295
    %v360 = vunpack.c.l.bf16 %v296
    %v361 = vunpack.c.l.bf16 %v297
    %v362 = vunpack.c.l.bf16 %v298
    %v363 = vunpack.c.l.bf16 %v299
    %v364 = vunpack.c.l.bf16 %v300
    %v365 = vunpack.c.l.bf16 %v301
    %v366 = vunpack.c.l.bf16 %v302
    %v367 = vunpack.c.l.bf16 %v303
    %v368 = vunpack.c.l.bf16 %v304
    %v369 = vunpack.c.l.bf16 %v305
    %v370 = vunpack.c.l.bf16 %v306
    %v371 = vunpack.c.l.bf16 %v307
    %v372 = vunpack.c.l.bf16 %v308
    %v373 = vunpack.c.l.bf16 %v309
    %v374 = vunpack.c.l.bf16 %v310
    %v375 = vunpack.c.l.bf16 %v311
    %v376 = vunpack.c.l.bf16 %v312
    %v377 = vunpack.c.l.bf16 %v313
    %v506 = vunpack.c.l.b16 %v58
    %v507 = vunpack.c.h.b16 %v58
    %v508 = vunpack.c.l.b16 %v59
    %v509 = vunpack.c.h.b16 %v59
    %v510 = vunpack.c.l.b16 %v60
    %v511 = vunpack.c.h.b16 %v60
    %v512 = vunpack.c.l.b16 %v61
    %v513 = vunpack.c.h.b16 %v61
    %v514 = vunpack.c.l.b16 %v62
    %v515 = vunpack.c.h.b16 %v62
    %v516 = vunpack.c.l.b16 %v63
    %v517 = vunpack.c.h.b16 %v63
    %v518 = vunpack.c.l.b16 %v64
    %v519 = vunpack.c.h.b16 %v64
    %v520 = vunpack.c.l.b16 %v65
    %v521 = vunpack.c.h.b16 %v65
    %v522 = vunpack.c.l.b16 %v66
    %v523 = vunpack.c.h.b16 %v66
    %v524 = vunpack.c.l.b16 %v67
    %v525 = vunpack.c.h.b16 %v67
    %v526 = vunpack.c.l.b16 %v68
    %v527 = vunpack.c.h.b16 %v68
    %v528 = vunpack.c.l.b16 %v69
    %v529 = vunpack.c.h.b16 %v69
    %v530 = vunpack.c.l.b16 %v70
    %v531 = vunpack.c.h.b16 %v70
    %v532 = vunpack.c.l.b16 %v71
    %v533 = vunpack.c.h.b16 %v71
    %v534 = vunpack.c.l.b16 %v72
    %v535 = vunpack.c.h.b16 %v72
    %v536 = vunpack.c.l.b16 %v73
    %v537 = vunpack.c.h.b16 %v73
    %v538 = vunpack.c.l.b16 %v74
    %v539 = vunpack.c.h.b16 %v74
    %v540 = vunpack.c.l.b16 %v75
    %v541 = vunpack.c.h.b16 %v75
    %v542 = vunpack.c.l.b16 %v76
    %v543 = vunpack.c.h.b16 %v76
    %v544 = vunpack.c.l.b16 %v77
    %v545 = vunpack.c.h.b16 %v77
    %v546 = vunpack.c.l.b16 %v78
    %v547 = vunpack.c.h.b16 %v78
    %v548 = vunpack.c.l.b16 %v79
    %v549 = vunpack.c.h.b16 %v79
    %v550 = vunpack.c.l.b16 %v80
    %v551 = vunpack.c.h.b16 %v80
    %v552 = vunpack.c.l.b16 %v81
    %v553 = vunpack.c.h.b16 %v81
    %v554 = vunpack.c.l.b16 %v82
    %v555 = vunpack.c.h.b16 %v82
    %v556 = vunpack.c.l.b16 %v83
    %v557 = vunpack.c.h.b16 %v83
    %v558 = vunpack.c.l.b16 %v84
    %v559 = vunpack.c.h.b16 %v84
    %v560 = vunpack.c.l.b16 %v85
    %v561 = vunpack.c.h.b16 %v85
    %v562 = vunpack.c.l.b16 %v86
    %v563 = vunpack.c.h.b16 %v86
    %v564 = vunpack.c.l.b16 %v87
    %v565 = vunpack.c.h.b16 %v87
    %v566 = vunpack.c.l.b16 %v88
    %v567 = vunpack.c.h.b16 %v88
    %v568 = vunpack.c.l.b16 %v89
    %v569 = vunpack.c.h.b16 %v89
    %v570 = vunpack.c.l.b16 %v90
    %v571 = vunpack.c.h.b16 %v90
    %v572 = vunpack.c.l.b16 %v91
    %v573 = vunpack.c.h.b16 %v91
    %v574 = vunpack.c.l.b16 %v92
    %v575 = vunpack.c.h.b16 %v92
    %v576 = vunpack.c.l.b16 %v93
    %v577 = vunpack.c.h.b16 %v93
    %v578 = vunpack.c.l.b16 %v94
    %v579 = vunpack.c.h.b16 %v94
    %v580 = vunpack.c.l.b16 %v95
    %v581 = vunpack.c.h.b16 %v95
    %v582 = vunpack.c.l.b16 %v96
    %v583 = vunpack.c.h.b16 %v96
    %v584 = vunpack.c.l.b16 %v97
    %v585 = vunpack.c.h.b16 %v97
    %v586 = vunpack.c.l.b16 %v98
    %v587 = vunpack.c.h.b16 %v98
    %v588 = vunpack.c.l.b16 %v99
    %v589 = vunpack.c.h.b16 %v99
    %v590 = vunpack.c.l.b16 %v100
    %v591 = vunpack.c.h.b16 %v100
    %v592 = vunpack.c.l.b16 %v101
    %v593 = vunpack.c.h.b16 %v101
    %v594 = vunpack.c.l.b16 %v102
    %v595 = vunpack.c.h.b16 %v102
    %v596 = vunpack.c.l.b16 %v103
    %v597 = vunpack.c.h.b16 %v103
    %v598 = vunpack.c.l.b16 %v104
    %v599 = vunpack.c.h.b16 %v104
    %v600 = vunpack.c.l.b16 %v105
    %v601 = vunpack.c.h.b16 %v105
    %v602 = vunpack.c.l.b16 %v106
    %v603 = vunpack.c.h.b16 %v106
    %v604 = vunpack.c.l.b16 %v107
    %v605 = vunpack.c.h.b16 %v107
    %v606 = vunpack.c.l.b16 %v108
    %v607 = vunpack.c.h.b16 %v108
    %v608 = vunpack.c.l.b16 %v109
    %v609 = vunpack.c.h.b16 %v109
    %v610 = vunpack.c.l.b16 %v110
    %v611 = vunpack.c.h.b16 %v110
    %v612 = vunpack.c.l.b16 %v111
    %v613 = vunpack.c.h.b16 %v111
    %v614 = vunpack.c.l.b16 %v112
    %v615 = vunpack.c.h.b16 %v112
    %v616 = vunpack.c.l.b16 %v113
    %v617 = vunpack.c.h.b16 %v113
    %v618 = vunpack.c.l.b16 %v114
    %v619 = vunpack.c.h.b16 %v114
    %v620 = vunpack.c.l.b16 %v115
    %v621 = vunpack.c.h.b16 %v115
    %v622 = vunpack.c.l.b16 %v116
    %v623 = vunpack.c.h.b16 %v116
    %v624 = vunpack.c.l.b16 %v117
    %v625 = vunpack.c.h.b16 %v117
    %v626 = vunpack.c.l.b16 %v118
    %v627 = vunpack.c.h.b16 %v118
    %v628 = vunpack.c.l.b16 %v119
    %v629 = vunpack.c.h.b16 %v119
    %v630 = vunpack.c.l.b16 %v120
    %v631 = vunpack.c.h.b16 %v120
    %v632 = vunpack.c.l.b16 %v121
    %v633 = vunpack.c.h.b16 %v121
    %v634 = vunpack.c.l.b16 %v122
    %v635 = vunpack.c.h.b16 %v122
    %v636 = vunpack.c.l.b16 %v123
    %v637 = vunpack.c.h.b16 %v123
    %v638 = vunpack.c.l.b16 %v124
    %v639 = vunpack.c.h.b16 %v124
    %v640 = vunpack.c.l.b16 %v125
    %v641 = vunpack.c.h.b16 %v125
    %v642 = vunpack.c.l.b16 %v126
    %v643 = vunpack.c.h.b16 %v126
    %v644 = vunpack.c.l.b16 %v127
    %v645 = vunpack.c.h.b16 %v127
    %v646 = vunpack.c.l.b16 %v128
    %v647 = vunpack.c.h.b16 %v128
    %v648 = vunpack.c.l.b16 %v129
    %v649 = vunpack.c.h.b16 %v129
    %v650 = vunpack.c.l.b16 %v130
    %v651 = vunpack.c.h.b16 %v130
    %v652 = vunpack.c.l.b16 %v131
    %v653 = vunpack.c.h.b16 %v131
    %v654 = vunpack.c.l.b16 %v132
    %v655 = vunpack.c.h.b16 %v132
    %v656 = vunpack.c.l.b16 %v133
    %v657 = vunpack.c.h.b16 %v133
    %v658 = vunpack.c.l.b16 %v134
    %v659 = vunpack.c.h.b16 %v134
    %v660 = vunpack.c.l.b16 %v135
    %v661 = vunpack.c.h.b16 %v135
    %v662 = vunpack.c.l.b16 %v136
    %v663 = vunpack.c.h.b16 %v136
    %v664 = vunpack.c.l.b16 %v137
    %v665 = vunpack.c.h.b16 %v137
    %v666 = vunpack.c.l.b16 %v138
    %v667 = vunpack.c.h.b16 %v138
    %v668 = vunpack.c.l.b16 %v139
    %v669 = vunpack.c.h.b16 %v139
    %v670 = vunpack.c.l.b16 %v140
    %v671 = vunpack.c.h.b16 %v140
    %v672 = vunpack.c.l.b16 %v141
    %v673 = vunpack.c.h.b16 %v141
    %v674 = vunpack.c.l.b16 %v142
    %v675 = vunpack.c.h.b16 %v142
    %v676 = vunpack.c.l.b16 %v143
    %v677 = vunpack.c.h.b16 %v143
    %v678 = vunpack.c.l.b16 %v144
    %v679 = vunpack.c.h.b16 %v144
    %v680 = vunpack.c.l.b16 %v145
    %v681 = vunpack.c.h.b16 %v145
    %v682 = vunpack.c.l.b16 %v146
    %v683 = vunpack.c.h.b16 %v146
    %v684 = vunpack.c.l.b16 %v147
    %v685 = vunpack.c.h.b16 %v147
    %v686 = vunpack.c.l.b16 %v148
    %v687 = vunpack.c.h.b16 %v148
    %v688 = vunpack.c.l.b16 %v149
    %v689 = vunpack.c.h.b16 %v149
    %v690 = vunpack.c.l.b16 %v150
    %v691 = vunpack.c.h.b16 %v150
    %v692 = vunpack.c.l.b16 %v151
    %v693 = vunpack.c.h.b16 %v151
    %v694 = vunpack.c.l.b16 %v152
    %v695 = vunpack.c.h.b16 %v152
    %v696 = vunpack.c.l.b16 %v153
    %v697 = vunpack.c.h.b16 %v153
    %v698 = vunpack.c.l.b16 %v154
    %v699 = vunpack.c.h.b16 %v154
    %v700 = vunpack.c.l.b16 %v155
    %v701 = vunpack.c.h.b16 %v155
    %v702 = vunpack.c.l.b16 %v156
    %v703 = vunpack.c.h.b16 %v156
    %v704 = vunpack.c.l.b16 %v157
    %v705 = vunpack.c.h.b16 %v157
    %v706 = vunpack.c.l.b16 %v158
    %v707 = vunpack.c.h.b16 %v158
    %v708 = vunpack.c.l.b16 %v159
    %v709 = vunpack.c.h.b16 %v159
    %v710 = vunpack.c.l.b16 %v160
    %v711 = vunpack.c.h.b16 %v160
    %v712 = vunpack.c.l.b16 %v161
    %v713 = vunpack.c.h.b16 %v161
    %v714 = vunpack.c.l.b16 %v162
    %v715 = vunpack.c.h.b16 %v162
    %v716 = vunpack.c.l.b16 %v163
    %v717 = vunpack.c.h.b16 %v163
    %v718 = vunpack.c.l.b16 %v164
    %v719 = vunpack.c.h.b16 %v164
    %v720 = vunpack.c.l.b16 %v165
    %v721 = vunpack.c.h.b16 %v165
    %v722 = vunpack.c.l.b16 %v166
    %v723 = vunpack.c.h.b16 %v166
    %v724 = vunpack.c.l.b16 %v167
    %v725 = vunpack.c.h.b16 %v167
    %v726 = vunpack.c.l.b16 %v168
    %v727 = vunpack.c.h.b16 %v168
    %v728 = vunpack.c.l.b16 %v169
    %v729 = vunpack.c.h.b16 %v169
    %v730 = vunpack.c.l.b16 %v170
    %v731 = vunpack.c.h.b16 %v170
    %v732 = vunpack.c.l.b16 %v171
    %v733 = vunpack.c.h.b16 %v171
    %v734 = vunpack.c.l.b16 %v172
    %v735 = vunpack.c.h.b16 %v172
    %v736 = vunpack.c.l.b16 %v173
    %v737 = vunpack.c.h.b16 %v173
    %v738 = vunpack.c.l.b16 %v174
    %v739 = vunpack.c.h.b16 %v174
    %v740 = vunpack.c.l.b16 %v175
    %v741 = vunpack.c.h.b16 %v175
    %v742 = vunpack.c.l.b16 %v176
    %v743 = vunpack.c.h.b16 %v176
    %v744 = vunpack.c.l.b16 %v177
    %v745 = vunpack.c.h.b16 %v177
    %v746 = vunpack.c.l.b16 %v178
    %v747 = vunpack.c.h.b16 %v178
    %v748 = vunpack.c.l.b16 %v179
    %v749 = vunpack.c.h.b16 %v179
    %v750 = vunpack.c.l.b16 %v180
    %v751 = vunpack.c.h.b16 %v180
    %v752 = vunpack.c.l.b16 %v181
    %v753 = vunpack.c.h.b16 %v181
    %v754 = vunpack.c.l.b16 %v182
    %v755 = vunpack.c.h.b16 %v182
    %v756 = vunpack.c.l.b16 %v183
    %v757 = vunpack.c.h.b16 %v183
    %v758 = vunpack.c.l.b16 %v184
    %v759 = vunpack.c.h.b16 %v184
    %v760 = vunpack.c.l.b16 %v185
    %v761 = vunpack.c.h.b16 %v185
    %v762 = vpack.c.b16 %v510, %v506
    %v763 = vpack.c.b16 %v511, %v507
    %v764 = vpack.c.b16 %v512, %v508
    %v765 = vpack.c.b16 %v513, %v509
    %v766 = vpack.c.b16 %v518, %v514
    %v767 = vpack.c.b16 %v519, %v515
    %v768 = vpack.c.b16 %v520, %v516
    %v769 = vpack.c.b16 %v521, %v517
    %v770 = vpack.c.b16 %v526, %v522
    %v771 = vpack.c.b16 %v527, %v523
    %v772 = vpack.c.b16 %v528, %v524
    %v773 = vpack.c.b16 %v529, %v525
    %v774 = vpack.c.b16 %v534, %v530
    %v775 = vpack.c.b16 %v535, %v531
    %v776 = vpack.c.b16 %v536, %v532
    %v777 = vpack.c.b16 %v537, %v533
    %v778 = vpack.c.b16 %v542, %v538
    %v779 = vpack.c.b16 %v543, %v539
    %v780 = vpack.c.b16 %v544, %v540
    %v781 = vpack.c.b16 %v545, %v541
    %v782 = vpack.c.b16 %v550, %v546
    %v783 = vpack.c.b16 %v551, %v547
    %v784 = vpack.c.b16 %v552, %v548
    %v785 = vpack.c.b16 %v553, %v549
    %v786 = vpack.c.b16 %v558, %v554
    %v787 = vpack.c.b16 %v559, %v555
    %v788 = vpack.c.b16 %v560, %v556
    %v789 = vpack.c.b16 %v561, %v557
    %v790 = vpack.c.b16 %v566, %v562
    %v791 = vpack.c.b16 %v567, %v563
    %v792 = vpack.c.b16 %v568, %v564
    %v793 = vpack.c.b16 %v569, %v565
    %v794 = vpack.c.b16 %v574, %v570
    %v795 = vpack.c.b16 %v575, %v571
    %v796 = vpack.c.b16 %v576, %v572
    %v797 = vpack.c.b16 %v577, %v573
    %v798 = vpack.c.b16 %v582, %v578
    %v799 = vpack.c.b16 %v583, %v579
    %v800 = vpack.c.b16 %v584, %v580
    %v801 = vpack.c.b16 %v585, %v581
    %v802 = vpack.c.b16 %v590, %v586
    %v803 = vpack.c.b16 %v591, %v587
    %v804 = vpack.c.b16 %v592, %v588
    %v805 = vpack.c.b16 %v593, %v589
    %v806 = vpack.c.b16 %v598, %v594
    %v807 = vpack.c.b16 %v599, %v595
    %v808 = vpack.c.b16 %v600, %v596
    %v809 = vpack.c.b16 %v601, %v597
    %v810 = vpack.c.b16 %v606, %v602
    %v811 = vpack.c.b16 %v607, %v603
    %v812 = vpack.c.b16 %v608, %v604
    %v813 = vpack.c.b16 %v609, %v605
    %v814 = vpack.c.b16 %v614, %v610
    %v815 = vpack.c.b16 %v615, %v611
    %v816 = vpack.c.b16 %v616, %v612
    %v817 = vpack.c.b16 %v617, %v613
    %v818 = vpack.c.b16 %v622, %v618
    %v819 = vpack.c.b16 %v623, %v619
    %v820 = vpack.c.b16 %v624, %v620
    %v821 = vpack.c.b16 %v625, %v621
    %v822 = vpack.c.b16 %v630, %v626
    %v823 = vpack.c.b16 %v631, %v627
    %v824 = vpack.c.b16 %v632, %v628
    %v825 = vpack.c.b16 %v633, %v629
    %v826 = vpack.c.b16 %v638, %v634
    %v827 = vpack.c.b16 %v639, %v635
    %v828 = vpack.c.b16 %v640, %v636
    %v829 = vpack.c.b16 %v641, %v637
    %v830 = vpack.c.b16 %v646, %v642
    %v831 = vpack.c.b16 %v647, %v643
    %v832 = vpack.c.b16 %v648, %v644
    %v833 = vpack.c.b16 %v649, %v645
    %v834 = vpack.c.b16 %v654, %v650
    %v835 = vpack.c.b16 %v655, %v651
    %v836 = vpack.c.b16 %v656, %v652
    %v837 = vpack.c.b16 %v657, %v653
    %v838 = vpack.c.b16 %v662, %v658
    %v839 = vpack.c.b16 %v663, %v659
    %v840 = vpack.c.b16 %v664, %v660
    %v841 = vpack.c.b16 %v665, %v661
    %v842 = vpack.c.b16 %v670, %v666
    %v843 = vpack.c.b16 %v671, %v667
    %v844 = vpack.c.b16 %v672, %v668
    %v845 = vpack.c.b16 %v673, %v669
    %v846 = vpack.c.b16 %v678, %v674
    %v847 = vpack.c.b16 %v679, %v675
    %v848 = vpack.c.b16 %v680, %v676
    %v849 = vpack.c.b16 %v681, %v677
    %v850 = vpack.c.b16 %v686, %v682
    %v851 = vpack.c.b16 %v687, %v683
    %v852 = vpack.c.b16 %v688, %v684
    %v853 = vpack.c.b16 %v689, %v685
    %v854 = vpack.c.b16 %v694, %v690
    %v855 = vpack.c.b16 %v695, %v691
    %v856 = vpack.c.b16 %v696, %v692
    %v857 = vpack.c.b16 %v697, %v693
    %v858 = vpack.c.b16 %v702, %v698
    %v859 = vpack.c.b16 %v703, %v699
    %v860 = vpack.c.b16 %v704, %v700
    %v861 = vpack.c.b16 %v705, %v701
    %v862 = vpack.c.b16 %v710, %v706
    %v863 = vpack.c.b16 %v711, %v707
    %v864 = vpack.c.b16 %v712, %v708
    %v865 = vpack.c.b16 %v713, %v709
    %v866 = vpack.c.b16 %v718, %v714
    %v867 = vpack.c.b16 %v719, %v715
    %v868 = vpack.c.b16 %v720, %v716
    %v869 = vpack.c.b16 %v721, %v717
    %v870 = vpack.c.b16 %v726, %v722
    %v871 = vpack.c.b16 %v727, %v723
    %v872 = vpack.c.b16 %v728, %v724
    %v873 = vpack.c.b16 %v729, %v725
    %v874 = vpack.c.b16 %v734, %v730
    %v875 = vpack.c.b16 %v735, %v731
    %v876 = vpack.c.b16 %v736, %v732
    %v877 = vpack.c.b16 %v737, %v733
    %v878 = vpack.c.b16 %v742, %v738
    %v879 = vpack.c.b16 %v743, %v739
    %v880 = vpack.c.b16 %v744, %v740
    %v881 = vpack.c.b16 %v745, %v741
    %v882 = vpack.c.b16 %v750, %v746
    %v883 = vpack.c.b16 %v751, %v747
    %v884 = vpack.c.b16 %v752, %v748
    %v885 = vpack.c.b16 %v753, %v749
    %v886 = vpack.c.b16 %v758, %v754
    %v887 = vpack.c.b16 %v759, %v755
    %v888 = vpack.c.b16 %v760, %v756
    %v889 = vpack.c.b16 %v761, %v757
    %v1082 = vunpack.c.l.b16 %v250
    %v1083 = vunpack.c.l.b16 %v251
    %v1084 = vunpack.c.l.b16 %v252
    %v1085 = vunpack.c.l.b16 %v253
    %v1086 = vunpack.c.l.b16 %v254
    %v1087 = vunpack.c.l.b16 %v255
    %v1088 = vunpack.c.l.b16 %v256
    %v1089 = vunpack.c.l.b16 %v257
    %v1090 = vunpack.c.l.b16 %v258
    %v1091 = vunpack.c.l.b16 %v259
    %v1092 = vunpack.c.l.b16 %v260
    %v1093 = vunpack.c.l.b16 %v261
    %v1094 = vunpack.c.l.b16 %v262
    %v1095 = vunpack.c.l.b16 %v263
    %v1096 = vunpack.c.l.b16 %v264
    %v1097 = vunpack.c.l.b16 %v265
    %v1098 = vunpack.c.l.b16 %v266
    %v1099 = vunpack.c.l.b16 %v267
    %v1100 = vunpack.c.l.b16 %v268
    %v1101 = vunpack.c.l.b16 %v269
    %v1102 = vunpack.c.l.b16 %v270
    %v1103 = vunpack.c.l.b16 %v271
    %v1104 = vunpack.c.l.b16 %v272
    %v1105 = vunpack.c.l.b16 %v273
    %v1106 = vunpack.c.l.b16 %v274
    %v1107 = vunpack.c.l.b16 %v275
    %v1108 = vunpack.c.l.b16 %v276
    %v1109 = vunpack.c.l.b16 %v277
    %v1110 = vunpack.c.l.b16 %v278
    %v1111 = vunpack.c.l.b16 %v279
    %v1112 = vunpack.c.l.b16 %v280
    %v1113 = vunpack.c.l.b16 %v281
    %v1114 = vunpack.c.l.b16 %v282
    %v1115 = vunpack.c.l.b16 %v283
    %v1116 = vunpack.c.l.b16 %v284
    %v1117 = vunpack.c.l.b16 %v285
    %v1118 = vunpack.c.l.b16 %v286
    %v1119 = vunpack.c.l.b16 %v287
    %v1120 = vunpack.c.l.b16 %v288
    %v1121 = vunpack.c.l.b16 %v289
    %v1122 = vunpack.c.l.b16 %v290
    %v1123 = vunpack.c.l.b16 %v291
    %v1124 = vunpack.c.l.b16 %v292
    %v1125 = vunpack.c.l.b16 %v293
    %v1126 = vunpack.c.l.b16 %v294
    %v1127 = vunpack.c.l.b16 %v295
    %v1128 = vunpack.c.l.b16 %v296
    %v1129 = vunpack.c.l.b16 %v297
    %v1130 = vunpack.c.l.b16 %v298
    %v1131 = vunpack.c.l.b16 %v299
    %v1132 = vunpack.c.l.b16 %v300
    %v1133 = vunpack.c.l.b16 %v301
    %v1134 = vunpack.c.l.b16 %v302
    %v1135 = vunpack.c.l.b16 %v303
    %v1136 = vunpack.c.l.b16 %v304
    %v1137 = vunpack.c.l.b16 %v305
    %v1138 = vunpack.c.l.b16 %v306
    %v1139 = vunpack.c.l.b16 %v307
    %v1140 = vunpack.c.l.b16 %v308
    %v1141 = vunpack.c.l.b16 %v309
    %v1142 = vunpack.c.l.b16 %v310
    %v1143 = vunpack.c.l.b16 %v311
    %v1144 = vunpack.c.l.b16 %v312
    %v1145 = vunpack.c.l.b16 %v313
    %v1146 = vpack.c.b16 %v1083, %v1082
    %v1147 = vpack.c.b16 %v1085, %v1084
    %v1148 = vpack.c.b16 %v1087, %v1086
    %v1149 = vpack.c.b16 %v1089, %v1088
    %v1150 = vpack.c.b16 %v1091, %v1090
    %v1151 = vpack.c.b16 %v1093, %v1092
    %v1152 = vpack.c.b16 %v1095, %v1094
    %v1153 = vpack.c.b16 %v1097, %v1096
    %v1154 = vpack.c.b16 %v1099, %v1098
    %v1155 = vpack.c.b16 %v1101, %v1100
    %v1156 = vpack.c.b16 %v1103, %v1102
    %v1157 = vpack.c.b16 %v1105, %v1104
    %v1158 = vpack.c.b16 %v1107, %v1106
    %v1159 = vpack.c.b16 %v1109, %v1108
    %v1160 = vpack.c.b16 %v1111, %v1110
    %v1161 = vpack.c.b16 %v1113, %v1112
    %v1162 = vpack.c.b16 %v1115, %v1114
    %v1163 = vpack.c.b16 %v1117, %v1116
    %v1164 = vpack.c.b16 %v1119, %v1118
    %v1165 = vpack.c.b16 %v1121, %v1120
    %v1166 = vpack.c.b16 %v1123, %v1122
    %v1167 = vpack.c.b16 %v1125, %v1124
    %v1168 = vpack.c.b16 %v1127, %v1126
    %v1169 = vpack.c.b16 %v1129, %v1128
    %v1170 = vpack.c.b16 %v1131, %v1130
    %v1171 = vpack.c.b16 %v1133, %v1132
    %v1172 = vpack.c.b16 %v1135, %v1134
    %v1173 = vpack.c.b16 %v1137, %v1136
    %v1174 = vpack.c.b16 %v1139, %v1138
    %v1175 = vpack.c.b16 %v1141, %v1140
    %v1176 = vpack.c.b16 %v1143, %v1142
    %v1177 = vpack.c.b16 %v1145, %v1144
    %1210 = vmatpush.bf16.msra.mxu0 %v1153
    %1211 = vmatpush.bf16.msra.mxu0 %v1152
    %1212 = vmatpush.bf16.msra.mxu0 %v1151
    %1213 = vmatpush.bf16.msra.mxu0 %v1150
    %1214 = vmatpush.bf16.msra.mxu0 %v1149
    %1215 = vmatpush.bf16.msra.mxu0 %v1148
    %1216 = vmatpush.bf16.msra.mxu0 %v1147
    %1217 = vmatpush.bf16.msra.mxu0 %v1146
    %1218 = vmatmul.bf16.gmra.mxu0 %v762
    %v1219 = vpop.f32.mrf.mxu0
    %v1220 = vadd.f32 %v314, %v1219
    %v1221 = vpop.f32.mrf.mxu0
    %v1222 = vadd.f32 %v315, %v1221
    %1223 = vmatmul.bf16.gmra.mxu0 %v766
    %v1224 = vpop.f32.mrf.mxu0
    %v1225 = vadd.f32 %v316, %v1224
    %v1226 = vpop.f32.mrf.mxu0
    %v1227 = vadd.f32 %v317, %v1226
    %1228 = vmatmul.bf16.gmra.mxu0 %v770
    %v1229 = vpop.f32.mrf.mxu0
    %v1230 = vadd.f32 %v318, %v1229
    %v1231 = vpop.f32.mrf.mxu0
    %v1232 = vadd.f32 %v319, %v1231
    %1233 = vmatmul.bf16.gmra.mxu0 %v774
    %v1234 = vpop.f32.mrf.mxu0
    %v1235 = vadd.f32 %v320, %v1234
    %v1236 = vpop.f32.mrf.mxu0
    %v1237 = vadd.f32 %v321, %v1236
    %1238 = vmatmul.bf16.gmra.mxu0 %v778
    %v1239 = vpop.f32.mrf.mxu0
    %v1240 = vadd.f32 %v322, %v1239
    %v1241 = vpop.f32.mrf.mxu0
    %v1242 = vadd.f32 %v323, %v1241
    %1243 = vmatmul.bf16.gmra.mxu0 %v782
    %v1244 = vpop.f32.mrf.mxu0
    %v1245 = vadd.f32 %v324, %v1244
    %v1246 = vpop.f32.mrf.mxu0
    %v1247 = vadd.f32 %v325, %v1246
    %1248 = vmatmul.bf16.gmra.mxu0 %v786
    %v1249 = vpop.f32.mrf.mxu0
    %v1250 = vadd.f32 %v326, %v1249
    %v1251 = vpop.f32.mrf.mxu0
    %v1252 = vadd.f32 %v327, %v1251
    %1253 = vmatmul.bf16.gmra.mxu0 %v790
    %v1254 = vpop.f32.mrf.mxu0
    %v1255 = vadd.f32 %v328, %v1254
    %v1256 = vpop.f32.mrf.mxu0
    %v1257 = vadd.f32 %v329, %v1256
    %1258 = vmatmul.bf16.gmra.mxu0 %v794
    %v1259 = vpop.f32.mrf.mxu0
    %v1260 = vadd.f32 %v330, %v1259
    %v1261 = vpop.f32.mrf.mxu0
    %v1262 = vadd.f32 %v331, %v1261
    %1263 = vmatmul.bf16.gmra.mxu0 %v798
    %v1264 = vpop.f32.mrf.mxu0
    %v1265 = vadd.f32 %v332, %v1264
    %v1266 = vpop.f32.mrf.mxu0
    %v1267 = vadd.f32 %v333, %v1266
    %1268 = vmatmul.bf16.gmra.mxu0 %v802
    %v1269 = vpop.f32.mrf.mxu0
    %v1270 = vadd.f32 %v334, %v1269
    %v1271 = vpop.f32.mrf.mxu0
    %v1272 = vadd.f32 %v335, %v1271
    %1273 = vmatmul.bf16.gmra.mxu0 %v806
    %v1274 = vpop.f32.mrf.mxu0
    %v1275 = vadd.f32 %v336, %v1274
    %v1276 = vpop.f32.mrf.mxu0
    %v1277 = vadd.f32 %v337, %v1276
    %1278 = vmatmul.bf16.gmra.mxu0 %v810
    %v1279 = vpop.f32.mrf.mxu0
    %v1280 = vadd.f32 %v338, %v1279
    %v1281 = vpop.f32.mrf.mxu0
    %v1282 = vadd.f32 %v339, %v1281
    %1283 = vmatmul.bf16.gmra.mxu0 %v814
    %v1284 = vpop.f32.mrf.mxu0
    %v1285 = vadd.f32 %v340, %v1284
    %v1286 = vpop.f32.mrf.mxu0
    %v1287 = vadd.f32 %v341, %v1286
    %1288 = vmatmul.bf16.gmra.mxu0 %v818
    %v1289 = vpop.f32.mrf.mxu0
    %v1290 = vadd.f32 %v342, %v1289
    %v1291 = vpop.f32.mrf.mxu0
    %v1292 = vadd.f32 %v343, %v1291
    %1293 = vmatmul.bf16.gmra.mxu0 %v822
    %v1294 = vpop.f32.mrf.mxu0
    %v1295 = vadd.f32 %v344, %v1294
    %v1296 = vpop.f32.mrf.mxu0
    %v1297 = vadd.f32 %v345, %v1296
    %1298 = vmatmul.bf16.gmra.mxu0 %v826
    %v1299 = vpop.f32.mrf.mxu0
    %v1300 = vadd.f32 %v346, %v1299
    %v1301 = vpop.f32.mrf.mxu0
    %v1302 = vadd.f32 %v347, %v1301
    %1303 = vmatmul.bf16.gmra.mxu0 %v830
    %v1304 = vpop.f32.mrf.mxu0
    %v1305 = vadd.f32 %v348, %v1304
    %v1306 = vpop.f32.mrf.mxu0
    %v1307 = vadd.f32 %v349, %v1306
    %1308 = vmatmul.bf16.gmra.mxu0 %v834
    %v1309 = vpop.f32.mrf.mxu0
    %v1310 = vadd.f32 %v350, %v1309
    %v1311 = vpop.f32.mrf.mxu0
    %v1312 = vadd.f32 %v351, %v1311
    %1313 = vmatmul.bf16.gmra.mxu0 %v838
    %v1314 = vpop.f32.mrf.mxu0
    %v1315 = vadd.f32 %v352, %v1314
    %v1316 = vpop.f32.mrf.mxu0
    %v1317 = vadd.f32 %v353, %v1316
    %1318 = vmatmul.bf16.gmra.mxu0 %v842
    %v1319 = vpop.f32.mrf.mxu0
    %v1320 = vadd.f32 %v354, %v1319
    %v1321 = vpop.f32.mrf.mxu0
    %v1322 = vadd.f32 %v355, %v1321
    %1323 = vmatmul.bf16.gmra.mxu0 %v846
    %v1324 = vpop.f32.mrf.mxu0
    %v1325 = vadd.f32 %v356, %v1324
    %v1326 = vpop.f32.mrf.mxu0
    %v1327 = vadd.f32 %v357, %v1326
    %1328 = vmatmul.bf16.gmra.mxu0 %v850
    %v1329 = vpop.f32.mrf.mxu0
    %v1330 = vadd.f32 %v358, %v1329
    %v1331 = vpop.f32.mrf.mxu0
    %v1332 = vadd.f32 %v359, %v1331
    %1333 = vmatmul.bf16.gmra.mxu0 %v854
    %v1334 = vpop.f32.mrf.mxu0
    %v1335 = vadd.f32 %v360, %v1334
    %v1336 = vpop.f32.mrf.mxu0
    %v1337 = vadd.f32 %v361, %v1336
    %1338 = vmatmul.bf16.gmra.mxu0 %v858
    %v1339 = vpop.f32.mrf.mxu0
    %v1340 = vadd.f32 %v362, %v1339
    %v1341 = vpop.f32.mrf.mxu0
    %v1342 = vadd.f32 %v363, %v1341
    %1343 = vmatmul.bf16.gmra.mxu0 %v862
    %v1344 = vpop.f32.mrf.mxu0
    %v1345 = vadd.f32 %v364, %v1344
    %v1346 = vpop.f32.mrf.mxu0
    %v1347 = vadd.f32 %v365, %v1346
    %1348 = vmatmul.bf16.gmra.mxu0 %v866
    %v1349 = vpop.f32.mrf.mxu0
    %v1350 = vadd.f32 %v366, %v1349
    %v1351 = vpop.f32.mrf.mxu0
    %v1352 = vadd.f32 %v367, %v1351
    %1353 = vmatmul.bf16.gmra.mxu0 %v870
    %v1354 = vpop.f32.mrf.mxu0
    %v1355 = vadd.f32 %v368, %v1354
    %v1356 = vpop.f32.mrf.mxu0
    %v1357 = vadd.f32 %v369, %v1356
    %1358 = vmatmul.bf16.gmra.mxu0 %v874
    %v1359 = vpop.f32.mrf.mxu0
    %v1360 = vadd.f32 %v370, %v1359
    %v1361 = vpop.f32.mrf.mxu0
    %v1362 = vadd.f32 %v371, %v1361
    %1363 = vmatmul.bf16.gmra.mxu0 %v878
    %v1364 = vpop.f32.mrf.mxu0
    %v1365 = vadd.f32 %v372, %v1364
    %v1366 = vpop.f32.mrf.mxu0
    %v1367 = vadd.f32 %v373, %v1366
    %1368 = vmatmul.bf16.gmra.mxu0 %v882
    %v1369 = vpop.f32.mrf.mxu0
    %v1370 = vadd.f32 %v374, %v1369
    %v1371 = vpop.f32.mrf.mxu0
    %v1372 = vadd.f32 %v375, %v1371
    %1373 = vmatmul.bf16.gmra.mxu0 %v886
    %v1374 = vpop.f32.mrf.mxu0
    %v1375 = vadd.f32 %v376, %v1374
    %v1376 = vpop.f32.mrf.mxu0
    %v1377 = vadd.f32 %v377, %v1376
    %1378 = vdwg.mxu0
    %1379 = vmatpush.bf16.msra.mxu0 %v1161
    %1380 = vmatpush.bf16.msra.mxu0 %v1160
    %1381 = vmatpush.bf16.msra.mxu0 %v1159
    %1382 = vmatpush.bf16.msra.mxu0 %v1158
    %1383 = vmatpush.bf16.msra.mxu0 %v1157
    %1384 = vmatpush.bf16.msra.mxu0 %v1156
    %1385 = vmatpush.bf16.msra.mxu0 %v1155
    %1386 = vmatpush.bf16.msra.mxu0 %v1154
    %1387 = vmatmul.bf16.gmra.mxu0 %v763
    %v1388 = vpop.f32.mrf.mxu0
    %v1389 = vadd.f32 %v1220, %v1388
    %v1390 = vpop.f32.mrf.mxu0
    %v1391 = vadd.f32 %v1222, %v1390
    %1392 = vmatmul.bf16.gmra.mxu0 %v767
    %v1393 = vpop.f32.mrf.mxu0
    %v1394 = vadd.f32 %v1225, %v1393
    %v1395 = vpop.f32.mrf.mxu0
    %v1396 = vadd.f32 %v1227, %v1395
    %1397 = vmatmul.bf16.gmra.mxu0 %v771
    %v1398 = vpop.f32.mrf.mxu0
    %v1399 = vadd.f32 %v1230, %v1398
    %v1400 = vpop.f32.mrf.mxu0
    %v1401 = vadd.f32 %v1232, %v1400
    %1402 = vmatmul.bf16.gmra.mxu0 %v775
    %v1403 = vpop.f32.mrf.mxu0
    %v1404 = vadd.f32 %v1235, %v1403
    %v1405 = vpop.f32.mrf.mxu0
    %v1406 = vadd.f32 %v1237, %v1405
    %1407 = vmatmul.bf16.gmra.mxu0 %v779
    %v1408 = vpop.f32.mrf.mxu0
    %v1409 = vadd.f32 %v1240, %v1408
    %v1410 = vpop.f32.mrf.mxu0
    %v1411 = vadd.f32 %v1242, %v1410
    %1412 = vmatmul.bf16.gmra.mxu0 %v783
    %v1413 = vpop.f32.mrf.mxu0
    %v1414 = vadd.f32 %v1245, %v1413
    %v1415 = vpop.f32.mrf.mxu0
    %v1416 = vadd.f32 %v1247, %v1415
    %1417 = vmatmul.bf16.gmra.mxu0 %v787
    %v1418 = vpop.f32.mrf.mxu0
    %v1419 = vadd.f32 %v1250, %v1418
    %v1420 = vpop.f32.mrf.mxu0
    %v1421 = vadd.f32 %v1252, %v1420
    %1422 = vmatmul.bf16.gmra.mxu0 %v791
    %v1423 = vpop.f32.mrf.mxu0
    %v1424 = vadd.f32 %v1255, %v1423
    %v1425 = vpop.f32.mrf.mxu0
    %v1426 = vadd.f32 %v1257, %v1425
    %1427 = vmatmul.bf16.gmra.mxu0 %v795
    %v1428 = vpop.f32.mrf.mxu0
    %v1429 = vadd.f32 %v1260, %v1428
    %v1430 = vpop.f32.mrf.mxu0
    %v1431 = vadd.f32 %v1262, %v1430
    %1432 = vmatmul.bf16.gmra.mxu0 %v799
    %v1433 = vpop.f32.mrf.mxu0
    %v1434 = vadd.f32 %v1265, %v1433
    %v1435 = vpop.f32.mrf.mxu0
    %v1436 = vadd.f32 %v1267, %v1435
    %1437 = vmatmul.bf16.gmra.mxu0 %v803
    %v1438 = vpop.f32.mrf.mxu0
    %v1439 = vadd.f32 %v1270, %v1438
    %v1440 = vpop.f32.mrf.mxu0
    %v1441 = vadd.f32 %v1272, %v1440
    %1442 = vmatmul.bf16.gmra.mxu0 %v807
    %v1443 = vpop.f32.mrf.mxu0
    %v1444 = vadd.f32 %v1275, %v1443
    %v1445 = vpop.f32.mrf.mxu0
    %v1446 = vadd.f32 %v1277, %v1445
    %1447 = vmatmul.bf16.gmra.mxu0 %v811
    %v1448 = vpop.f32.mrf.mxu0
    %v1449 = vadd.f32 %v1280, %v1448
    %v1450 = vpop.f32.mrf.mxu0
    %v1451 = vadd.f32 %v1282, %v1450
    %1452 = vmatmul.bf16.gmra.mxu0 %v815
    %v1453 = vpop.f32.mrf.mxu0
    %v1454 = vadd.f32 %v1285, %v1453
    %v1455 = vpop.f32.mrf.mxu0
    %v1456 = vadd.f32 %v1287, %v1455
    %1457 = vmatmul.bf16.gmra.mxu0 %v819
    %v1458 = vpop.f32.mrf.mxu0
    %v1459 = vadd.f32 %v1290, %v1458
    %v1460 = vpop.f32.mrf.mxu0
    %v1461 = vadd.f32 %v1292, %v1460
    %1462 = vmatmul.bf16.gmra.mxu0 %v823
    %v1463 = vpop.f32.mrf.mxu0
    %v1464 = vadd.f32 %v1295, %v1463
    %v1465 = vpop.f32.mrf.mxu0
    %v1466 = vadd.f32 %v1297, %v1465
    %1467 = vmatmul.bf16.gmra.mxu0 %v827
    %v1468 = vpop.f32.mrf.mxu0
    %v1469 = vadd.f32 %v1300, %v1468
    %v1470 = vpop.f32.mrf.mxu0
    %v1471 = vadd.f32 %v1302, %v1470
    %1472 = vmatmul.bf16.gmra.mxu0 %v831
    %v1473 = vpop.f32.mrf.mxu0
    %v1474 = vadd.f32 %v1305, %v1473
    %v1475 = vpop.f32.mrf.mxu0
    %v1476 = vadd.f32 %v1307, %v1475
    %1477 = vmatmul.bf16.gmra.mxu0 %v835
    %v1478 = vpop.f32.mrf.mxu0
    %v1479 = vadd.f32 %v1310, %v1478
    %v1480 = vpop.f32.mrf.mxu0
    %v1481 = vadd.f32 %v1312, %v1480
    %1482 = vmatmul.bf16.gmra.mxu0 %v839
    %v1483 = vpop.f32.mrf.mxu0
    %v1484 = vadd.f32 %v1315, %v1483
    %v1485 = vpop.f32.mrf.mxu0
    %v1486 = vadd.f32 %v1317, %v1485
    %1487 = vmatmul.bf16.gmra.mxu0 %v843
    %v1488 = vpop.f32.mrf.mxu0
    %v1489 = vadd.f32 %v1320, %v1488
    %v1490 = vpop.f32.mrf.mxu0
    %v1491 = vadd.f32 %v1322, %v1490
    %1492 = vmatmul.bf16.gmra.mxu0 %v847
    %v1493 = vpop.f32.mrf.mxu0
    %v1494 = vadd.f32 %v1325, %v1493
    %v1495 = vpop.f32.mrf.mxu0
    %v1496 = vadd.f32 %v1327, %v1495
    %1497 = vmatmul.bf16.gmra.mxu0 %v851
    %v1498 = vpop.f32.mrf.mxu0
    %v1499 = vadd.f32 %v1330, %v1498
    %v1500 = vpop.f32.mrf.mxu0
    %v1501 = vadd.f32 %v1332, %v1500
    %1502 = vmatmul.bf16.gmra.mxu0 %v855
    %v1503 = vpop.f32.mrf.mxu0
    %v1504 = vadd.f32 %v1335, %v1503
    %v1505 = vpop.f32.mrf.mxu0
    %v1506 = vadd.f32 %v1337, %v1505
    %1507 = vmatmul.bf16.gmra.mxu0 %v859
    %v1508 = vpop.f32.mrf.mxu0
    %v1509 = vadd.f32 %v1340, %v1508
    %v1510 = vpop.f32.mrf.mxu0
    %v1511 = vadd.f32 %v1342, %v1510
    %1512 = vmatmul.bf16.gmra.mxu0 %v863
    %v1513 = vpop.f32.mrf.mxu0
    %v1514 = vadd.f32 %v1345, %v1513
    %v1515 = vpop.f32.mrf.mxu0
    %v1516 = vadd.f32 %v1347, %v1515
    %1517 = vmatmul.bf16.gmra.mxu0 %v867
    %v1518 = vpop.f32.mrf.mxu0
    %v1519 = vadd.f32 %v1350, %v1518
    %v1520 = vpop.f32.mrf.mxu0
    %v1521 = vadd.f32 %v1352, %v1520
    %1522 = vmatmul.bf16.gmra.mxu0 %v871
    %v1523 = vpop.f32.mrf.mxu0
    %v1524 = vadd.f32 %v1355, %v1523
    %v1525 = vpop.f32.mrf.mxu0
    %v1526 = vadd.f32 %v1357, %v1525
    %1527 = vmatmul.bf16.gmra.mxu0 %v875
    %v1528 = vpop.f32.mrf.mxu0
    %v1529 = vadd.f32 %v1360, %v1528
    %v1530 = vpop.f32.mrf.mxu0
    %v1531 = vadd.f32 %v1362, %v1530
    %1532 = vmatmul.bf16.gmra.mxu0 %v879
    %v1533 = vpop.f32.mrf.mxu0
    %v1534 = vadd.f32 %v1365, %v1533
    %v1535 = vpop.f32.mrf.mxu0
    %v1536 = vadd.f32 %v1367, %v1535
    %1537 = vmatmul.bf16.gmra.mxu0 %v883
    %v1538 = vpop.f32.mrf.mxu0
    %v1539 = vadd.f32 %v1370, %v1538
    %v1540 = vpop.f32.mrf.mxu0
    %v1541 = vadd.f32 %v1372, %v1540
    %1542 = vmatmul.bf16.gmra.mxu0 %v887
    %v1543 = vpop.f32.mrf.mxu0
    %v1544 = vadd.f32 %v1375, %v1543
    %v1545 = vpop.f32.mrf.mxu0
    %v1546 = vadd.f32 %v1377, %v1545
    %1547 = vdwg.mxu0
    %1548 = vmatpush.bf16.msra.mxu0 %v1169
    %1549 = vmatpush.bf16.msra.mxu0 %v1168
    %1550 = vmatpush.bf16.msra.mxu0 %v1167
    %1551 = vmatpush.bf16.msra.mxu0 %v1166
    %1552 = vmatpush.bf16.msra.mxu0 %v1165
    %1553 = vmatpush.bf16.msra.mxu0 %v1164
    %1554 = vmatpush.bf16.msra.mxu0 %v1163
    %1555 = vmatpush.bf16.msra.mxu0 %v1162
    %1556 = vmatmul.bf16.gmra.mxu0 %v764
    %v1557 = vpop.f32.mrf.mxu0
    %v1558 = vadd.f32 %v1389, %v1557
    %v1559 = vpop.f32.mrf.mxu0
    %v1560 = vadd.f32 %v1391, %v1559
    %1561 = vmatmul.bf16.gmra.mxu0 %v768
    %v1562 = vpop.f32.mrf.mxu0
    %v1563 = vadd.f32 %v1394, %v1562
    %v1564 = vpop.f32.mrf.mxu0
    %v1565 = vadd.f32 %v1396, %v1564
    %1566 = vmatmul.bf16.gmra.mxu0 %v772
    %v1567 = vpop.f32.mrf.mxu0
    %v1568 = vadd.f32 %v1399, %v1567
    %v1569 = vpop.f32.mrf.mxu0
    %v1570 = vadd.f32 %v1401, %v1569
    %1571 = vmatmul.bf16.gmra.mxu0 %v776
    %v1572 = vpop.f32.mrf.mxu0
    %v1573 = vadd.f32 %v1404, %v1572
    %v1574 = vpop.f32.mrf.mxu0
    %v1575 = vadd.f32 %v1406, %v1574
    %1576 = vmatmul.bf16.gmra.mxu0 %v780
    %v1577 = vpop.f32.mrf.mxu0
    %v1578 = vadd.f32 %v1409, %v1577
    %v1579 = vpop.f32.mrf.mxu0
    %v1580 = vadd.f32 %v1411, %v1579
    %1581 = vmatmul.bf16.gmra.mxu0 %v784
    %v1582 = vpop.f32.mrf.mxu0
    %v1583 = vadd.f32 %v1414, %v1582
    %v1584 = vpop.f32.mrf.mxu0
    %v1585 = vadd.f32 %v1416, %v1584
    %1586 = vmatmul.bf16.gmra.mxu0 %v788
    %v1587 = vpop.f32.mrf.mxu0
    %v1588 = vadd.f32 %v1419, %v1587
    %v1589 = vpop.f32.mrf.mxu0
    %v1590 = vadd.f32 %v1421, %v1589
    %1591 = vmatmul.bf16.gmra.mxu0 %v792
    %v1592 = vpop.f32.mrf.mxu0
    %v1593 = vadd.f32 %v1424, %v1592
    %v1594 = vpop.f32.mrf.mxu0
    %v1595 = vadd.f32 %v1426, %v1594
    %1596 = vmatmul.bf16.gmra.mxu0 %v796
    %v1597 = vpop.f32.mrf.mxu0
    %v1598 = vadd.f32 %v1429, %v1597
    %v1599 = vpop.f32.mrf.mxu0
    %v1600 = vadd.f32 %v1431, %v1599
    %1601 = vmatmul.bf16.gmra.mxu0 %v800
    %v1602 = vpop.f32.mrf.mxu0
    %v1603 = vadd.f32 %v1434, %v1602
    %v1604 = vpop.f32.mrf.mxu0
    %v1605 = vadd.f32 %v1436, %v1604
    %1606 = vmatmul.bf16.gmra.mxu0 %v804
    %v1607 = vpop.f32.mrf.mxu0
    %v1608 = vadd.f32 %v1439, %v1607
    %v1609 = vpop.f32.mrf.mxu0
    %v1610 = vadd.f32 %v1441, %v1609
    %1611 = vmatmul.bf16.gmra.mxu0 %v808
    %v1612 = vpop.f32.mrf.mxu0
    %v1613 = vadd.f32 %v1444, %v1612
    %v1614 = vpop.f32.mrf.mxu0
    %v1615 = vadd.f32 %v1446, %v1614
    %1616 = vmatmul.bf16.gmra.mxu0 %v812
    %v1617 = vpop.f32.mrf.mxu0
    %v1618 = vadd.f32 %v1449, %v1617
    %v1619 = vpop.f32.mrf.mxu0
    %v1620 = vadd.f32 %v1451, %v1619
    %1621 = vmatmul.bf16.gmra.mxu0 %v816
    %v1622 = vpop.f32.mrf.mxu0
    %v1623 = vadd.f32 %v1454, %v1622
    %v1624 = vpop.f32.mrf.mxu0
    %v1625 = vadd.f32 %v1456, %v1624
    %1626 = vmatmul.bf16.gmra.mxu0 %v820
    %v1627 = vpop.f32.mrf.mxu0
    %v1628 = vadd.f32 %v1459, %v1627
    %v1629 = vpop.f32.mrf.mxu0
    %v1630 = vadd.f32 %v1461, %v1629
    %1631 = vmatmul.bf16.gmra.mxu0 %v824
    %v1632 = vpop.f32.mrf.mxu0
    %v1633 = vadd.f32 %v1464, %v1632
    %v1634 = vpop.f32.mrf.mxu0
    %v1635 = vadd.f32 %v1466, %v1634
    %1636 = vmatmul.bf16.gmra.mxu0 %v828
    %v1637 = vpop.f32.mrf.mxu0
    %v1638 = vadd.f32 %v1469, %v1637
    %v1639 = vpop.f32.mrf.mxu0
    %v1640 = vadd.f32 %v1471, %v1639
    %1641 = vmatmul.bf16.gmra.mxu0 %v832
    %v1642 = vpop.f32.mrf.mxu0
    %v1643 = vadd.f32 %v1474, %v1642
    %v1644 = vpop.f32.mrf.mxu0
    %v1645 = vadd.f32 %v1476, %v1644
    %1646 = vmatmul.bf16.gmra.mxu0 %v836
    %v1647 = vpop.f32.mrf.mxu0
    %v1648 = vadd.f32 %v1479, %v1647
    %v1649 = vpop.f32.mrf.mxu0
    %v1650 = vadd.f32 %v1481, %v1649
    %1651 = vmatmul.bf16.gmra.mxu0 %v840
    %v1652 = vpop.f32.mrf.mxu0
    %v1653 = vadd.f32 %v1484, %v1652
    %v1654 = vpop.f32.mrf.mxu0
    %v1655 = vadd.f32 %v1486, %v1654
    %1656 = vmatmul.bf16.gmra.mxu0 %v844
    %v1657 = vpop.f32.mrf.mxu0
    %v1658 = vadd.f32 %v1489, %v1657
    %v1659 = vpop.f32.mrf.mxu0
    %v1660 = vadd.f32 %v1491, %v1659
    %1661 = vmatmul.bf16.gmra.mxu0 %v848
    %v1662 = vpop.f32.mrf.mxu0
    %v1663 = vadd.f32 %v1494, %v1662
    %v1664 = vpop.f32.mrf.mxu0
    %v1665 = vadd.f32 %v1496, %v1664
    %1666 = vmatmul.bf16.gmra.mxu0 %v852
    %v1667 = vpop.f32.mrf.mxu0
    %v1668 = vadd.f32 %v1499, %v1667
    %v1669 = vpop.f32.mrf.mxu0
    %v1670 = vadd.f32 %v1501, %v1669
    %1671 = vmatmul.bf16.gmra.mxu0 %v856
    %v1672 = vpop.f32.mrf.mxu0
    %v1673 = vadd.f32 %v1504, %v1672
    %v1674 = vpop.f32.mrf.mxu0
    %v1675 = vadd.f32 %v1506, %v1674
    %1676 = vmatmul.bf16.gmra.mxu0 %v860
    %v1677 = vpop.f32.mrf.mxu0
    %v1678 = vadd.f32 %v1509, %v1677
    %v1679 = vpop.f32.mrf.mxu0
    %v1680 = vadd.f32 %v1511, %v1679
    %1681 = vmatmul.bf16.gmra.mxu0 %v864
    %v1682 = vpop.f32.mrf.mxu0
    %v1683 = vadd.f32 %v1514, %v1682
    %v1684 = vpop.f32.mrf.mxu0
    %v1685 = vadd.f32 %v1516, %v1684
    %1686 = vmatmul.bf16.gmra.mxu0 %v868
    %v1687 = vpop.f32.mrf.mxu0
    %v1688 = vadd.f32 %v1519, %v1687
    %v1689 = vpop.f32.mrf.mxu0
    %v1690 = vadd.f32 %v1521, %v1689
    %1691 = vmatmul.bf16.gmra.mxu0 %v872
    %v1692 = vpop.f32.mrf.mxu0
    %v1693 = vadd.f32 %v1524, %v1692
    %v1694 = vpop.f32.mrf.mxu0
    %v1695 = vadd.f32 %v1526, %v1694
    %1696 = vmatmul.bf16.gmra.mxu0 %v876
    %v1697 = vpop.f32.mrf.mxu0
    %v1698 = vadd.f32 %v1529, %v1697
    %v1699 = vpop.f32.mrf.mxu0
    %v1700 = vadd.f32 %v1531, %v1699
    %1701 = vmatmul.bf16.gmra.mxu0 %v880
    %v1702 = vpop.f32.mrf.mxu0
    %v1703 = vadd.f32 %v1534, %v1702
    %v1704 = vpop.f32.mrf.mxu0
    %v1705 = vadd.f32 %v1536, %v1704
    %1706 = vmatmul.bf16.gmra.mxu0 %v884
    %v1707 = vpop.f32.mrf.mxu0
    %v1708 = vadd.f32 %v1539, %v1707
    %v1709 = vpop.f32.mrf.mxu0
    %v1710 = vadd.f32 %v1541, %v1709
    %1711 = vmatmul.bf16.gmra.mxu0 %v888
    %v1712 = vpop.f32.mrf.mxu0
    %v1713 = vadd.f32 %v1544, %v1712
    %v1714 = vpop.f32.mrf.mxu0
    %v1715 = vadd.f32 %v1546, %v1714
    %1716 = vdwg.mxu0
    %1717 = vmatpush.bf16.msra.mxu0 %v1177
    %1718 = vmatpush.bf16.msra.mxu0 %v1176
    %1719 = vmatpush.bf16.msra.mxu0 %v1175
    %1720 = vmatpush.bf16.msra.mxu0 %v1174
    %1721 = vmatpush.bf16.msra.mxu0 %v1173
    %1722 = vmatpush.bf16.msra.mxu0 %v1172
    %1723 = vmatpush.bf16.msra.mxu0 %v1171
    %1724 = vmatpush.bf16.msra.mxu0 %v1170
    %1725 = vmatmul.bf16.gmra.mxu0 %v765
    %v1726 = vpop.f32.mrf.mxu0
    %v1727 = vadd.f32 %v1558, %v1726
    %v1728 = vpop.f32.mrf.mxu0
    %v1729 = vadd.f32 %v1560, %v1728
    %1730 = vmatmul.bf16.gmra.mxu0 %v769
    %v1731 = vpop.f32.mrf.mxu0
    %v1732 = vadd.f32 %v1563, %v1731
    %v1733 = vpop.f32.mrf.mxu0
    %v1734 = vadd.f32 %v1565, %v1733
    %1735 = vmatmul.bf16.gmra.mxu0 %v773
    %v1736 = vpop.f32.mrf.mxu0
    %v1737 = vadd.f32 %v1568, %v1736
    %v1738 = vpop.f32.mrf.mxu0
    %v1739 = vadd.f32 %v1570, %v1738
    %1740 = vmatmul.bf16.gmra.mxu0 %v777
    %v1741 = vpop.f32.mrf.mxu0
    %v1742 = vadd.f32 %v1573, %v1741
    %v1743 = vpop.f32.mrf.mxu0
    %v1744 = vadd.f32 %v1575, %v1743
    %1745 = vmatmul.bf16.gmra.mxu0 %v781
    %v1746 = vpop.f32.mrf.mxu0
    %v1747 = vadd.f32 %v1578, %v1746
    %v1748 = vpop.f32.mrf.mxu0
    %v1749 = vadd.f32 %v1580, %v1748
    %1750 = vmatmul.bf16.gmra.mxu0 %v785
    %v1751 = vpop.f32.mrf.mxu0
    %v1752 = vadd.f32 %v1583, %v1751
    %v1753 = vpop.f32.mrf.mxu0
    %v1754 = vadd.f32 %v1585, %v1753
    %1755 = vmatmul.bf16.gmra.mxu0 %v789
    %v1756 = vpop.f32.mrf.mxu0
    %v1757 = vadd.f32 %v1588, %v1756
    %v1758 = vpop.f32.mrf.mxu0
    %v1759 = vadd.f32 %v1590, %v1758
    %1760 = vmatmul.bf16.gmra.mxu0 %v793
    %v1761 = vpop.f32.mrf.mxu0
    %v1762 = vadd.f32 %v1593, %v1761
    %v1763 = vpop.f32.mrf.mxu0
    %v1764 = vadd.f32 %v1595, %v1763
    %1765 = vmatmul.bf16.gmra.mxu0 %v797
    %v1766 = vpop.f32.mrf.mxu0
    %v1767 = vadd.f32 %v1598, %v1766
    %v1768 = vpop.f32.mrf.mxu0
    %v1769 = vadd.f32 %v1600, %v1768
    %1770 = vmatmul.bf16.gmra.mxu0 %v801
    %v1771 = vpop.f32.mrf.mxu0
    %v1772 = vadd.f32 %v1603, %v1771
    %v1773 = vpop.f32.mrf.mxu0
    %v1774 = vadd.f32 %v1605, %v1773
    %1775 = vmatmul.bf16.gmra.mxu0 %v805
    %v1776 = vpop.f32.mrf.mxu0
    %v1777 = vadd.f32 %v1608, %v1776
    %v1778 = vpop.f32.mrf.mxu0
    %v1779 = vadd.f32 %v1610, %v1778
    %1780 = vmatmul.bf16.gmra.mxu0 %v809
    %v1781 = vpop.f32.mrf.mxu0
    %v1782 = vadd.f32 %v1613, %v1781
    %v1783 = vpop.f32.mrf.mxu0
    %v1784 = vadd.f32 %v1615, %v1783
    %1785 = vmatmul.bf16.gmra.mxu0 %v813
    %v1786 = vpop.f32.mrf.mxu0
    %v1787 = vadd.f32 %v1618, %v1786
    %v1788 = vpop.f32.mrf.mxu0
    %v1789 = vadd.f32 %v1620, %v1788
    %1790 = vmatmul.bf16.gmra.mxu0 %v817
    %v1791 = vpop.f32.mrf.mxu0
    %v1792 = vadd.f32 %v1623, %v1791
    %v1793 = vpop.f32.mrf.mxu0
    %v1794 = vadd.f32 %v1625, %v1793
    %1795 = vmatmul.bf16.gmra.mxu0 %v821
    %v1796 = vpop.f32.mrf.mxu0
    %v1797 = vadd.f32 %v1628, %v1796
    %v1798 = vpop.f32.mrf.mxu0
    %v1799 = vadd.f32 %v1630, %v1798
    %1800 = vmatmul.bf16.gmra.mxu0 %v825
    %v1801 = vpop.f32.mrf.mxu0
    %v1802 = vadd.f32 %v1633, %v1801
    %v1803 = vpop.f32.mrf.mxu0
    %v1804 = vadd.f32 %v1635, %v1803
    %1805 = vmatmul.bf16.gmra.mxu0 %v829
    %v1806 = vpop.f32.mrf.mxu0
    %v1807 = vadd.f32 %v1638, %v1806
    %v1808 = vpop.f32.mrf.mxu0
    %v1809 = vadd.f32 %v1640, %v1808
    %1810 = vmatmul.bf16.gmra.mxu0 %v833
    %v1811 = vpop.f32.mrf.mxu0
    %v1812 = vadd.f32 %v1643, %v1811
    %v1813 = vpop.f32.mrf.mxu0
    %v1814 = vadd.f32 %v1645, %v1813
    %1815 = vmatmul.bf16.gmra.mxu0 %v837
    %v1816 = vpop.f32.mrf.mxu0
    %v1817 = vadd.f32 %v1648, %v1816
    %v1818 = vpop.f32.mrf.mxu0
    %v1819 = vadd.f32 %v1650, %v1818
    %1820 = vmatmul.bf16.gmra.mxu0 %v841
    %v1821 = vpop.f32.mrf.mxu0
    %v1822 = vadd.f32 %v1653, %v1821
    %v1823 = vpop.f32.mrf.mxu0
    %v1824 = vadd.f32 %v1655, %v1823
    %1825 = vmatmul.bf16.gmra.mxu0 %v845
    %v1826 = vpop.f32.mrf.mxu0
    %v1827 = vadd.f32 %v1658, %v1826
    %v1828 = vpop.f32.mrf.mxu0
    %v1829 = vadd.f32 %v1660, %v1828
    %1830 = vmatmul.bf16.gmra.mxu0 %v849
    %v1831 = vpop.f32.mrf.mxu0
    %v1832 = vadd.f32 %v1663, %v1831
    %v1833 = vpop.f32.mrf.mxu0
    %v1834 = vadd.f32 %v1665, %v1833
    %1835 = vmatmul.bf16.gmra.mxu0 %v853
    %v1836 = vpop.f32.mrf.mxu0
    %v1837 = vadd.f32 %v1668, %v1836
    %v1838 = vpop.f32.mrf.mxu0
    %v1839 = vadd.f32 %v1670, %v1838
    %1840 = vmatmul.bf16.gmra.mxu0 %v857
    %v1841 = vpop.f32.mrf.mxu0
    %v1842 = vadd.f32 %v1673, %v1841
    %v1843 = vpop.f32.mrf.mxu0
    %v1844 = vadd.f32 %v1675, %v1843
    %1845 = vmatmul.bf16.gmra.mxu0 %v861
    %v1846 = vpop.f32.mrf.mxu0
    %v1847 = vadd.f32 %v1678, %v1846
    %v1848 = vpop.f32.mrf.mxu0
    %v1849 = vadd.f32 %v1680, %v1848
    %1850 = vmatmul.bf16.gmra.mxu0 %v865
    %v1851 = vpop.f32.mrf.mxu0
    %v1852 = vadd.f32 %v1683, %v1851
    %v1853 = vpop.f32.mrf.mxu0
    %v1854 = vadd.f32 %v1685, %v1853
    %1855 = vmatmul.bf16.gmra.mxu0 %v869
    %v1856 = vpop.f32.mrf.mxu0
    %v1857 = vadd.f32 %v1688, %v1856
    %v1858 = vpop.f32.mrf.mxu0
    %v1859 = vadd.f32 %v1690, %v1858
    %1860 = vmatmul.bf16.gmra.mxu0 %v873
    %v1861 = vpop.f32.mrf.mxu0
    %v1862 = vadd.f32 %v1693, %v1861
    %v1863 = vpop.f32.mrf.mxu0
    %v1864 = vadd.f32 %v1695, %v1863
    %1865 = vmatmul.bf16.gmra.mxu0 %v877
    %v1866 = vpop.f32.mrf.mxu0
    %v1867 = vadd.f32 %v1698, %v1866
    %v1868 = vpop.f32.mrf.mxu0
    %v1869 = vadd.f32 %v1700, %v1868
    %1870 = vmatmul.bf16.gmra.mxu0 %v881
    %v1871 = vpop.f32.mrf.mxu0
    %v1872 = vadd.f32 %v1703, %v1871
    %v1873 = vpop.f32.mrf.mxu0
    %v1874 = vadd.f32 %v1705, %v1873
    %1875 = vmatmul.bf16.gmra.mxu0 %v885
    %v1876 = vpop.f32.mrf.mxu0
    %v1877 = vadd.f32 %v1708, %v1876
    %v1878 = vpop.f32.mrf.mxu0
    %v1879 = vadd.f32 %v1710, %v1878
    %1880 = vmatmul.bf16.gmra.mxu0 %v889
    %v1881 = vpop.f32.mrf.mxu0
    %v1882 = vadd.f32 %v1713, %v1881
    %v1883 = vpop.f32.mrf.mxu0
    %v1884 = vadd.f32 %v1715, %v1883
    %1885 = vdwg.mxu0
    %1887 = vset.pattern.permute.xlu0 0
    %1888 = vperm.xlu0 %1887, %v186
    %v1889 = vpop.permute.xlu0 %1888
    %1892 = vset.pattern.permute.xlu0 0
    %1893 = vperm.xlu0 %1892, %v187
    %v1894 = vpop.permute.xlu0 %1893
    %1897 = vset.pattern.permute.xlu0 0
    %1898 = vperm.xlu0 %1897, %v188
    %v1899 = vpop.permute.xlu0 %1898
    %1902 = vset.pattern.permute.xlu0 0
    %1903 = vperm.xlu0 %1902, %v189
    %v1904 = vpop.permute.xlu0 %1903
    %1907 = vset.pattern.permute.xlu0 0
    %1908 = vperm.xlu0 %1907, %v190
    %v1909 = vpop.permute.xlu0 %1908
    %1912 = vset.pattern.permute.xlu0 0
    %1913 = vperm.xlu0 %1912, %v191
    %v1914 = vpop.permute.xlu0 %1913
    %1917 = vset.pattern.permute.xlu0 0
    %1918 = vperm.xlu0 %1917, %v192
    %v1919 = vpop.permute.xlu0 %1918
    %1922 = vset.pattern.permute.xlu0 0
    %1923 = vperm.xlu0 %1922, %v193
    %v1924 = vpop.permute.xlu0 %1923
    %1927 = vset.pattern.permute.xlu0 0
    %1928 = vperm.xlu0 %1927, %v194
    %v1929 = vpop.permute.xlu0 %1928
    %1932 = vset.pattern.permute.xlu0 0
    %1933 = vperm.xlu0 %1932, %v195
    %v1934 = vpop.permute.xlu0 %1933
    %1937 = vset.pattern.permute.xlu0 0
    %1938 = vperm.xlu0 %1937, %v196
    %v1939 = vpop.permute.xlu0 %1938
    %1942 = vset.pattern.permute.xlu0 0
    %1943 = vperm.xlu0 %1942, %v197
    %v1944 = vpop.permute.xlu0 %1943
    %1947 = vset.pattern.permute.xlu0 0
    %1948 = vperm.xlu0 %1947, %v198
    %v1949 = vpop.permute.xlu0 %1948
    %1952 = vset.pattern.permute.xlu0 0
    %1953 = vperm.xlu0 %1952, %v199
    %v1954 = vpop.permute.xlu0 %1953
    %1957 = vset.pattern.permute.xlu0 0
    %1958 = vperm.xlu0 %1957, %v200
    %v1959 = vpop.permute.xlu0 %1958
    %1962 = vset.pattern.permute.xlu0 0
    %1963 = vperm.xlu0 %1962, %v201
    %v1964 = vpop.permute.xlu0 %1963
    %1967 = vset.pattern.permute.xlu0 0
    %1968 = vperm.xlu0 %1967, %v202
    %v1969 = vpop.permute.xlu0 %1968
    %1972 = vset.pattern.permute.xlu0 0
    %1973 = vperm.xlu0 %1972, %v203
    %v1974 = vpop.permute.xlu0 %1973
    %1977 = vset.pattern.permute.xlu0 0
    %1978 = vperm.xlu0 %1977, %v204
    %v1979 = vpop.permute.xlu0 %1978
    %1982 = vset.pattern.permute.xlu0 0
    %1983 = vperm.xlu0 %1982, %v205
    %v1984 = vpop.permute.xlu0 %1983
    %1987 = vset.pattern.permute.xlu0 0
    %1988 = vperm.xlu0 %1987, %v206
    %v1989 = vpop.permute.xlu0 %1988
    %1992 = vset.pattern.permute.xlu0 0
    %1993 = vperm.xlu0 %1992, %v207
    %v1994 = vpop.permute.xlu0 %1993
    %1997 = vset.pattern.permute.xlu0 0
    %1998 = vperm.xlu0 %1997, %v208
    %v1999 = vpop.permute.xlu0 %1998
    %2002 = vset.pattern.permute.xlu0 0
    %2003 = vperm.xlu0 %2002, %v209
    %v2004 = vpop.permute.xlu0 %2003
    %2007 = vset.pattern.permute.xlu0 0
    %2008 = vperm.xlu0 %2007, %v210
    %v2009 = vpop.permute.xlu0 %2008
    %2012 = vset.pattern.permute.xlu0 0
    %2013 = vperm.xlu0 %2012, %v211
    %v2014 = vpop.permute.xlu0 %2013
    %2017 = vset.pattern.permute.xlu0 0
    %2018 = vperm.xlu0 %2017, %v212
    %v2019 = vpop.permute.xlu0 %2018
    %2022 = vset.pattern.permute.xlu0 0
    %2023 = vperm.xlu0 %2022, %v213
    %v2024 = vpop.permute.xlu0 %2023
    %2027 = vset.pattern.permute.xlu0 0
    %2028 = vperm.xlu0 %2027, %v214
    %v2029 = vpop.permute.xlu0 %2028
    %2032 = vset.pattern.permute.xlu0 0
    %2033 = vperm.xlu0 %2032, %v215
    %v2034 = vpop.permute.xlu0 %2033
    %2037 = vset.pattern.permute.xlu0 0
    %2038 = vperm.xlu0 %2037, %v216
    %v2039 = vpop.permute.xlu0 %2038
    %2042 = vset.pattern.permute.xlu0 0
    %2043 = vperm.xlu0 %2042, %v217
    %v2044 = vpop.permute.xlu0 %2043
    %2047 = vset.pattern.permute.xlu0 0
    %2048 = vperm.xlu0 %2047, %v218
    %v2049 = vpop.permute.xlu0 %2048
    %2052 = vset.pattern.permute.xlu0 0
    %2053 = vperm.xlu0 %2052, %v219
    %v2054 = vpop.permute.xlu0 %2053
    %2057 = vset.pattern.permute.xlu0 0
    %2058 = vperm.xlu0 %2057, %v220
    %v2059 = vpop.permute.xlu0 %2058
    %2062 = vset.pattern.permute.xlu0 0
    %2063 = vperm.xlu0 %2062, %v221
    %v2064 = vpop.permute.xlu0 %2063
    %2067 = vset.pattern.permute.xlu0 0
    %2068 = vperm.xlu0 %2067, %v222
    %v2069 = vpop.permute.xlu0 %2068
    %2072 = vset.pattern.permute.xlu0 0
    %2073 = vperm.xlu0 %2072, %v223
    %v2074 = vpop.permute.xlu0 %2073
    %2077 = vset.pattern.permute.xlu0 0
    %2078 = vperm.xlu0 %2077, %v224
    %v2079 = vpop.permute.xlu0 %2078
    %2082 = vset.pattern.permute.xlu0 0
    %2083 = vperm.xlu0 %2082, %v225
    %v2084 = vpop.permute.xlu0 %2083
    %2087 = vset.pattern.permute.xlu0 0
    %2088 = vperm.xlu0 %2087, %v226
    %v2089 = vpop.permute.xlu0 %2088
    %2092 = vset.pattern.permute.xlu0 0
    %2093 = vperm.xlu0 %2092, %v227
    %v2094 = vpop.permute.xlu0 %2093
    %2097 = vset.pattern.permute.xlu0 0
    %2098 = vperm.xlu0 %2097, %v228
    %v2099 = vpop.permute.xlu0 %2098
    %2102 = vset.pattern.permute.xlu0 0
    %2103 = vperm.xlu0 %2102, %v229
    %v2104 = vpop.permute.xlu0 %2103
    %2107 = vset.pattern.permute.xlu0 0
    %2108 = vperm.xlu0 %2107, %v230
    %v2109 = vpop.permute.xlu0 %2108
    %2112 = vset.pattern.permute.xlu0 0
    %2113 = vperm.xlu0 %2112, %v231
    %v2114 = vpop.permute.xlu0 %2113
    %2117 = vset.pattern.permute.xlu0 0
    %2118 = vperm.xlu0 %2117, %v232
    %v2119 = vpop.permute.xlu0 %2118
    %2122 = vset.pattern.permute.xlu0 0
    %2123 = vperm.xlu0 %2122, %v233
    %v2124 = vpop.permute.xlu0 %2123
    %2127 = vset.pattern.permute.xlu0 0
    %2128 = vperm.xlu0 %2127, %v234
    %v2129 = vpop.permute.xlu0 %2128
    %2132 = vset.pattern.permute.xlu0 0
    %2133 = vperm.xlu0 %2132, %v235
    %v2134 = vpop.permute.xlu0 %2133
    %2137 = vset.pattern.permute.xlu0 0
    %2138 = vperm.xlu0 %2137, %v236
    %v2139 = vpop.permute.xlu0 %2138
    %2142 = vset.pattern.permute.xlu0 0
    %2143 = vperm.xlu0 %2142, %v237
    %v2144 = vpop.permute.xlu0 %2143
    %2147 = vset.pattern.permute.xlu0 0
    %2148 = vperm.xlu0 %2147, %v238
    %v2149 = vpop.permute.xlu0 %2148
    %2152 = vset.pattern.permute.xlu0 0
    %2153 = vperm.xlu0 %2152, %v239
    %v2154 = vpop.permute.xlu0 %2153
    %2157 = vset.pattern.permute.xlu0 0
    %2158 = vperm.xlu0 %2157, %v240
    %v2159 = vpop.permute.xlu0 %2158
    %2162 = vset.pattern.permute.xlu0 0
    %2163 = vperm.xlu0 %2162, %v241
    %v2164 = vpop.permute.xlu0 %2163
    %2167 = vset.pattern.permute.xlu0 0
    %2168 = vperm.xlu0 %2167, %v242
    %v2169 = vpop.permute.xlu0 %2168
    %2172 = vset.pattern.permute.xlu0 0
    %2173 = vperm.xlu0 %2172, %v243
    %v2174 = vpop.permute.xlu0 %2173
    %2177 = vset.pattern.permute.xlu0 0
    %2178 = vperm.xlu0 %2177, %v244
    %v2179 = vpop.permute.xlu0 %2178
    %2182 = vset.pattern.permute.xlu0 0
    %2183 = vperm.xlu0 %2182, %v245
    %v2184 = vpop.permute.xlu0 %2183
    %2187 = vset.pattern.permute.xlu0 0
    %2188 = vperm.xlu0 %2187, %v246
    %v2189 = vpop.permute.xlu0 %2188
    %2192 = vset.pattern.permute.xlu0 0
    %2193 = vperm.xlu0 %2192, %v247
    %v2194 = vpop.permute.xlu0 %2193
    %2197 = vset.pattern.permute.xlu0 0
    %2198 = vperm.xlu0 %2197, %v248
    %v2199 = vpop.permute.xlu0 %2198
    %2202 = vset.pattern.permute.xlu0 0
    %2203 = vperm.xlu0 %2202, %v249
    %v2204 = vpop.permute.xlu0 %2203
    %v2206 = vmul.f32 %v1889, %v1727
    %v2207 = vmul.f32 %v1894, %v1729
    %v2208 = vmul.f32 %v1899, %v1732
    %v2209 = vmul.f32 %v1904, %v1734
    %v2210 = vmul.f32 %v1909, %v1737
    %v2211 = vmul.f32 %v1914, %v1739
    %v2212 = vmul.f32 %v1919, %v1742
    %v2213 = vmul.f32 %v1924, %v1744
    %v2214 = vmul.f32 %v1929, %v1747
    %v2215 = vmul.f32 %v1934, %v1749
    %v2216 = vmul.f32 %v1939, %v1752
    %v2217 = vmul.f32 %v1944, %v1754
    %v2218 = vmul.f32 %v1949, %v1757
    %v2219 = vmul.f32 %v1954, %v1759
    %v2220 = vmul.f32 %v1959, %v1762
    %v2221 = vmul.f32 %v1964, %v1764
    %v2222 = vmul.f32 %v1969, %v1767
    %v2223 = vmul.f32 %v1974, %v1769
    %v2224 = vmul.f32 %v1979, %v1772
    %v2225 = vmul.f32 %v1984, %v1774
    %v2226 = vmul.f32 %v1989, %v1777
    %v2227 = vmul.f32 %v1994, %v1779
    %v2228 = vmul.f32 %v1999, %v1782
    %v2229 = vmul.f32 %v2004, %v1784
    %v2230 = vmul.f32 %v2009, %v1787
    %v2231 = vmul.f32 %v2014, %v1789
    %v2232 = vmul.f32 %v2019, %v1792
    %v2233 = vmul.f32 %v2024, %v1794
    %v2234 = vmul.f32 %v2029, %v1797
    %v2235 = vmul.f32 %v2034, %v1799
    %v2236 = vmul.f32 %v2039, %v1802
    %v2237 = vmul.f32 %v2044, %v1804
    %v2238 = vmul.f32 %v2049, %v1807
    %v2239 = vmul.f32 %v2054, %v1809
    %v2240 = vmul.f32 %v2059, %v1812
    %v2241 = vmul.f32 %v2064, %v1814
    %v2242 = vmul.f32 %v2069, %v1817
    %v2243 = vmul.f32 %v2074, %v1819
    %v2244 = vmul.f32 %v2079, %v1822
    %v2245 = vmul.f32 %v2084, %v1824
    %v2246 = vmul.f32 %v2089, %v1827
    %v2247 = vmul.f32 %v2094, %v1829
    %v2248 = vmul.f32 %v2099, %v1832
    %v2249 = vmul.f32 %v2104, %v1834
    %v2250 = vmul.f32 %v2109, %v1837
    %v2251 = vmul.f32 %v2114, %v1839
    %v2252 = vmul.f32 %v2119, %v1842
    %v2253 = vmul.f32 %v2124, %v1844
    %v2254 = vmul.f32 %v2129, %v1847
    %v2255 = vmul.f32 %v2134, %v1849
    %v2256 = vmul.f32 %v2139, %v1852
    %v2257 = vmul.f32 %v2144, %v1854
    %v2258 = vmul.f32 %v2149, %v1857
    %v2259 = vmul.f32 %v2154, %v1859
    %v2260 = vmul.f32 %v2159, %v1862
    %v2261 = vmul.f32 %v2164, %v1864
    %v2262 = vmul.f32 %v2169, %v1867
    %v2263 = vmul.f32 %v2174, %v1869
    %v2264 = vmul.f32 %v2179, %v1872
    %v2265 = vmul.f32 %v2184, %v1874
    %v2266 = vmul.f32 %v2189, %v1877
    %v2267 = vmul.f32 %v2194, %v1879
    %v2268 = vmul.f32 %v2199, %v1882
    %v2269 = vmul.f32 %v2204, %v1884
    %v2270 = vld [vmem:[%s3] sm:$0x1]
    %v2272 = vperm.slane %v2270, 0
    %v2274 = vadd.f32 %v2206, %v2272
    %v2275 = vadd.f32 %v2207, %v2272
    %v2276 = vadd.f32 %v2208, %v2272
    %v2277 = vadd.f32 %v2209, %v2272
    %v2278 = vadd.f32 %v2210, %v2272
    %v2279 = vadd.f32 %v2211, %v2272
    %v2280 = vadd.f32 %v2212, %v2272
    %v2281 = vadd.f32 %v2213, %v2272
    %v2282 = vadd.f32 %v2214, %v2272
    %v2283 = vadd.f32 %v2215, %v2272
    %v2284 = vadd.f32 %v2216, %v2272
    %v2285 = vadd.f32 %v2217, %v2272
    %v2286 = vadd.f32 %v2218, %v2272
    %v2287 = vadd.f32 %v2219, %v2272
    %v2288 = vadd.f32 %v2220, %v2272
    %v2289 = vadd.f32 %v2221, %v2272
    %v2290 = vadd.f32 %v2222, %v2272
    %v2291 = vadd.f32 %v2223, %v2272
    %v2292 = vadd.f32 %v2224, %v2272
    %v2293 = vadd.f32 %v2225, %v2272
    %v2294 = vadd.f32 %v2226, %v2272
    %v2295 = vadd.f32 %v2227, %v2272
    %v2296 = vadd.f32 %v2228, %v2272
    %v2297 = vadd.f32 %v2229, %v2272
    %v2298 = vadd.f32 %v2230, %v2272
    %v2299 = vadd.f32 %v2231, %v2272
    %v2300 = vadd.f32 %v2232, %v2272
    %v2301 = vadd.f32 %v2233, %v2272
    %v2302 = vadd.f32 %v2234, %v2272
    %v2303 = vadd.f32 %v2235, %v2272
    %v2304 = vadd.f32 %v2236, %v2272
    %v2305 = vadd.f32 %v2237, %v2272
    %v2306 = vadd.f32 %v2238, %v2272
    %v2307 = vadd.f32 %v2239, %v2272
    %v2308 = vadd.f32 %v2240, %v2272
    %v2309 = vadd.f32 %v2241, %v2272
    %v2310 = vadd.f32 %v2242, %v2272
    %v2311 = vadd.f32 %v2243, %v2272
    %v2312 = vadd.f32 %v2244, %v2272
    %v2313 = vadd.f32 %v2245, %v2272
    %v2314 = vadd.f32 %v2246, %v2272
    %v2315 = vadd.f32 %v2247, %v2272
    %v2316 = vadd.f32 %v2248, %v2272
    %v2317 = vadd.f32 %v2249, %v2272
    %v2318 = vadd.f32 %v2250, %v2272
    %v2319 = vadd.f32 %v2251, %v2272
    %v2320 = vadd.f32 %v2252, %v2272
    %v2321 = vadd.f32 %v2253, %v2272
    %v2322 = vadd.f32 %v2254, %v2272
    %v2323 = vadd.f32 %v2255, %v2272
    %v2324 = vadd.f32 %v2256, %v2272
    %v2325 = vadd.f32 %v2257, %v2272
    %v2326 = vadd.f32 %v2258, %v2272
    %v2327 = vadd.f32 %v2259, %v2272
    %v2328 = vadd.f32 %v2260, %v2272
    %v2329 = vadd.f32 %v2261, %v2272
    %v2330 = vadd.f32 %v2262, %v2272
    %v2331 = vadd.f32 %v2263, %v2272
    %v2332 = vadd.f32 %v2264, %v2272
    %v2333 = vadd.f32 %v2265, %v2272
    %v2334 = vadd.f32 %v2266, %v2272
    %v2335 = vadd.f32 %v2267, %v2272
    %v2336 = vadd.f32 %v2268, %v2272
    %v2337 = vadd.f32 %v2269, %v2272
    %v2338 = vld [vmem:[%s4] sm:$0xff]
    %v2339 = vld [vmem:[%s4 + $0x8] sm:$0xff]
    %v2340 = vld [vmem:[%s4 + $0x10] sm:$0xff]
    %v2341 = vld [vmem:[%s4 + $0x18] sm:$0xff]
    %v2342 = vld [vmem:[%s5] sm:$0x1]
    %v2344 = vperm.slane %v2342, 0
    %vm2346 = vcmask 261120
    %v2348 = vsel %vm2346, %v2274, 0
    %v2351 = vsel %vm2346, %v2275, 0
    %v2354 = vsel %vm2346, %v2276, 0
    %v2357 = vsel %vm2346, %v2277, 0
    %v2360 = vsel %vm2346, %v2278, 0
    %v2363 = vsel %vm2346, %v2279, 0
    %v2366 = vsel %vm2346, %v2280, 0
    %v2369 = vsel %vm2346, %v2281, 0
    %v2372 = vsel %vm2346, %v2282, 0
    %v2375 = vsel %vm2346, %v2283, 0
    %v2378 = vsel %vm2346, %v2284, 0
    %v2381 = vsel %vm2346, %v2285, 0
    %v2384 = vsel %vm2346, %v2286, 0
    %v2387 = vsel %vm2346, %v2287, 0
    %v2390 = vsel %vm2346, %v2288, 0
    %v2393 = vsel %vm2346, %v2289, 0
    %v2396 = vsel %vm2346, %v2290, 0
    %v2399 = vsel %vm2346, %v2291, 0
    %v2402 = vsel %vm2346, %v2292, 0
    %v2405 = vsel %vm2346, %v2293, 0
    %v2408 = vsel %vm2346, %v2294, 0
    %v2411 = vsel %vm2346, %v2295, 0
    %v2414 = vsel %vm2346, %v2296, 0
    %v2417 = vsel %vm2346, %v2297, 0
    %v2420 = vsel %vm2346, %v2298, 0
    %v2423 = vsel %vm2346, %v2299, 0
    %v2426 = vsel %vm2346, %v2300, 0
    %v2429 = vsel %vm2346, %v2301, 0
    %v2432 = vsel %vm2346, %v2302, 0
    %v2435 = vsel %vm2346, %v2303, 0
    %v2438 = vsel %vm2346, %v2304, 0
    %v2441 = vsel %vm2346, %v2305, 0
    %v2444 = vsel %vm2346, %v2306, 0
    %v2447 = vsel %vm2346, %v2307, 0
    %v2450 = vsel %vm2346, %v2308, 0
    %v2453 = vsel %vm2346, %v2309, 0
    %v2456 = vsel %vm2346, %v2310, 0
    %v2459 = vsel %vm2346, %v2311, 0
    %v2462 = vsel %vm2346, %v2312, 0
    %v2465 = vsel %vm2346, %v2313, 0
    %v2468 = vsel %vm2346, %v2314, 0
    %v2471 = vsel %vm2346, %v2315, 0
    %v2474 = vsel %vm2346, %v2316, 0
    %v2477 = vsel %vm2346, %v2317, 0
    %v2480 = vsel %vm2346, %v2318, 0
    %v2483 = vsel %vm2346, %v2319, 0
    %v2486 = vsel %vm2346, %v2320, 0
    %v2489 = vsel %vm2346, %v2321, 0
    %v2492 = vsel %vm2346, %v2322, 0
    %v2495 = vsel %vm2346, %v2323, 0
    %v2498 = vsel %vm2346, %v2324, 0
    %v2501 = vsel %vm2346, %v2325, 0
    %v2504 = vsel %vm2346, %v2326, 0
    %v2507 = vsel %vm2346, %v2327, 0
    %v2510 = vsel %vm2346, %v2328, 0
    %v2513 = vsel %vm2346, %v2329, 0
    %v2516 = vsel %vm2346, %v2330, 0
    %v2519 = vsel %vm2346, %v2331, 0
    %v2522 = vsel %vm2346, %v2332, 0
    %v2525 = vsel %vm2346, %v2333, 0
    %v2528 = vsel %vm2346, %v2334, 0
    %v2531 = vsel %vm2346, %v2335, 0
    %v2534 = vsel %vm2346, %v2336, 0
    %v2537 = vsel %vm2346, %v2337, 0
    %2539 = vmatpush.msra.mxu0 0.0
    %2540 = vmatpush.msra.mxu0 0.0
    %2541 = vmatpush.msra.mxu0 0.0
    %2542 = vmatpush.msra.mxu0 0.0
    %2543 = vmatpush.msra.mxu0 0.0
    %2544 = vmatpush.msra.mxu0 0.0
    %2545 = vmatpush.msra.mxu0 0.0
    %2546 = vmatpush.msra.mxu0 0.0
    %2547 = vmatpush.msra.mxu0 0.0
    %2548 = vmatpush.msra.mxu0 0.0
    %2549 = vmatpush.msra.mxu0 0.0
    %2550 = vmatpush.msra.mxu0 0.0
    %2551 = vmatpush.msra.mxu0 %v2341
    %2552 = vmatpush.msra.mxu0 %v2340
    %2553 = vmatpush.msra.mxu0 %v2339
    %2554 = vmatpush.msra.mxu0 %v2338
    %2555 = vmatmul.f32.gmra.mxu0 %v2348
    %v2556 = vpop.f32.mrf.mxu0
    %v2557 = vadd.f32 %v2344, %v2556
    %2558 = vmatmul.f32.gmra.mxu0 %v2351
    %v2559 = vpop.f32.mrf.mxu0
    %v2560 = vadd.f32 %v2344, %v2559
    %2561 = vmatmul.f32.gmra.mxu0 %v2354
    %v2562 = vpop.f32.mrf.mxu0
    %v2563 = vadd.f32 %v2344, %v2562
    %2564 = vmatmul.f32.gmra.mxu0 %v2357
    %v2565 = vpop.f32.mrf.mxu0
    %v2566 = vadd.f32 %v2344, %v2565
    %2567 = vmatmul.f32.gmra.mxu0 %v2360
    %v2568 = vpop.f32.mrf.mxu0
    %v2569 = vadd.f32 %v2344, %v2568
    %2570 = vmatmul.f32.gmra.mxu0 %v2363
    %v2571 = vpop.f32.mrf.mxu0
    %v2572 = vadd.f32 %v2344, %v2571
    %2573 = vmatmul.f32.gmra.mxu0 %v2366
    %v2574 = vpop.f32.mrf.mxu0
    %v2575 = vadd.f32 %v2344, %v2574
    %2576 = vmatmul.f32.gmra.mxu0 %v2369
    %v2577 = vpop.f32.mrf.mxu0
    %v2578 = vadd.f32 %v2344, %v2577
    %2579 = vmatmul.f32.gmra.mxu0 %v2372
    %v2580 = vpop.f32.mrf.mxu0
    %v2581 = vadd.f32 %v2344, %v2580
    %2582 = vmatmul.f32.gmra.mxu0 %v2375
    %v2583 = vpop.f32.mrf.mxu0
    %v2584 = vadd.f32 %v2344, %v2583
    %2585 = vmatmul.f32.gmra.mxu0 %v2378
    %v2586 = vpop.f32.mrf.mxu0
    %v2587 = vadd.f32 %v2344, %v2586
    %2588 = vmatmul.f32.gmra.mxu0 %v2381
    %v2589 = vpop.f32.mrf.mxu0
    %v2590 = vadd.f32 %v2344, %v2589
    %2591 = vmatmul.f32.gmra.mxu0 %v2384
    %v2592 = vpop.f32.mrf.mxu0
    %v2593 = vadd.f32 %v2344, %v2592
    %2594 = vmatmul.f32.gmra.mxu0 %v2387
    %v2595 = vpop.f32.mrf.mxu0
    %v2596 = vadd.f32 %v2344, %v2595
    %2597 = vmatmul.f32.gmra.mxu0 %v2390
    %v2598 = vpop.f32.mrf.mxu0
    %v2599 = vadd.f32 %v2344, %v2598
    %2600 = vmatmul.f32.gmra.mxu0 %v2393
    %v2601 = vpop.f32.mrf.mxu0
    %v2602 = vadd.f32 %v2344, %v2601
    %2603 = vmatmul.f32.gmra.mxu0 %v2396
    %v2604 = vpop.f32.mrf.mxu0
    %v2605 = vadd.f32 %v2344, %v2604
    %2606 = vmatmul.f32.gmra.mxu0 %v2399
    %v2607 = vpop.f32.mrf.mxu0
    %v2608 = vadd.f32 %v2344, %v2607
    %2609 = vmatmul.f32.gmra.mxu0 %v2402
    %v2610 = vpop.f32.mrf.mxu0
    %v2611 = vadd.f32 %v2344, %v2610
    %2612 = vmatmul.f32.gmra.mxu0 %v2405
    %v2613 = vpop.f32.mrf.mxu0
    %v2614 = vadd.f32 %v2344, %v2613
    %2615 = vmatmul.f32.gmra.mxu0 %v2408
    %v2616 = vpop.f32.mrf.mxu0
    %v2617 = vadd.f32 %v2344, %v2616
    %2618 = vmatmul.f32.gmra.mxu0 %v2411
    %v2619 = vpop.f32.mrf.mxu0
    %v2620 = vadd.f32 %v2344, %v2619
    %2621 = vmatmul.f32.gmra.mxu0 %v2414
    %v2622 = vpop.f32.mrf.mxu0
    %v2623 = vadd.f32 %v2344, %v2622
    %2624 = vmatmul.f32.gmra.mxu0 %v2417
    %v2625 = vpop.f32.mrf.mxu0
    %v2626 = vadd.f32 %v2344, %v2625
    %2627 = vmatmul.f32.gmra.mxu0 %v2420
    %v2628 = vpop.f32.mrf.mxu0
    %v2629 = vadd.f32 %v2344, %v2628
    %2630 = vmatmul.f32.gmra.mxu0 %v2423
    %v2631 = vpop.f32.mrf.mxu0
    %v2632 = vadd.f32 %v2344, %v2631
    %2633 = vmatmul.f32.gmra.mxu0 %v2426
    %v2634 = vpop.f32.mrf.mxu0
    %v2635 = vadd.f32 %v2344, %v2634
    %2636 = vmatmul.f32.gmra.mxu0 %v2429
    %v2637 = vpop.f32.mrf.mxu0
    %v2638 = vadd.f32 %v2344, %v2637
    %2639 = vmatmul.f32.gmra.mxu0 %v2432
    %v2640 = vpop.f32.mrf.mxu0
    %v2641 = vadd.f32 %v2344, %v2640
    %2642 = vmatmul.f32.gmra.mxu0 %v2435
    %v2643 = vpop.f32.mrf.mxu0
    %v2644 = vadd.f32 %v2344, %v2643
    %2645 = vmatmul.f32.gmra.mxu0 %v2438
    %v2646 = vpop.f32.mrf.mxu0
    %v2647 = vadd.f32 %v2344, %v2646
    %2648 = vmatmul.f32.gmra.mxu0 %v2441
    %v2649 = vpop.f32.mrf.mxu0
    %v2650 = vadd.f32 %v2344, %v2649
    %2651 = vmatmul.f32.gmra.mxu0 %v2444
    %v2652 = vpop.f32.mrf.mxu0
    %v2653 = vadd.f32 %v2344, %v2652
    %2654 = vmatmul.f32.gmra.mxu0 %v2447
    %v2655 = vpop.f32.mrf.mxu0
    %v2656 = vadd.f32 %v2344, %v2655
    %2657 = vmatmul.f32.gmra.mxu0 %v2450
    %v2658 = vpop.f32.mrf.mxu0
    %v2659 = vadd.f32 %v2344, %v2658
    %2660 = vmatmul.f32.gmra.mxu0 %v2453
    %v2661 = vpop.f32.mrf.mxu0
    %v2662 = vadd.f32 %v2344, %v2661
    %2663 = vmatmul.f32.gmra.mxu0 %v2456
    %v2664 = vpop.f32.mrf.mxu0
    %v2665 = vadd.f32 %v2344, %v2664
    %2666 = vmatmul.f32.gmra.mxu0 %v2459
    %v2667 = vpop.f32.mrf.mxu0
    %v2668 = vadd.f32 %v2344, %v2667
    %2669 = vmatmul.f32.gmra.mxu0 %v2462
    %v2670 = vpop.f32.mrf.mxu0
    %v2671 = vadd.f32 %v2344, %v2670
    %2672 = vmatmul.f32.gmra.mxu0 %v2465
    %v2673 = vpop.f32.mrf.mxu0
    %v2674 = vadd.f32 %v2344, %v2673
    %2675 = vmatmul.f32.gmra.mxu0 %v2468
    %v2676 = vpop.f32.mrf.mxu0
    %v2677 = vadd.f32 %v2344, %v2676
    %2678 = vmatmul.f32.gmra.mxu0 %v2471
    %v2679 = vpop.f32.mrf.mxu0
    %v2680 = vadd.f32 %v2344, %v2679
    %2681 = vmatmul.f32.gmra.mxu0 %v2474
    %v2682 = vpop.f32.mrf.mxu0
    %v2683 = vadd.f32 %v2344, %v2682
    %2684 = vmatmul.f32.gmra.mxu0 %v2477
    %v2685 = vpop.f32.mrf.mxu0
    %v2686 = vadd.f32 %v2344, %v2685
    %2687 = vmatmul.f32.gmra.mxu0 %v2480
    %v2688 = vpop.f32.mrf.mxu0
    %v2689 = vadd.f32 %v2344, %v2688
    %2690 = vmatmul.f32.gmra.mxu0 %v2483
    %v2691 = vpop.f32.mrf.mxu0
    %v2692 = vadd.f32 %v2344, %v2691
    %2693 = vmatmul.f32.gmra.mxu0 %v2486
    %v2694 = vpop.f32.mrf.mxu0
    %v2695 = vadd.f32 %v2344, %v2694
    %2696 = vmatmul.f32.gmra.mxu0 %v2489
    %v2697 = vpop.f32.mrf.mxu0
    %v2698 = vadd.f32 %v2344, %v2697
    %2699 = vmatmul.f32.gmra.mxu0 %v2492
    %v2700 = vpop.f32.mrf.mxu0
    %v2701 = vadd.f32 %v2344, %v2700
    %2702 = vmatmul.f32.gmra.mxu0 %v2495
    %v2703 = vpop.f32.mrf.mxu0
    %v2704 = vadd.f32 %v2344, %v2703
    %2705 = vmatmul.f32.gmra.mxu0 %v2498
    %v2706 = vpop.f32.mrf.mxu0
    %v2707 = vadd.f32 %v2344, %v2706
    %2708 = vmatmul.f32.gmra.mxu0 %v2501
    %v2709 = vpop.f32.mrf.mxu0
    %v2710 = vadd.f32 %v2344, %v2709
    %2711 = vmatmul.f32.gmra.mxu0 %v2504
    %v2712 = vpop.f32.mrf.mxu0
    %v2713 = vadd.f32 %v2344, %v2712
    %2714 = vmatmul.f32.gmra.mxu0 %v2507
    %v2715 = vpop.f32.mrf.mxu0
    %v2716 = vadd.f32 %v2344, %v2715
    %2717 = vmatmul.f32.gmra.mxu0 %v2510
    %v2718 = vpop.f32.mrf.mxu0
    %v2719 = vadd.f32 %v2344, %v2718
    %2720 = vmatmul.f32.gmra.mxu0 %v2513
    %v2721 = vpop.f32.mrf.mxu0
    %v2722 = vadd.f32 %v2344, %v2721
    %2723 = vmatmul.f32.gmra.mxu0 %v2516
    %v2724 = vpop.f32.mrf.mxu0
    %v2725 = vadd.f32 %v2344, %v2724
    %2726 = vmatmul.f32.gmra.mxu0 %v2519
    %v2727 = vpop.f32.mrf.mxu0
    %v2728 = vadd.f32 %v2344, %v2727
    %2729 = vmatmul.f32.gmra.mxu0 %v2522
    %v2730 = vpop.f32.mrf.mxu0
    %v2731 = vadd.f32 %v2344, %v2730
    %2732 = vmatmul.f32.gmra.mxu0 %v2525
    %v2733 = vpop.f32.mrf.mxu0
    %v2734 = vadd.f32 %v2344, %v2733
    %2735 = vmatmul.f32.gmra.mxu0 %v2528
    %v2736 = vpop.f32.mrf.mxu0
    %v2737 = vadd.f32 %v2344, %v2736
    %2738 = vmatmul.f32.gmra.mxu0 %v2531
    %v2739 = vpop.f32.mrf.mxu0
    %v2740 = vadd.f32 %v2344, %v2739
    %2741 = vmatmul.f32.gmra.mxu0 %v2534
    %v2742 = vpop.f32.mrf.mxu0
    %v2743 = vadd.f32 %v2344, %v2742
    %2744 = vmatmul.f32.gmra.mxu0 %v2537
    %v2745 = vpop.f32.mrf.mxu0
    %v2746 = vadd.f32 %v2344, %v2745
    %2747 = vdwg.mxu0
    %v2748 = vtanh.pop %v2557
    %v2749 = vtanh.pop %v2560
    %v2750 = vtanh.pop %v2563
    %v2751 = vtanh.pop %v2566
    %v2752 = vtanh.pop %v2569
    %v2753 = vtanh.pop %v2572
    %v2754 = vtanh.pop %v2575
    %v2755 = vtanh.pop %v2578
    %v2756 = vtanh.pop %v2581
    %v2757 = vtanh.pop %v2584
    %v2758 = vtanh.pop %v2587
    %v2759 = vtanh.pop %v2590
    %v2760 = vtanh.pop %v2593
    %v2761 = vtanh.pop %v2596
    %v2762 = vtanh.pop %v2599
    %v2763 = vtanh.pop %v2602
    %v2764 = vtanh.pop %v2605
    %v2765 = vtanh.pop %v2608
    %v2766 = vtanh.pop %v2611
    %v2767 = vtanh.pop %v2614
    %v2768 = vtanh.pop %v2617
    %v2769 = vtanh.pop %v2620
    %v2770 = vtanh.pop %v2623
    %v2771 = vtanh.pop %v2626
    %v2772 = vtanh.pop %v2629
    %v2773 = vtanh.pop %v2632
    %v2774 = vtanh.pop %v2635
    %v2775 = vtanh.pop %v2638
    %v2776 = vtanh.pop %v2641
    %v2777 = vtanh.pop %v2644
    %v2778 = vtanh.pop %v2647
    %v2779 = vtanh.pop %v2650
    %v2780 = vtanh.pop %v2653
    %v2781 = vtanh.pop %v2656
    %v2782 = vtanh.pop %v2659
    %v2783 = vtanh.pop %v2662
    %v2784 = vtanh.pop %v2665
    %v2785 = vtanh.pop %v2668
    %v2786 = vtanh.pop %v2671
    %v2787 = vtanh.pop %v2674
    %v2788 = vtanh.pop %v2677
    %v2789 = vtanh.pop %v2680
    %v2790 = vtanh.pop %v2683
    %v2791 = vtanh.pop %v2686
    %v2792 = vtanh.pop %v2689
    %v2793 = vtanh.pop %v2692
    %v2794 = vtanh.pop %v2695
    %v2795 = vtanh.pop %v2698
    %v2796 = vtanh.pop %v2701
    %v2797 = vtanh.pop %v2704
    %v2798 = vtanh.pop %v2707
    %v2799 = vtanh.pop %v2710
    %v2800 = vtanh.pop %v2713
    %v2801 = vtanh.pop %v2716
    %v2802 = vtanh.pop %v2719
    %v2803 = vtanh.pop %v2722
    %v2804 = vtanh.pop %v2725
    %v2805 = vtanh.pop %v2728
    %v2806 = vtanh.pop %v2731
    %v2807 = vtanh.pop %v2734
    %v2808 = vtanh.pop %v2737
    %v2809 = vtanh.pop %v2740
    %v2810 = vtanh.pop %v2743
    %v2811 = vtanh.pop %v2746
    %v2812 = vld [vmem:[%s6] sm:$0xff]
    %v2813 = vld [vmem:[%s6 + $0x8] sm:$0xff]
    %v2814 = vld [vmem:[%s7] sm:$0x1]
    %v2816 = vperm.slane %v2814, 0
    %vm2818 = vcmask 130048
    %v2820 = vsel %vm2818, %v2748, 0
    %v2823 = vsel %vm2818, %v2749, 0
    %v2826 = vsel %vm2818, %v2750, 0
    %v2829 = vsel %vm2818, %v2751, 0
    %v2832 = vsel %vm2818, %v2752, 0
    %v2835 = vsel %vm2818, %v2753, 0
    %v2838 = vsel %vm2818, %v2754, 0
    %v2841 = vsel %vm2818, %v2755, 0
    %v2844 = vsel %vm2818, %v2756, 0
    %v2847 = vsel %vm2818, %v2757, 0
    %v2850 = vsel %vm2818, %v2758, 0
    %v2853 = vsel %vm2818, %v2759, 0
    %v2856 = vsel %vm2818, %v2760, 0
    %v2859 = vsel %vm2818, %v2761, 0
    %v2862 = vsel %vm2818, %v2762, 0
    %v2865 = vsel %vm2818, %v2763, 0
    %v2868 = vsel %vm2818, %v2764, 0
    %v2871 = vsel %vm2818, %v2765, 0
    %v2874 = vsel %vm2818, %v2766, 0
    %v2877 = vsel %vm2818, %v2767, 0
    %v2880 = vsel %vm2818, %v2768, 0
    %v2883 = vsel %vm2818, %v2769, 0
    %v2886 = vsel %vm2818, %v2770, 0
    %v2889 = vsel %vm2818, %v2771, 0
    %v2892 = vsel %vm2818, %v2772, 0
    %v2895 = vsel %vm2818, %v2773, 0
    %v2898 = vsel %vm2818, %v2774, 0
    %v2901 = vsel %vm2818, %v2775, 0
    %v2904 = vsel %vm2818, %v2776, 0
    %v2907 = vsel %vm2818, %v2777, 0
    %v2910 = vsel %vm2818, %v2778, 0
    %v2913 = vsel %vm2818, %v2779, 0
    %v2916 = vsel %vm2818, %v2780, 0
    %v2919 = vsel %vm2818, %v2781, 0
    %v2922 = vsel %vm2818, %v2782, 0
    %v2925 = vsel %vm2818, %v2783, 0
    %v2928 = vsel %vm2818, %v2784, 0
    %v2931 = vsel %vm2818, %v2785, 0
    %v2934 = vsel %vm2818, %v2786, 0
    %v2937 = vsel %vm2818, %v2787, 0
    %v2940 = vsel %vm2818, %v2788, 0
    %v2943 = vsel %vm2818, %v2789, 0
    %v2946 = vsel %vm2818, %v2790, 0
    %v2949 = vsel %vm2818, %v2791, 0
    %v2952 = vsel %vm2818, %v2792, 0
    %v2955 = vsel %vm2818, %v2793, 0
    %v2958 = vsel %vm2818, %v2794, 0
    %v2961 = vsel %vm2818, %v2795, 0
    %v2964 = vsel %vm2818, %v2796, 0
    %v2967 = vsel %vm2818, %v2797, 0
    %v2970 = vsel %vm2818, %v2798, 0
    %v2973 = vsel %vm2818, %v2799, 0
    %v2976 = vsel %vm2818, %v2800, 0
    %v2979 = vsel %vm2818, %v2801, 0
    %v2982 = vsel %vm2818, %v2802, 0
    %v2985 = vsel %vm2818, %v2803, 0
    %v2988 = vsel %vm2818, %v2804, 0
    %v2991 = vsel %vm2818, %v2805, 0
    %v2994 = vsel %vm2818, %v2806, 0
    %v2997 = vsel %vm2818, %v2807, 0
    %v3000 = vsel %vm2818, %v2808, 0
    %v3003 = vsel %vm2818, %v2809, 0
    %v3006 = vsel %vm2818, %v2810, 0
    %v3009 = vsel %vm2818, %v2811, 0
    %3011 = vmatpush.msra.mxu0 0.0
    %3012 = vmatpush.msra.mxu0 0.0
    %3013 = vmatpush.msra.mxu0 0.0
    %3014 = vmatpush.msra.mxu0 0.0
    %3015 = vmatpush.msra.mxu0 0.0
    %3016 = vmatpush.msra.mxu0 0.0
    %3017 = vmatpush.msra.mxu0 0.0
    %3018 = vmatpush.msra.mxu0 0.0
    %3019 = vmatpush.msra.mxu0 0.0
    %3020 = vmatpush.msra.mxu0 0.0
    %3021 = vmatpush.msra.mxu0 0.0
    %3022 = vmatpush.msra.mxu0 0.0
    %3023 = vmatpush.msra.mxu0 0.0
    %3024 = vmatpush.msra.mxu0 0.0
    %3025 = vmatpush.msra.mxu0 %v2813
    %3026 = vmatpush.msra.mxu0 %v2812
    %3027 = vmatmul.f32.gmra.mxu0 %v2820
    %v3028 = vpop.f32.mrf.mxu0
    %v3029 = vadd.f32 %v2816, %v3028
    %3030 = vmatmul.f32.gmra.mxu0 %v2823
    %v3031 = vpop.f32.mrf.mxu0
    %v3032 = vadd.f32 %v2816, %v3031
    %3033 = vmatmul.f32.gmra.mxu0 %v2826
    %v3034 = vpop.f32.mrf.mxu0
    %v3035 = vadd.f32 %v2816, %v3034
    %3036 = vmatmul.f32.gmra.mxu0 %v2829
    %v3037 = vpop.f32.mrf.mxu0
    %v3038 = vadd.f32 %v2816, %v3037
    %3039 = vmatmul.f32.gmra.mxu0 %v2832
    %v3040 = vpop.f32.mrf.mxu0
    %v3041 = vadd.f32 %v2816, %v3040
    %3042 = vmatmul.f32.gmra.mxu0 %v2835
    %v3043 = vpop.f32.mrf.mxu0
    %v3044 = vadd.f32 %v2816, %v3043
    %3045 = vmatmul.f32.gmra.mxu0 %v2838
    %v3046 = vpop.f32.mrf.mxu0
    %v3047 = vadd.f32 %v2816, %v3046
    %3048 = vmatmul.f32.gmra.mxu0 %v2841
    %v3049 = vpop.f32.mrf.mxu0
    %v3050 = vadd.f32 %v2816, %v3049
    %3051 = vmatmul.f32.gmra.mxu0 %v2844
    %v3052 = vpop.f32.mrf.mxu0
    %v3053 = vadd.f32 %v2816, %v3052
    %3054 = vmatmul.f32.gmra.mxu0 %v2847
    %v3055 = vpop.f32.mrf.mxu0
    %v3056 = vadd.f32 %v2816, %v3055
    %3057 = vmatmul.f32.gmra.mxu0 %v2850
    %v3058 = vpop.f32.mrf.mxu0
    %v3059 = vadd.f32 %v2816, %v3058
    %3060 = vmatmul.f32.gmra.mxu0 %v2853
    %v3061 = vpop.f32.mrf.mxu0
    %v3062 = vadd.f32 %v2816, %v3061
    %3063 = vmatmul.f32.gmra.mxu0 %v2856
    %v3064 = vpop.f32.mrf.mxu0
    %v3065 = vadd.f32 %v2816, %v3064
    %3066 = vmatmul.f32.gmra.mxu0 %v2859
    %v3067 = vpop.f32.mrf.mxu0
    %v3068 = vadd.f32 %v2816, %v3067
    %3069 = vmatmul.f32.gmra.mxu0 %v2862
    %v3070 = vpop.f32.mrf.mxu0
    %v3071 = vadd.f32 %v2816, %v3070
    %3072 = vmatmul.f32.gmra.mxu0 %v2865
    %v3073 = vpop.f32.mrf.mxu0
    %v3074 = vadd.f32 %v2816, %v3073
    %3075 = vmatmul.f32.gmra.mxu0 %v2868
    %v3076 = vpop.f32.mrf.mxu0
    %v3077 = vadd.f32 %v2816, %v3076
    %3078 = vmatmul.f32.gmra.mxu0 %v2871
    %v3079 = vpop.f32.mrf.mxu0
    %v3080 = vadd.f32 %v2816, %v3079
    %3081 = vmatmul.f32.gmra.mxu0 %v2874
    %v3082 = vpop.f32.mrf.mxu0
    %v3083 = vadd.f32 %v2816, %v3082
    %3084 = vmatmul.f32.gmra.mxu0 %v2877
    %v3085 = vpop.f32.mrf.mxu0
    %v3086 = vadd.f32 %v2816, %v3085
    %3087 = vmatmul.f32.gmra.mxu0 %v2880
    %v3088 = vpop.f32.mrf.mxu0
    %v3089 = vadd.f32 %v2816, %v3088
    %3090 = vmatmul.f32.gmra.mxu0 %v2883
    %v3091 = vpop.f32.mrf.mxu0
    %v3092 = vadd.f32 %v2816, %v3091
    %3093 = vmatmul.f32.gmra.mxu0 %v2886
    %v3094 = vpop.f32.mrf.mxu0
    %v3095 = vadd.f32 %v2816, %v3094
    %3096 = vmatmul.f32.gmra.mxu0 %v2889
    %v3097 = vpop.f32.mrf.mxu0
    %v3098 = vadd.f32 %v2816, %v3097
    %3099 = vmatmul.f32.gmra.mxu0 %v2892
    %v3100 = vpop.f32.mrf.mxu0
    %v3101 = vadd.f32 %v2816, %v3100
    %3102 = vmatmul.f32.gmra.mxu0 %v2895
    %v3103 = vpop.f32.mrf.mxu0
    %v3104 = vadd.f32 %v2816, %v3103
    %3105 = vmatmul.f32.gmra.mxu0 %v2898
    %v3106 = vpop.f32.mrf.mxu0
    %v3107 = vadd.f32 %v2816, %v3106
    %3108 = vmatmul.f32.gmra.mxu0 %v2901
    %v3109 = vpop.f32.mrf.mxu0
    %v3110 = vadd.f32 %v2816, %v3109
    %3111 = vmatmul.f32.gmra.mxu0 %v2904
    %v3112 = vpop.f32.mrf.mxu0
    %v3113 = vadd.f32 %v2816, %v3112
    %3114 = vmatmul.f32.gmra.mxu0 %v2907
    %v3115 = vpop.f32.mrf.mxu0
    %v3116 = vadd.f32 %v2816, %v3115
    %3117 = vmatmul.f32.gmra.mxu0 %v2910
    %v3118 = vpop.f32.mrf.mxu0
    %v3119 = vadd.f32 %v2816, %v3118
    %3120 = vmatmul.f32.gmra.mxu0 %v2913
    %v3121 = vpop.f32.mrf.mxu0
    %v3122 = vadd.f32 %v2816, %v3121
    %3123 = vmatmul.f32.gmra.mxu0 %v2916
    %v3124 = vpop.f32.mrf.mxu0
    %v3125 = vadd.f32 %v2816, %v3124
    %3126 = vmatmul.f32.gmra.mxu0 %v2919
    %v3127 = vpop.f32.mrf.mxu0
    %v3128 = vadd.f32 %v2816, %v3127
    %3129 = vmatmul.f32.gmra.mxu0 %v2922
    %v3130 = vpop.f32.mrf.mxu0
    %v3131 = vadd.f32 %v2816, %v3130
    %3132 = vmatmul.f32.gmra.mxu0 %v2925
    %v3133 = vpop.f32.mrf.mxu0
    %v3134 = vadd.f32 %v2816, %v3133
    %3135 = vmatmul.f32.gmra.mxu0 %v2928
    %v3136 = vpop.f32.mrf.mxu0
    %v3137 = vadd.f32 %v2816, %v3136
    %3138 = vmatmul.f32.gmra.mxu0 %v2931
    %v3139 = vpop.f32.mrf.mxu0
    %v3140 = vadd.f32 %v2816, %v3139
    %3141 = vmatmul.f32.gmra.mxu0 %v2934
    %v3142 = vpop.f32.mrf.mxu0
    %v3143 = vadd.f32 %v2816, %v3142
    %3144 = vmatmul.f32.gmra.mxu0 %v2937
    %v3145 = vpop.f32.mrf.mxu0
    %v3146 = vadd.f32 %v2816, %v3145
    %3147 = vmatmul.f32.gmra.mxu0 %v2940
    %v3148 = vpop.f32.mrf.mxu0
    %v3149 = vadd.f32 %v2816, %v3148
    %3150 = vmatmul.f32.gmra.mxu0 %v2943
    %v3151 = vpop.f32.mrf.mxu0
    %v3152 = vadd.f32 %v2816, %v3151
    %3153 = vmatmul.f32.gmra.mxu0 %v2946
    %v3154 = vpop.f32.mrf.mxu0
    %v3155 = vadd.f32 %v2816, %v3154
    %3156 = vmatmul.f32.gmra.mxu0 %v2949
    %v3157 = vpop.f32.mrf.mxu0
    %v3158 = vadd.f32 %v2816, %v3157
    %3159 = vmatmul.f32.gmra.mxu0 %v2952
    %v3160 = vpop.f32.mrf.mxu0
    %v3161 = vadd.f32 %v2816, %v3160
    %3162 = vmatmul.f32.gmra.mxu0 %v2955
    %v3163 = vpop.f32.mrf.mxu0
    %v3164 = vadd.f32 %v2816, %v3163
    %3165 = vmatmul.f32.gmra.mxu0 %v2958
    %v3166 = vpop.f32.mrf.mxu0
    %v3167 = vadd.f32 %v2816, %v3166
    %3168 = vmatmul.f32.gmra.mxu0 %v2961
    %v3169 = vpop.f32.mrf.mxu0
    %v3170 = vadd.f32 %v2816, %v3169
    %3171 = vmatmul.f32.gmra.mxu0 %v2964
    %v3172 = vpop.f32.mrf.mxu0
    %v3173 = vadd.f32 %v2816, %v3172
    %3174 = vmatmul.f32.gmra.mxu0 %v2967
    %v3175 = vpop.f32.mrf.mxu0
    %v3176 = vadd.f32 %v2816, %v3175
    %3177 = vmatmul.f32.gmra.mxu0 %v2970
    %v3178 = vpop.f32.mrf.mxu0
    %v3179 = vadd.f32 %v2816, %v3178
    %3180 = vmatmul.f32.gmra.mxu0 %v2973
    %v3181 = vpop.f32.mrf.mxu0
    %v3182 = vadd.f32 %v2816, %v3181
    %3183 = vmatmul.f32.gmra.mxu0 %v2976
    %v3184 = vpop.f32.mrf.mxu0
    %v3185 = vadd.f32 %v2816, %v3184
    %3186 = vmatmul.f32.gmra.mxu0 %v2979
    %v3187 = vpop.f32.mrf.mxu0
    %v3188 = vadd.f32 %v2816, %v3187
    %3189 = vmatmul.f32.gmra.mxu0 %v2982
    %v3190 = vpop.f32.mrf.mxu0
    %v3191 = vadd.f32 %v2816, %v3190
    %3192 = vmatmul.f32.gmra.mxu0 %v2985
    %v3193 = vpop.f32.mrf.mxu0
    %v3194 = vadd.f32 %v2816, %v3193
    %3195 = vmatmul.f32.gmra.mxu0 %v2988
    %v3196 = vpop.f32.mrf.mxu0
    %v3197 = vadd.f32 %v2816, %v3196
    %3198 = vmatmul.f32.gmra.mxu0 %v2991
    %v3199 = vpop.f32.mrf.mxu0
    %v3200 = vadd.f32 %v2816, %v3199
    %3201 = vmatmul.f32.gmra.mxu0 %v2994
    %v3202 = vpop.f32.mrf.mxu0
    %v3203 = vadd.f32 %v2816, %v3202
    %3204 = vmatmul.f32.gmra.mxu0 %v2997
    %v3205 = vpop.f32.mrf.mxu0
    %v3206 = vadd.f32 %v2816, %v3205
    %3207 = vmatmul.f32.gmra.mxu0 %v3000
    %v3208 = vpop.f32.mrf.mxu0
    %v3209 = vadd.f32 %v2816, %v3208
    %3210 = vmatmul.f32.gmra.mxu0 %v3003
    %v3211 = vpop.f32.mrf.mxu0
    %v3212 = vadd.f32 %v2816, %v3211
    %3213 = vmatmul.f32.gmra.mxu0 %v3006
    %v3214 = vpop.f32.mrf.mxu0
    %v3215 = vadd.f32 %v2816, %v3214
    %3216 = vmatmul.f32.gmra.mxu0 %v3009
    %v3217 = vpop.f32.mrf.mxu0
    %v3218 = vadd.f32 %v2816, %v3217
    %3219 = vdwg.mxu0
    %vm3220 = vcmask 15360
    %v3221 = vsel %vm3220, %v3029, -inf
    %3222 = vmax.xlane.f32.xlu0 %v3221
    %v3223 = vpop.xlane.xlu0 %3222
    %v3224 = vsel %vm3220, %v3032, -inf
    %3225 = vmax.xlane.f32.xlu0 %v3224
    %v3226 = vpop.xlane.xlu0 %3225
    %v3227 = vsel %vm3220, %v3035, -inf
    %3228 = vmax.xlane.f32.xlu0 %v3227
    %v3229 = vpop.xlane.xlu0 %3228
    %v3230 = vsel %vm3220, %v3038, -inf
    %3231 = vmax.xlane.f32.xlu0 %v3230
    %v3232 = vpop.xlane.xlu0 %3231
    %v3233 = vsel %vm3220, %v3041, -inf
    %3234 = vmax.xlane.f32.xlu0 %v3233
    %v3235 = vpop.xlane.xlu0 %3234
    %v3236 = vsel %vm3220, %v3044, -inf
    %3237 = vmax.xlane.f32.xlu0 %v3236
    %v3238 = vpop.xlane.xlu0 %3237
    %v3239 = vsel %vm3220, %v3047, -inf
    %3240 = vmax.xlane.f32.xlu0 %v3239
    %v3241 = vpop.xlane.xlu0 %3240
    %v3242 = vsel %vm3220, %v3050, -inf
    %3243 = vmax.xlane.f32.xlu0 %v3242
    %v3244 = vpop.xlane.xlu0 %3243
    %v3245 = vsel %vm3220, %v3053, -inf
    %3246 = vmax.xlane.f32.xlu0 %v3245
    %v3247 = vpop.xlane.xlu0 %3246
    %v3248 = vsel %vm3220, %v3056, -inf
    %3249 = vmax.xlane.f32.xlu0 %v3248
    %v3250 = vpop.xlane.xlu0 %3249
    %v3251 = vsel %vm3220, %v3059, -inf
    %3252 = vmax.xlane.f32.xlu0 %v3251
    %v3253 = vpop.xlane.xlu0 %3252
    %v3254 = vsel %vm3220, %v3062, -inf
    %3255 = vmax.xlane.f32.xlu0 %v3254
    %v3256 = vpop.xlane.xlu0 %3255
    %v3257 = vsel %vm3220, %v3065, -inf
    %3258 = vmax.xlane.f32.xlu0 %v3257
    %v3259 = vpop.xlane.xlu0 %3258
    %v3260 = vsel %vm3220, %v3068, -inf
    %3261 = vmax.xlane.f32.xlu0 %v3260
    %v3262 = vpop.xlane.xlu0 %3261
    %v3263 = vsel %vm3220, %v3071, -inf
    %3264 = vmax.xlane.f32.xlu0 %v3263
    %v3265 = vpop.xlane.xlu0 %3264
    %v3266 = vsel %vm3220, %v3074, -inf
    %3267 = vmax.xlane.f32.xlu0 %v3266
    %v3268 = vpop.xlane.xlu0 %3267
    %v3269 = vsel %vm3220, %v3077, -inf
    %3270 = vmax.xlane.f32.xlu0 %v3269
    %v3271 = vpop.xlane.xlu0 %3270
    %v3272 = vsel %vm3220, %v3080, -inf
    %3273 = vmax.xlane.f32.xlu0 %v3272
    %v3274 = vpop.xlane.xlu0 %3273
    %v3275 = vsel %vm3220, %v3083, -inf
    %3276 = vmax.xlane.f32.xlu0 %v3275
    %v3277 = vpop.xlane.xlu0 %3276
    %v3278 = vsel %vm3220, %v3086, -inf
    %3279 = vmax.xlane.f32.xlu0 %v3278
    %v3280 = vpop.xlane.xlu0 %3279
    %v3281 = vsel %vm3220, %v3089, -inf
    %3282 = vmax.xlane.f32.xlu0 %v3281
    %v3283 = vpop.xlane.xlu0 %3282
    %v3284 = vsel %vm3220, %v3092, -inf
    %3285 = vmax.xlane.f32.xlu0 %v3284
    %v3286 = vpop.xlane.xlu0 %3285
    %v3287 = vsel %vm3220, %v3095, -inf
    %3288 = vmax.xlane.f32.xlu0 %v3287
    %v3289 = vpop.xlane.xlu0 %3288
    %v3290 = vsel %vm3220, %v3098, -inf
    %3291 = vmax.xlane.f32.xlu0 %v3290
    %v3292 = vpop.xlane.xlu0 %3291
    %v3293 = vsel %vm3220, %v3101, -inf
    %3294 = vmax.xlane.f32.xlu0 %v3293
    %v3295 = vpop.xlane.xlu0 %3294
    %v3296 = vsel %vm3220, %v3104, -inf
    %3297 = vmax.xlane.f32.xlu0 %v3296
    %v3298 = vpop.xlane.xlu0 %3297
    %v3299 = vsel %vm3220, %v3107, -inf
    %3300 = vmax.xlane.f32.xlu0 %v3299
    %v3301 = vpop.xlane.xlu0 %3300
    %v3302 = vsel %vm3220, %v3110, -inf
    %3303 = vmax.xlane.f32.xlu0 %v3302
    %v3304 = vpop.xlane.xlu0 %3303
    %v3305 = vsel %vm3220, %v3113, -inf
    %3306 = vmax.xlane.f32.xlu0 %v3305
    %v3307 = vpop.xlane.xlu0 %3306
    %v3308 = vsel %vm3220, %v3116, -inf
    %3309 = vmax.xlane.f32.xlu0 %v3308
    %v3310 = vpop.xlane.xlu0 %3309
    %v3311 = vsel %vm3220, %v3119, -inf
    %3312 = vmax.xlane.f32.xlu0 %v3311
    %v3313 = vpop.xlane.xlu0 %3312
    %v3314 = vsel %vm3220, %v3122, -inf
    %3315 = vmax.xlane.f32.xlu0 %v3314
    %v3316 = vpop.xlane.xlu0 %3315
    %v3317 = vsel %vm3220, %v3125, -inf
    %3318 = vmax.xlane.f32.xlu0 %v3317
    %v3319 = vpop.xlane.xlu0 %3318
    %v3320 = vsel %vm3220, %v3128, -inf
    %3321 = vmax.xlane.f32.xlu0 %v3320
    %v3322 = vpop.xlane.xlu0 %3321
    %v3323 = vsel %vm3220, %v3131, -inf
    %3324 = vmax.xlane.f32.xlu0 %v3323
    %v3325 = vpop.xlane.xlu0 %3324
    %v3326 = vsel %vm3220, %v3134, -inf
    %3327 = vmax.xlane.f32.xlu0 %v3326
    %v3328 = vpop.xlane.xlu0 %3327
    %v3329 = vsel %vm3220, %v3137, -inf
    %3330 = vmax.xlane.f32.xlu0 %v3329
    %v3331 = vpop.xlane.xlu0 %3330
    %v3332 = vsel %vm3220, %v3140, -inf
    %3333 = vmax.xlane.f32.xlu0 %v3332
    %v3334 = vpop.xlane.xlu0 %3333
    %v3335 = vsel %vm3220, %v3143, -inf
    %3336 = vmax.xlane.f32.xlu0 %v3335
    %v3337 = vpop.xlane.xlu0 %3336
    %v3338 = vsel %vm3220, %v3146, -inf
    %3339 = vmax.xlane.f32.xlu0 %v3338
    %v3340 = vpop.xlane.xlu0 %3339
    %v3341 = vsel %vm3220, %v3149, -inf
    %3342 = vmax.xlane.f32.xlu0 %v3341
    %v3343 = vpop.xlane.xlu0 %3342
    %v3344 = vsel %vm3220, %v3152, -inf
    %3345 = vmax.xlane.f32.xlu0 %v3344
    %v3346 = vpop.xlane.xlu0 %3345
    %v3347 = vsel %vm3220, %v3155, -inf
    %3348 = vmax.xlane.f32.xlu0 %v3347
    %v3349 = vpop.xlane.xlu0 %3348
    %v3350 = vsel %vm3220, %v3158, -inf
    %3351 = vmax.xlane.f32.xlu0 %v3350
    %v3352 = vpop.xlane.xlu0 %3351
    %v3353 = vsel %vm3220, %v3161, -inf
    %3354 = vmax.xlane.f32.xlu0 %v3353
    %v3355 = vpop.xlane.xlu0 %3354
    %v3356 = vsel %vm3220, %v3164, -inf
    %3357 = vmax.xlane.f32.xlu0 %v3356
    %v3358 = vpop.xlane.xlu0 %3357
    %v3359 = vsel %vm3220, %v3167, -inf
    %3360 = vmax.xlane.f32.xlu0 %v3359
    %v3361 = vpop.xlane.xlu0 %3360
    %v3362 = vsel %vm3220, %v3170, -inf
    %3363 = vmax.xlane.f32.xlu0 %v3362
    %v3364 = vpop.xlane.xlu0 %3363
    %v3365 = vsel %vm3220, %v3173, -inf
    %3366 = vmax.xlane.f32.xlu0 %v3365
    %v3367 = vpop.xlane.xlu0 %3366
    %v3368 = vsel %vm3220, %v3176, -inf
    %3369 = vmax.xlane.f32.xlu0 %v3368
    %v3370 = vpop.xlane.xlu0 %3369
    %v3371 = vsel %vm3220, %v3179, -inf
    %3372 = vmax.xlane.f32.xlu0 %v3371
    %v3373 = vpop.xlane.xlu0 %3372
    %v3374 = vsel %vm3220, %v3182, -inf
    %3375 = vmax.xlane.f32.xlu0 %v3374
    %v3376 = vpop.xlane.xlu0 %3375
    %v3377 = vsel %vm3220, %v3185, -inf
    %3378 = vmax.xlane.f32.xlu0 %v3377
    %v3379 = vpop.xlane.xlu0 %3378
    %v3380 = vsel %vm3220, %v3188, -inf
    %3381 = vmax.xlane.f32.xlu0 %v3380
    %v3382 = vpop.xlane.xlu0 %3381
    %v3383 = vsel %vm3220, %v3191, -inf
    %3384 = vmax.xlane.f32.xlu0 %v3383
    %v3385 = vpop.xlane.xlu0 %3384
    %v3386 = vsel %vm3220, %v3194, -inf
    %3387 = vmax.xlane.f32.xlu0 %v3386
    %v3388 = vpop.xlane.xlu0 %3387
    %v3389 = vsel %vm3220, %v3197, -inf
    %3390 = vmax.xlane.f32.xlu0 %v3389
    %v3391 = vpop.xlane.xlu0 %3390
    %v3392 = vsel %vm3220, %v3200, -inf
    %3393 = vmax.xlane.f32.xlu0 %v3392
    %v3394 = vpop.xlane.xlu0 %3393
    %v3395 = vsel %vm3220, %v3203, -inf
    %3396 = vmax.xlane.f32.xlu0 %v3395
    %v3397 = vpop.xlane.xlu0 %3396
    %v3398 = vsel %vm3220, %v3206, -inf
    %3399 = vmax.xlane.f32.xlu0 %v3398
    %v3400 = vpop.xlane.xlu0 %3399
    %v3401 = vsel %vm3220, %v3209, -inf
    %3402 = vmax.xlane.f32.xlu0 %v3401
    %v3403 = vpop.xlane.xlu0 %3402
    %v3404 = vsel %vm3220, %v3212, -inf
    %3405 = vmax.xlane.f32.xlu0 %v3404
    %v3406 = vpop.xlane.xlu0 %3405
    %v3407 = vsel %vm3220, %v3215, -inf
    %3408 = vmax.xlane.f32.xlu0 %v3407
    %v3409 = vpop.xlane.xlu0 %3408
    %v3410 = vsel %vm3220, %v3218, -inf
    %3411 = vmax.xlane.f32.xlu0 %v3410
    %v3412 = vpop.xlane.xlu0 %3411
    %v3413 = vsub.f32 %v3029, %v3223
    %v3414 = vsub.f32 %v3032, %v3226
    %v3415 = vsub.f32 %v3035, %v3229
    %v3416 = vsub.f32 %v3038, %v3232
    %v3417 = vsub.f32 %v3041, %v3235
    %v3418 = vsub.f32 %v3044, %v3238
    %v3419 = vsub.f32 %v3047, %v3241
    %v3420 = vsub.f32 %v3050, %v3244
    %v3421 = vsub.f32 %v3053, %v3247
    %v3422 = vsub.f32 %v3056, %v3250
    %v3423 = vsub.f32 %v3059, %v3253
    %v3424 = vsub.f32 %v3062, %v3256
    %v3425 = vsub.f32 %v3065, %v3259
    %v3426 = vsub.f32 %v3068, %v3262
    %v3427 = vsub.f32 %v3071, %v3265
    %v3428 = vsub.f32 %v3074, %v3268
    %v3429 = vsub.f32 %v3077, %v3271
    %v3430 = vsub.f32 %v3080, %v3274
    %v3431 = vsub.f32 %v3083, %v3277
    %v3432 = vsub.f32 %v3086, %v3280
    %v3433 = vsub.f32 %v3089, %v3283
    %v3434 = vsub.f32 %v3092, %v3286
    %v3435 = vsub.f32 %v3095, %v3289
    %v3436 = vsub.f32 %v3098, %v3292
    %v3437 = vsub.f32 %v3101, %v3295
    %v3438 = vsub.f32 %v3104, %v3298
    %v3439 = vsub.f32 %v3107, %v3301
    %v3440 = vsub.f32 %v3110, %v3304
    %v3441 = vsub.f32 %v3113, %v3307
    %v3442 = vsub.f32 %v3116, %v3310
    %v3443 = vsub.f32 %v3119, %v3313
    %v3444 = vsub.f32 %v3122, %v3316
    %v3445 = vsub.f32 %v3125, %v3319
    %v3446 = vsub.f32 %v3128, %v3322
    %v3447 = vsub.f32 %v3131, %v3325
    %v3448 = vsub.f32 %v3134, %v3328
    %v3449 = vsub.f32 %v3137, %v3331
    %v3450 = vsub.f32 %v3140, %v3334
    %v3451 = vsub.f32 %v3143, %v3337
    %v3452 = vsub.f32 %v3146, %v3340
    %v3453 = vsub.f32 %v3149, %v3343
    %v3454 = vsub.f32 %v3152, %v3346
    %v3455 = vsub.f32 %v3155, %v3349
    %v3456 = vsub.f32 %v3158, %v3352
    %v3457 = vsub.f32 %v3161, %v3355
    %v3458 = vsub.f32 %v3164, %v3358
    %v3459 = vsub.f32 %v3167, %v3361
    %v3460 = vsub.f32 %v3170, %v3364
    %v3461 = vsub.f32 %v3173, %v3367
    %v3462 = vsub.f32 %v3176, %v3370
    %v3463 = vsub.f32 %v3179, %v3373
    %v3464 = vsub.f32 %v3182, %v3376
    %v3465 = vsub.f32 %v3185, %v3379
    %v3466 = vsub.f32 %v3188, %v3382
    %v3467 = vsub.f32 %v3191, %v3385
    %v3468 = vsub.f32 %v3194, %v3388
    %v3469 = vsub.f32 %v3197, %v3391
    %v3470 = vsub.f32 %v3200, %v3394
    %v3471 = vsub.f32 %v3203, %v3397
    %v3472 = vsub.f32 %v3206, %v3400
    %v3473 = vsub.f32 %v3209, %v3403
    %v3474 = vsub.f32 %v3212, %v3406
    %v3475 = vsub.f32 %v3215, %v3409
    %v3476 = vsub.f32 %v3218, %v3412
    %v3477 = vmul.f32 %v3413, 1.442695
    %v3478 = vpow.pop %v3477
    %v3479 = vmul.f32 %v3414, 1.442695
    %v3480 = vpow.pop %v3479
    %v3481 = vmul.f32 %v3415, 1.442695
    %v3482 = vpow.pop %v3481
    %v3483 = vmul.f32 %v3416, 1.442695
    %v3484 = vpow.pop %v3483
    %v3485 = vmul.f32 %v3417, 1.442695
    %v3486 = vpow.pop %v3485
    %v3487 = vmul.f32 %v3418, 1.442695
    %v3488 = vpow.pop %v3487
    %v3489 = vmul.f32 %v3419, 1.442695
    %v3490 = vpow.pop %v3489
    %v3491 = vmul.f32 %v3420, 1.442695
    %v3492 = vpow.pop %v3491
    %v3493 = vmul.f32 %v3421, 1.442695
    %v3494 = vpow.pop %v3493
    %v3495 = vmul.f32 %v3422, 1.442695
    %v3496 = vpow.pop %v3495
    %v3497 = vmul.f32 %v3423, 1.442695
    %v3498 = vpow.pop %v3497
    %v3499 = vmul.f32 %v3424, 1.442695
    %v3500 = vpow.pop %v3499
    %v3501 = vmul.f32 %v3425, 1.442695
    %v3502 = vpow.pop %v3501
    %v3503 = vmul.f32 %v3426, 1.442695
    %v3504 = vpow.pop %v3503
    %v3505 = vmul.f32 %v3427, 1.442695
    %v3506 = vpow.pop %v3505
    %v3507 = vmul.f32 %v3428, 1.442695
    %v3508 = vpow.pop %v3507
    %v3509 = vmul.f32 %v3429, 1.442695
    %v3510 = vpow.pop %v3509
    %v3511 = vmul.f32 %v3430, 1.442695
    %v3512 = vpow.pop %v3511
    %v3513 = vmul.f32 %v3431, 1.442695
    %v3514 = vpow.pop %v3513
    %v3515 = vmul.f32 %v3432, 1.442695
    %v3516 = vpow.pop %v3515
    %v3517 = vmul.f32 %v3433, 1.442695
    %v3518 = vpow.pop %v3517
    %v3519 = vmul.f32 %v3434, 1.442695
    %v3520 = vpow.pop %v3519
    %v3521 = vmul.f32 %v3435, 1.442695
    %v3522 = vpow.pop %v3521
    %v3523 = vmul.f32 %v3436, 1.442695
    %v3524 = vpow.pop %v3523
    %v3525 = vmul.f32 %v3437, 1.442695
    %v3526 = vpow.pop %v3525
    %v3527 = vmul.f32 %v3438, 1.442695
    %v3528 = vpow.pop %v3527
    %v3529 = vmul.f32 %v3439, 1.442695
    %v3530 = vpow.pop %v3529
    %v3531 = vmul.f32 %v3440, 1.442695
    %v3532 = vpow.pop %v3531
    %v3533 = vmul.f32 %v3441, 1.442695
    %v3534 = vpow.pop %v3533
    %v3535 = vmul.f32 %v3442, 1.442695
    %v3536 = vpow.pop %v3535
    %v3537 = vmul.f32 %v3443, 1.442695
    %v3538 = vpow.pop %v3537
    %v3539 = vmul.f32 %v3444, 1.442695
    %v3540 = vpow.pop %v3539
    %v3541 = vmul.f32 %v3445, 1.442695
    %v3542 = vpow.pop %v3541
    %v3543 = vmul.f32 %v3446, 1.442695
    %v3544 = vpow.pop %v3543
    %v3545 = vmul.f32 %v3447, 1.442695
    %v3546 = vpow.pop %v3545
    %v3547 = vmul.f32 %v3448, 1.442695
    %v3548 = vpow.pop %v3547
    %v3549 = vmul.f32 %v3449, 1.442695
    %v3550 = vpow.pop %v3549
    %v3551 = vmul.f32 %v3450, 1.442695
    %v3552 = vpow.pop %v3551
    %v3553 = vmul.f32 %v3451, 1.442695
    %v3554 = vpow.pop %v3553
    %v3555 = vmul.f32 %v3452, 1.442695
    %v3556 = vpow.pop %v3555
    %v3557 = vmul.f32 %v3453, 1.442695
    %v3558 = vpow.pop %v3557
    %v3559 = vmul.f32 %v3454, 1.442695
    %v3560 = vpow.pop %v3559
    %v3561 = vmul.f32 %v3455, 1.442695
    %v3562 = vpow.pop %v3561
    %v3563 = vmul.f32 %v3456, 1.442695
    %v3564 = vpow.pop %v3563
    %v3565 = vmul.f32 %v3457, 1.442695
    %v3566 = vpow.pop %v3565
    %v3567 = vmul.f32 %v3458, 1.442695
    %v3568 = vpow.pop %v3567
    %v3569 = vmul.f32 %v3459, 1.442695
    %v3570 = vpow.pop %v3569
    %v3571 = vmul.f32 %v3460, 1.442695
    %v3572 = vpow.pop %v3571
    %v3573 = vmul.f32 %v3461, 1.442695
    %v3574 = vpow.pop %v3573
    %v3575 = vmul.f32 %v3462, 1.442695
    %v3576 = vpow.pop %v3575
    %v3577 = vmul.f32 %v3463, 1.442695
    %v3578 = vpow.pop %v3577
    %v3579 = vmul.f32 %v3464, 1.442695
    %v3580 = vpow.pop %v3579
    %v3581 = vmul.f32 %v3465, 1.442695
    %v3582 = vpow.pop %v3581
    %v3583 = vmul.f32 %v3466, 1.442695
    %v3584 = vpow.pop %v3583
    %v3585 = vmul.f32 %v3467, 1.442695
    %v3586 = vpow.pop %v3585
    %v3587 = vmul.f32 %v3468, 1.442695
    %v3588 = vpow.pop %v3587
    %v3589 = vmul.f32 %v3469, 1.442695
    %v3590 = vpow.pop %v3589
    %v3591 = vmul.f32 %v3470, 1.442695
    %v3592 = vpow.pop %v3591
    %v3593 = vmul.f32 %v3471, 1.442695
    %v3594 = vpow.pop %v3593
    %v3595 = vmul.f32 %v3472, 1.442695
    %v3596 = vpow.pop %v3595
    %v3597 = vmul.f32 %v3473, 1.442695
    %v3598 = vpow.pop %v3597
    %v3599 = vmul.f32 %v3474, 1.442695
    %v3600 = vpow.pop %v3599
    %v3601 = vmul.f32 %v3475, 1.442695
    %v3602 = vpow.pop %v3601
    %v3603 = vmul.f32 %v3476, 1.442695
    %v3604 = vpow.pop %v3603
    %v3605 = vsel %vm3220, %v3478, 0.0
    %3606 = vadd.xlane.f32.xlu0 %v3605
    %v3607 = vpop.xlane.xlu0 %3606
    %v3608 = vsel %vm3220, %v3480, 0.0
    %3609 = vadd.xlane.f32.xlu0 %v3608
    %v3610 = vpop.xlane.xlu0 %3609
    %v3611 = vsel %vm3220, %v3482, 0.0
    %3612 = vadd.xlane.f32.xlu0 %v3611
    %v3613 = vpop.xlane.xlu0 %3612
    %v3614 = vsel %vm3220, %v3484, 0.0
    %3615 = vadd.xlane.f32.xlu0 %v3614
    %v3616 = vpop.xlane.xlu0 %3615
    %v3617 = vsel %vm3220, %v3486, 0.0
    %3618 = vadd.xlane.f32.xlu0 %v3617
    %v3619 = vpop.xlane.xlu0 %3618
    %v3620 = vsel %vm3220, %v3488, 0.0
    %3621 = vadd.xlane.f32.xlu0 %v3620
    %v3622 = vpop.xlane.xlu0 %3621
    %v3623 = vsel %vm3220, %v3490, 0.0
    %3624 = vadd.xlane.f32.xlu0 %v3623
    %v3625 = vpop.xlane.xlu0 %3624
    %v3626 = vsel %vm3220, %v3492, 0.0
    %3627 = vadd.xlane.f32.xlu0 %v3626
    %v3628 = vpop.xlane.xlu0 %3627
    %v3629 = vsel %vm3220, %v3494, 0.0
    %3630 = vadd.xlane.f32.xlu0 %v3629
    %v3631 = vpop.xlane.xlu0 %3630
    %v3632 = vsel %vm3220, %v3496, 0.0
    %3633 = vadd.xlane.f32.xlu0 %v3632
    %v3634 = vpop.xlane.xlu0 %3633
    %v3635 = vsel %vm3220, %v3498, 0.0
    %3636 = vadd.xlane.f32.xlu0 %v3635
    %v3637 = vpop.xlane.xlu0 %3636
    %v3638 = vsel %vm3220, %v3500, 0.0
    %3639 = vadd.xlane.f32.xlu0 %v3638
    %v3640 = vpop.xlane.xlu0 %3639
    %v3641 = vsel %vm3220, %v3502, 0.0
    %3642 = vadd.xlane.f32.xlu0 %v3641
    %v3643 = vpop.xlane.xlu0 %3642
    %v3644 = vsel %vm3220, %v3504, 0.0
    %3645 = vadd.xlane.f32.xlu0 %v3644
    %v3646 = vpop.xlane.xlu0 %3645
    %v3647 = vsel %vm3220, %v3506, 0.0
    %3648 = vadd.xlane.f32.xlu0 %v3647
    %v3649 = vpop.xlane.xlu0 %3648
    %v3650 = vsel %vm3220, %v3508, 0.0
    %3651 = vadd.xlane.f32.xlu0 %v3650
    %v3652 = vpop.xlane.xlu0 %3651
    %v3653 = vsel %vm3220, %v3510, 0.0
    %3654 = vadd.xlane.f32.xlu0 %v3653
    %v3655 = vpop.xlane.xlu0 %3654
    %v3656 = vsel %vm3220, %v3512, 0.0
    %3657 = vadd.xlane.f32.xlu0 %v3656
    %v3658 = vpop.xlane.xlu0 %3657
    %v3659 = vsel %vm3220, %v3514, 0.0
    %3660 = vadd.xlane.f32.xlu0 %v3659
    %v3661 = vpop.xlane.xlu0 %3660
    %v3662 = vsel %vm3220, %v3516, 0.0
    %3663 = vadd.xlane.f32.xlu0 %v3662
    %v3664 = vpop.xlane.xlu0 %3663
    %v3665 = vsel %vm3220, %v3518, 0.0
    %3666 = vadd.xlane.f32.xlu0 %v3665
    %v3667 = vpop.xlane.xlu0 %3666
    %v3668 = vsel %vm3220, %v3520, 0.0
    %3669 = vadd.xlane.f32.xlu0 %v3668
    %v3670 = vpop.xlane.xlu0 %3669
    %v3671 = vsel %vm3220, %v3522, 0.0
    %3672 = vadd.xlane.f32.xlu0 %v3671
    %v3673 = vpop.xlane.xlu0 %3672
    %v3674 = vsel %vm3220, %v3524, 0.0
    %3675 = vadd.xlane.f32.xlu0 %v3674
    %v3676 = vpop.xlane.xlu0 %3675
    %v3677 = vsel %vm3220, %v3526, 0.0
    %3678 = vadd.xlane.f32.xlu0 %v3677
    %v3679 = vpop.xlane.xlu0 %3678
    %v3680 = vsel %vm3220, %v3528, 0.0
    %3681 = vadd.xlane.f32.xlu0 %v3680
    %v3682 = vpop.xlane.xlu0 %3681
    %v3683 = vsel %vm3220, %v3530, 0.0
    %3684 = vadd.xlane.f32.xlu0 %v3683
    %v3685 = vpop.xlane.xlu0 %3684
    %v3686 = vsel %vm3220, %v3532, 0.0
    %3687 = vadd.xlane.f32.xlu0 %v3686
    %v3688 = vpop.xlane.xlu0 %3687
    %v3689 = vsel %vm3220, %v3534, 0.0
    %3690 = vadd.xlane.f32.xlu0 %v3689
    %v3691 = vpop.xlane.xlu0 %3690
    %v3692 = vsel %vm3220, %v3536, 0.0
    %3693 = vadd.xlane.f32.xlu0 %v3692
    %v3694 = vpop.xlane.xlu0 %3693
    %v3695 = vsel %vm3220, %v3538, 0.0
    %3696 = vadd.xlane.f32.xlu0 %v3695
    %v3697 = vpop.xlane.xlu0 %3696
    %v3698 = vsel %vm3220, %v3540, 0.0
    %3699 = vadd.xlane.f32.xlu0 %v3698
    %v3700 = vpop.xlane.xlu0 %3699
    %v3701 = vsel %vm3220, %v3542, 0.0
    %3702 = vadd.xlane.f32.xlu0 %v3701
    %v3703 = vpop.xlane.xlu0 %3702
    %v3704 = vsel %vm3220, %v3544, 0.0
    %3705 = vadd.xlane.f32.xlu0 %v3704
    %v3706 = vpop.xlane.xlu0 %3705
    %v3707 = vsel %vm3220, %v3546, 0.0
    %3708 = vadd.xlane.f32.xlu0 %v3707
    %v3709 = vpop.xlane.xlu0 %3708
    %v3710 = vsel %vm3220, %v3548, 0.0
    %3711 = vadd.xlane.f32.xlu0 %v3710
    %v3712 = vpop.xlane.xlu0 %3711
    %v3713 = vsel %vm3220, %v3550, 0.0
    %3714 = vadd.xlane.f32.xlu0 %v3713
    %v3715 = vpop.xlane.xlu0 %3714
    %v3716 = vsel %vm3220, %v3552, 0.0
    %3717 = vadd.xlane.f32.xlu0 %v3716
    %v3718 = vpop.xlane.xlu0 %3717
    %v3719 = vsel %vm3220, %v3554, 0.0
    %3720 = vadd.xlane.f32.xlu0 %v3719
    %v3721 = vpop.xlane.xlu0 %3720
    %v3722 = vsel %vm3220, %v3556, 0.0
    %3723 = vadd.xlane.f32.xlu0 %v3722
    %v3724 = vpop.xlane.xlu0 %3723
    %v3725 = vsel %vm3220, %v3558, 0.0
    %3726 = vadd.xlane.f32.xlu0 %v3725
    %v3727 = vpop.xlane.xlu0 %3726
    %v3728 = vsel %vm3220, %v3560, 0.0
    %3729 = vadd.xlane.f32.xlu0 %v3728
    %v3730 = vpop.xlane.xlu0 %3729
    %v3731 = vsel %vm3220, %v3562, 0.0
    %3732 = vadd.xlane.f32.xlu0 %v3731
    %v3733 = vpop.xlane.xlu0 %3732
    %v3734 = vsel %vm3220, %v3564, 0.0
    %3735 = vadd.xlane.f32.xlu0 %v3734
    %v3736 = vpop.xlane.xlu0 %3735
    %v3737 = vsel %vm3220, %v3566, 0.0
    %3738 = vadd.xlane.f32.xlu0 %v3737
    %v3739 = vpop.xlane.xlu0 %3738
    %v3740 = vsel %vm3220, %v3568, 0.0
    %3741 = vadd.xlane.f32.xlu0 %v3740
    %v3742 = vpop.xlane.xlu0 %3741
    %v3743 = vsel %vm3220, %v3570, 0.0
    %3744 = vadd.xlane.f32.xlu0 %v3743
    %v3745 = vpop.xlane.xlu0 %3744
    %v3746 = vsel %vm3220, %v3572, 0.0
    %3747 = vadd.xlane.f32.xlu0 %v3746
    %v3748 = vpop.xlane.xlu0 %3747
    %v3749 = vsel %vm3220, %v3574, 0.0
    %3750 = vadd.xlane.f32.xlu0 %v3749
    %v3751 = vpop.xlane.xlu0 %3750
    %v3752 = vsel %vm3220, %v3576, 0.0
    %3753 = vadd.xlane.f32.xlu0 %v3752
    %v3754 = vpop.xlane.xlu0 %3753
    %v3755 = vsel %vm3220, %v3578, 0.0
    %3756 = vadd.xlane.f32.xlu0 %v3755
    %v3757 = vpop.xlane.xlu0 %3756
    %v3758 = vsel %vm3220, %v3580, 0.0
    %3759 = vadd.xlane.f32.xlu0 %v3758
    %v3760 = vpop.xlane.xlu0 %3759
    %v3761 = vsel %vm3220, %v3582, 0.0
    %3762 = vadd.xlane.f32.xlu0 %v3761
    %v3763 = vpop.xlane.xlu0 %3762
    %v3764 = vsel %vm3220, %v3584, 0.0
    %3765 = vadd.xlane.f32.xlu0 %v3764
    %v3766 = vpop.xlane.xlu0 %3765
    %v3767 = vsel %vm3220, %v3586, 0.0
    %3768 = vadd.xlane.f32.xlu0 %v3767
    %v3769 = vpop.xlane.xlu0 %3768
    %v3770 = vsel %vm3220, %v3588, 0.0
    %3771 = vadd.xlane.f32.xlu0 %v3770
    %v3772 = vpop.xlane.xlu0 %3771
    %v3773 = vsel %vm3220, %v3590, 0.0
    %3774 = vadd.xlane.f32.xlu0 %v3773
    %v3775 = vpop.xlane.xlu0 %3774
    %v3776 = vsel %vm3220, %v3592, 0.0
    %3777 = vadd.xlane.f32.xlu0 %v3776
    %v3778 = vpop.xlane.xlu0 %3777
    %v3779 = vsel %vm3220, %v3594, 0.0
    %3780 = vadd.xlane.f32.xlu0 %v3779
    %v3781 = vpop.xlane.xlu0 %3780
    %v3782 = vsel %vm3220, %v3596, 0.0
    %3783 = vadd.xlane.f32.xlu0 %v3782
    %v3784 = vpop.xlane.xlu0 %3783
    %v3785 = vsel %vm3220, %v3598, 0.0
    %3786 = vadd.xlane.f32.xlu0 %v3785
    %v3787 = vpop.xlane.xlu0 %3786
    %v3788 = vsel %vm3220, %v3600, 0.0
    %3789 = vadd.xlane.f32.xlu0 %v3788
    %v3790 = vpop.xlane.xlu0 %3789
    %v3791 = vsel %vm3220, %v3602, 0.0
    %3792 = vadd.xlane.f32.xlu0 %v3791
    %v3793 = vpop.xlane.xlu0 %3792
    %v3794 = vsel %vm3220, %v3604, 0.0
    %3795 = vadd.xlane.f32.xlu0 %v3794
    %v3796 = vpop.xlane.xlu0 %3795
    %v3797 = vrcp.pop %v3607
    %v3798 = vrcp.pop %v3610
    %v3799 = vrcp.pop %v3613
    %v3800 = vrcp.pop %v3616
    %v3801 = vrcp.pop %v3619
    %v3802 = vrcp.pop %v3622
    %v3803 = vrcp.pop %v3625
    %v3804 = vrcp.pop %v3628
    %v3805 = vrcp.pop %v3631
    %v3806 = vrcp.pop %v3634
    %v3807 = vrcp.pop %v3637
    %v3808 = vrcp.pop %v3640
    %v3809 = vrcp.pop %v3643
    %v3810 = vrcp.pop %v3646
    %v3811 = vrcp.pop %v3649
    %v3812 = vrcp.pop %v3652
    %v3813 = vrcp.pop %v3655
    %v3814 = vrcp.pop %v3658
    %v3815 = vrcp.pop %v3661
    %v3816 = vrcp.pop %v3664
    %v3817 = vrcp.pop %v3667
    %v3818 = vrcp.pop %v3670
    %v3819 = vrcp.pop %v3673
    %v3820 = vrcp.pop %v3676
    %v3821 = vrcp.pop %v3679
    %v3822 = vrcp.pop %v3682
    %v3823 = vrcp.pop %v3685
    %v3824 = vrcp.pop %v3688
    %v3825 = vrcp.pop %v3691
    %v3826 = vrcp.pop %v3694
    %v3827 = vrcp.pop %v3697
    %v3828 = vrcp.pop %v3700
    %v3829 = vrcp.pop %v3703
    %v3830 = vrcp.pop %v3706
    %v3831 = vrcp.pop %v3709
    %v3832 = vrcp.pop %v3712
    %v3833 = vrcp.pop %v3715
    %v3834 = vrcp.pop %v3718
    %v3835 = vrcp.pop %v3721
    %v3836 = vrcp.pop %v3724
    %v3837 = vrcp.pop %v3727
    %v3838 = vrcp.pop %v3730
    %v3839 = vrcp.pop %v3733
    %v3840 = vrcp.pop %v3736
    %v3841 = vrcp.pop %v3739
    %v3842 = vrcp.pop %v3742
    %v3843 = vrcp.pop %v3745
    %v3844 = vrcp.pop %v3748
    %v3845 = vrcp.pop %v3751
    %v3846 = vrcp.pop %v3754
    %v3847 = vrcp.pop %v3757
    %v3848 = vrcp.pop %v3760
    %v3849 = vrcp.pop %v3763
    %v3850 = vrcp.pop %v3766
    %v3851 = vrcp.pop %v3769
    %v3852 = vrcp.pop %v3772
    %v3853 = vrcp.pop %v3775
    %v3854 = vrcp.pop %v3778
    %v3855 = vrcp.pop %v3781
    %v3856 = vrcp.pop %v3784
    %v3857 = vrcp.pop %v3787
    %v3858 = vrcp.pop %v3790
    %v3859 = vrcp.pop %v3793
    %v3860 = vrcp.pop %v3796
    %v3861 = vmul.f32 %v3478, %v3797
    %v3862 = vmul.f32 %v3480, %v3798
    %v3863 = vmul.f32 %v3482, %v3799
    %v3864 = vmul.f32 %v3484, %v3800
    %v3865 = vmul.f32 %v3486, %v3801
    %v3866 = vmul.f32 %v3488, %v3802
    %v3867 = vmul.f32 %v3490, %v3803
    %v3868 = vmul.f32 %v3492, %v3804
    %v3869 = vmul.f32 %v3494, %v3805
    %v3870 = vmul.f32 %v3496, %v3806
    %v3871 = vmul.f32 %v3498, %v3807
    %v3872 = vmul.f32 %v3500, %v3808
    %v3873 = vmul.f32 %v3502, %v3809
    %v3874 = vmul.f32 %v3504, %v3810
    %v3875 = vmul.f32 %v3506, %v3811
    %v3876 = vmul.f32 %v3508, %v3812
    %v3877 = vmul.f32 %v3510, %v3813
    %v3878 = vmul.f32 %v3512, %v3814
    %v3879 = vmul.f32 %v3514, %v3815
    %v3880 = vmul.f32 %v3516, %v3816
    %v3881 = vmul.f32 %v3518, %v3817
    %v3882 = vmul.f32 %v3520, %v3818
    %v3883 = vmul.f32 %v3522, %v3819
    %v3884 = vmul.f32 %v3524, %v3820
    %v3885 = vmul.f32 %v3526, %v3821
    %v3886 = vmul.f32 %v3528, %v3822
    %v3887 = vmul.f32 %v3530, %v3823
    %v3888 = vmul.f32 %v3532, %v3824
    %v3889 = vmul.f32 %v3534, %v3825
    %v3890 = vmul.f32 %v3536, %v3826
    %v3891 = vmul.f32 %v3538, %v3827
    %v3892 = vmul.f32 %v3540, %v3828
    %v3893 = vmul.f32 %v3542, %v3829
    %v3894 = vmul.f32 %v3544, %v3830
    %v3895 = vmul.f32 %v3546, %v3831
    %v3896 = vmul.f32 %v3548, %v3832
    %v3897 = vmul.f32 %v3550, %v3833
    %v3898 = vmul.f32 %v3552, %v3834
    %v3899 = vmul.f32 %v3554, %v3835
    %v3900 = vmul.f32 %v3556, %v3836
    %v3901 = vmul.f32 %v3558, %v3837
    %v3902 = vmul.f32 %v3560, %v3838
    %v3903 = vmul.f32 %v3562, %v3839
    %v3904 = vmul.f32 %v3564, %v3840
    %v3905 = vmul.f32 %v3566, %v3841
    %v3906 = vmul.f32 %v3568, %v3842
    %v3907 = vmul.f32 %v3570, %v3843
    %v3908 = vmul.f32 %v3572, %v3844
    %v3909 = vmul.f32 %v3574, %v3845
    %v3910 = vmul.f32 %v3576, %v3846
    %v3911 = vmul.f32 %v3578, %v3847
    %v3912 = vmul.f32 %v3580, %v3848
    %v3913 = vmul.f32 %v3582, %v3849
    %v3914 = vmul.f32 %v3584, %v3850
    %v3915 = vmul.f32 %v3586, %v3851
    %v3916 = vmul.f32 %v3588, %v3852
    %v3917 = vmul.f32 %v3590, %v3853
    %v3918 = vmul.f32 %v3592, %v3854
    %v3919 = vmul.f32 %v3594, %v3855
    %v3920 = vmul.f32 %v3596, %v3856
    %v3921 = vmul.f32 %v3598, %v3857
    %v3922 = vmul.f32 %v3600, %v3858
    %v3923 = vmul.f32 %v3602, %v3859
    %v3924 = vmul.f32 %v3604, %v3860
    %3925 = vset.pattern.permute.xlu0 1
    %3926 = vperm.xlu0 %3925, %v186
    %v3927 = vpop.permute.xlu0 %3926
    %3929 = vset.pattern.permute.xlu0 1
    %3930 = vperm.xlu0 %3929, %v187
    %v3931 = vpop.permute.xlu0 %3930
    %3933 = vset.pattern.permute.xlu0 1
    %3934 = vperm.xlu0 %3933, %v188
    %v3935 = vpop.permute.xlu0 %3934
    %3937 = vset.pattern.permute.xlu0 1
    %3938 = vperm.xlu0 %3937, %v189
    %v3939 = vpop.permute.xlu0 %3938
    %3941 = vset.pattern.permute.xlu0 1
    %3942 = vperm.xlu0 %3941, %v190
    %v3943 = vpop.permute.xlu0 %3942
    %3945 = vset.pattern.permute.xlu0 1
    %3946 = vperm.xlu0 %3945, %v191
    %v3947 = vpop.permute.xlu0 %3946
    %3949 = vset.pattern.permute.xlu0 1
    %3950 = vperm.xlu0 %3949, %v192
    %v3951 = vpop.permute.xlu0 %3950
    %3953 = vset.pattern.permute.xlu0 1
    %3954 = vperm.xlu0 %3953, %v193
    %v3955 = vpop.permute.xlu0 %3954
    %3957 = vset.pattern.permute.xlu0 1
    %3958 = vperm.xlu0 %3957, %v194
    %v3959 = vpop.permute.xlu0 %3958
    %3961 = vset.pattern.permute.xlu0 1
    %3962 = vperm.xlu0 %3961, %v195
    %v3963 = vpop.permute.xlu0 %3962
    %3965 = vset.pattern.permute.xlu0 1
    %3966 = vperm.xlu0 %3965, %v196
    %v3967 = vpop.permute.xlu0 %3966
    %3969 = vset.pattern.permute.xlu0 1
    %3970 = vperm.xlu0 %3969, %v197
    %v3971 = vpop.permute.xlu0 %3970
    %3973 = vset.pattern.permute.xlu0 1
    %3974 = vperm.xlu0 %3973, %v198
    %v3975 = vpop.permute.xlu0 %3974
    %3977 = vset.pattern.permute.xlu0 1
    %3978 = vperm.xlu0 %3977, %v199
    %v3979 = vpop.permute.xlu0 %3978
    %3981 = vset.pattern.permute.xlu0 1
    %3982 = vperm.xlu0 %3981, %v200
    %v3983 = vpop.permute.xlu0 %3982
    %3985 = vset.pattern.permute.xlu0 1
    %3986 = vperm.xlu0 %3985, %v201
    %v3987 = vpop.permute.xlu0 %3986
    %3989 = vset.pattern.permute.xlu0 1
    %3990 = vperm.xlu0 %3989, %v202
    %v3991 = vpop.permute.xlu0 %3990
    %3993 = vset.pattern.permute.xlu0 1
    %3994 = vperm.xlu0 %3993, %v203
    %v3995 = vpop.permute.xlu0 %3994
    %3997 = vset.pattern.permute.xlu0 1
    %3998 = vperm.xlu0 %3997, %v204
    %v3999 = vpop.permute.xlu0 %3998
    %4001 = vset.pattern.permute.xlu0 1
    %4002 = vperm.xlu0 %4001, %v205
    %v4003 = vpop.permute.xlu0 %4002
    %4005 = vset.pattern.permute.xlu0 1
    %4006 = vperm.xlu0 %4005, %v206
    %v4007 = vpop.permute.xlu0 %4006
    %4009 = vset.pattern.permute.xlu0 1
    %4010 = vperm.xlu0 %4009, %v207
    %v4011 = vpop.permute.xlu0 %4010
    %4013 = vset.pattern.permute.xlu0 1
    %4014 = vperm.xlu0 %4013, %v208
    %v4015 = vpop.permute.xlu0 %4014
    %4017 = vset.pattern.permute.xlu0 1
    %4018 = vperm.xlu0 %4017, %v209
    %v4019 = vpop.permute.xlu0 %4018
    %4021 = vset.pattern.permute.xlu0 1
    %4022 = vperm.xlu0 %4021, %v210
    %v4023 = vpop.permute.xlu0 %4022
    %4025 = vset.pattern.permute.xlu0 1
    %4026 = vperm.xlu0 %4025, %v211
    %v4027 = vpop.permute.xlu0 %4026
    %4029 = vset.pattern.permute.xlu0 1
    %4030 = vperm.xlu0 %4029, %v212
    %v4031 = vpop.permute.xlu0 %4030
    %4033 = vset.pattern.permute.xlu0 1
    %4034 = vperm.xlu0 %4033, %v213
    %v4035 = vpop.permute.xlu0 %4034
    %4037 = vset.pattern.permute.xlu0 1
    %4038 = vperm.xlu0 %4037, %v214
    %v4039 = vpop.permute.xlu0 %4038
    %4041 = vset.pattern.permute.xlu0 1
    %4042 = vperm.xlu0 %4041, %v215
    %v4043 = vpop.permute.xlu0 %4042
    %4045 = vset.pattern.permute.xlu0 1
    %4046 = vperm.xlu0 %4045, %v216
    %v4047 = vpop.permute.xlu0 %4046
    %4049 = vset.pattern.permute.xlu0 1
    %4050 = vperm.xlu0 %4049, %v217
    %v4051 = vpop.permute.xlu0 %4050
    %4053 = vset.pattern.permute.xlu0 1
    %4054 = vperm.xlu0 %4053, %v218
    %v4055 = vpop.permute.xlu0 %4054
    %4057 = vset.pattern.permute.xlu0 1
    %4058 = vperm.xlu0 %4057, %v219
    %v4059 = vpop.permute.xlu0 %4058
    %4061 = vset.pattern.permute.xlu0 1
    %4062 = vperm.xlu0 %4061, %v220
    %v4063 = vpop.permute.xlu0 %4062
    %4065 = vset.pattern.permute.xlu0 1
    %4066 = vperm.xlu0 %4065, %v221
    %v4067 = vpop.permute.xlu0 %4066
    %4069 = vset.pattern.permute.xlu0 1
    %4070 = vperm.xlu0 %4069, %v222
    %v4071 = vpop.permute.xlu0 %4070
    %4073 = vset.pattern.permute.xlu0 1
    %4074 = vperm.xlu0 %4073, %v223
    %v4075 = vpop.permute.xlu0 %4074
    %4077 = vset.pattern.permute.xlu0 1
    %4078 = vperm.xlu0 %4077, %v224
    %v4079 = vpop.permute.xlu0 %4078
    %4081 = vset.pattern.permute.xlu0 1
    %4082 = vperm.xlu0 %4081, %v225
    %v4083 = vpop.permute.xlu0 %4082
    %4085 = vset.pattern.permute.xlu0 1
    %4086 = vperm.xlu0 %4085, %v226
    %v4087 = vpop.permute.xlu0 %4086
    %4089 = vset.pattern.permute.xlu0 1
    %4090 = vperm.xlu0 %4089, %v227
    %v4091 = vpop.permute.xlu0 %4090
    %4093 = vset.pattern.permute.xlu0 1
    %4094 = vperm.xlu0 %4093, %v228
    %v4095 = vpop.permute.xlu0 %4094
    %4097 = vset.pattern.permute.xlu0 1
    %4098 = vperm.xlu0 %4097, %v229
    %v4099 = vpop.permute.xlu0 %4098
    %4101 = vset.pattern.permute.xlu0 1
    %4102 = vperm.xlu0 %4101, %v230
    %v4103 = vpop.permute.xlu0 %4102
    %4105 = vset.pattern.permute.xlu0 1
    %4106 = vperm.xlu0 %4105, %v231
    %v4107 = vpop.permute.xlu0 %4106
    %4109 = vset.pattern.permute.xlu0 1
    %4110 = vperm.xlu0 %4109, %v232
    %v4111 = vpop.permute.xlu0 %4110
    %4113 = vset.pattern.permute.xlu0 1
    %4114 = vperm.xlu0 %4113, %v233
    %v4115 = vpop.permute.xlu0 %4114
    %4117 = vset.pattern.permute.xlu0 1
    %4118 = vperm.xlu0 %4117, %v234
    %v4119 = vpop.permute.xlu0 %4118
    %4121 = vset.pattern.permute.xlu0 1
    %4122 = vperm.xlu0 %4121, %v235
    %v4123 = vpop.permute.xlu0 %4122
    %4125 = vset.pattern.permute.xlu0 1
    %4126 = vperm.xlu0 %4125, %v236
    %v4127 = vpop.permute.xlu0 %4126
    %4129 = vset.pattern.permute.xlu0 1
    %4130 = vperm.xlu0 %4129, %v237
    %v4131 = vpop.permute.xlu0 %4130
    %4133 = vset.pattern.permute.xlu0 1
    %4134 = vperm.xlu0 %4133, %v238
    %v4135 = vpop.permute.xlu0 %4134
    %4137 = vset.pattern.permute.xlu0 1
    %4138 = vperm.xlu0 %4137, %v239
    %v4139 = vpop.permute.xlu0 %4138
    %4141 = vset.pattern.permute.xlu0 1
    %4142 = vperm.xlu0 %4141, %v240
    %v4143 = vpop.permute.xlu0 %4142
    %4145 = vset.pattern.permute.xlu0 1
    %4146 = vperm.xlu0 %4145, %v241
    %v4147 = vpop.permute.xlu0 %4146
    %4149 = vset.pattern.permute.xlu0 1
    %4150 = vperm.xlu0 %4149, %v242
    %v4151 = vpop.permute.xlu0 %4150
    %4153 = vset.pattern.permute.xlu0 1
    %4154 = vperm.xlu0 %4153, %v243
    %v4155 = vpop.permute.xlu0 %4154
    %4157 = vset.pattern.permute.xlu0 1
    %4158 = vperm.xlu0 %4157, %v244
    %v4159 = vpop.permute.xlu0 %4158
    %4161 = vset.pattern.permute.xlu0 1
    %4162 = vperm.xlu0 %4161, %v245
    %v4163 = vpop.permute.xlu0 %4162
    %4165 = vset.pattern.permute.xlu0 1
    %4166 = vperm.xlu0 %4165, %v246
    %v4167 = vpop.permute.xlu0 %4166
    %4169 = vset.pattern.permute.xlu0 1
    %4170 = vperm.xlu0 %4169, %v247
    %v4171 = vpop.permute.xlu0 %4170
    %4173 = vset.pattern.permute.xlu0 1
    %4174 = vperm.xlu0 %4173, %v248
    %v4175 = vpop.permute.xlu0 %4174
    %4177 = vset.pattern.permute.xlu0 1
    %4178 = vperm.xlu0 %4177, %v249
    %v4179 = vpop.permute.xlu0 %4178
    %v4181 = vmul.f32 %v3927, %v3861
    %v4182 = vmul.f32 %v3931, %v3862
    %v4183 = vmul.f32 %v3935, %v3863
    %v4184 = vmul.f32 %v3939, %v3864
    %v4185 = vmul.f32 %v3943, %v3865
    %v4186 = vmul.f32 %v3947, %v3866
    %v4187 = vmul.f32 %v3951, %v3867
    %v4188 = vmul.f32 %v3955, %v3868
    %v4189 = vmul.f32 %v3959, %v3869
    %v4190 = vmul.f32 %v3963, %v3870
    %v4191 = vmul.f32 %v3967, %v3871
    %v4192 = vmul.f32 %v3971, %v3872
    %v4193 = vmul.f32 %v3975, %v3873
    %v4194 = vmul.f32 %v3979, %v3874
    %v4195 = vmul.f32 %v3983, %v3875
    %v4196 = vmul.f32 %v3987, %v3876
    %v4197 = vmul.f32 %v3991, %v3877
    %v4198 = vmul.f32 %v3995, %v3878
    %v4199 = vmul.f32 %v3999, %v3879
    %v4200 = vmul.f32 %v4003, %v3880
    %v4201 = vmul.f32 %v4007, %v3881
    %v4202 = vmul.f32 %v4011, %v3882
    %v4203 = vmul.f32 %v4015, %v3883
    %v4204 = vmul.f32 %v4019, %v3884
    %v4205 = vmul.f32 %v4023, %v3885
    %v4206 = vmul.f32 %v4027, %v3886
    %v4207 = vmul.f32 %v4031, %v3887
    %v4208 = vmul.f32 %v4035, %v3888
    %v4209 = vmul.f32 %v4039, %v3889
    %v4210 = vmul.f32 %v4043, %v3890
    %v4211 = vmul.f32 %v4047, %v3891
    %v4212 = vmul.f32 %v4051, %v3892
    %v4213 = vmul.f32 %v4055, %v3893
    %v4214 = vmul.f32 %v4059, %v3894
    %v4215 = vmul.f32 %v4063, %v3895
    %v4216 = vmul.f32 %v4067, %v3896
    %v4217 = vmul.f32 %v4071, %v3897
    %v4218 = vmul.f32 %v4075, %v3898
    %v4219 = vmul.f32 %v4079, %v3899
    %v4220 = vmul.f32 %v4083, %v3900
    %v4221 = vmul.f32 %v4087, %v3901
    %v4222 = vmul.f32 %v4091, %v3902
    %v4223 = vmul.f32 %v4095, %v3903
    %v4224 = vmul.f32 %v4099, %v3904
    %v4225 = vmul.f32 %v4103, %v3905
    %v4226 = vmul.f32 %v4107, %v3906
    %v4227 = vmul.f32 %v4111, %v3907
    %v4228 = vmul.f32 %v4115, %v3908
    %v4229 = vmul.f32 %v4119, %v3909
    %v4230 = vmul.f32 %v4123, %v3910
    %v4231 = vmul.f32 %v4127, %v3911
    %v4232 = vmul.f32 %v4131, %v3912
    %v4233 = vmul.f32 %v4135, %v3913
    %v4234 = vmul.f32 %v4139, %v3914
    %v4235 = vmul.f32 %v4143, %v3915
    %v4236 = vmul.f32 %v4147, %v3916
    %v4237 = vmul.f32 %v4151, %v3917
    %v4238 = vmul.f32 %v4155, %v3918
    %v4239 = vmul.f32 %v4159, %v3919
    %v4240 = vmul.f32 %v4163, %v3920
    %v4241 = vmul.f32 %v4167, %v3921
    %v4242 = vmul.f32 %v4171, %v3922
    %v4243 = vmul.f32 %v4175, %v3923
    %v4244 = vmul.f32 %v4179, %v3924
    %v4245 = vld [vmem:[#allocation3] sm:$0x3]
    %4246 = vxpose.xlu0.b32.start [1/16] %v3861, 128
    %4247 = vxpose.xlu0.b32.cont [2/16] %v3862, 128
    %4248 = vxpose.xlu0.b32.cont [3/16] %v3863, 128
    %4249 = vxpose.xlu0.b32.cont [4/16] %v3864, 128
    %4250 = vxpose.xlu0.b32.cont [5/16] %v3865, 128
    %4251 = vxpose.xlu0.b32.cont [6/16] %v3866, 128
    %4252 = vxpose.xlu0.b32.cont [7/16] %v3867, 128
    %4253 = vxpose.xlu0.b32.cont [8/16] %v3868, 128
    %4254 = vxpose.xlu0.b32.cont [9/16] %v3869, 128
    %4255 = vxpose.xlu0.b32.cont [10/16] %v3870, 128
    %4256 = vxpose.xlu0.b32.cont [11/16] %v3871, 128
    %4257 = vxpose.xlu0.b32.cont [12/16] %v3872, 128
    %4258 = vxpose.xlu0.b32.cont [13/16] %v3873, 128
    %4259 = vxpose.xlu0.b32.cont [14/16] %v3874, 128
    %4260 = vxpose.xlu0.b32.cont [15/16] %v3875, 128
    %4261 = vxpose.xlu0.b32.end [16/16] %v3876, 128
    %v4262 = vpop.trf.xlu0
    %v4263 = vpop.trf.xlu0
    %v4264 = vpop.trf.xlu0
    %v4265 = vpop.trf.xlu0
    %v4266 = vpop.trf.xlu0
    %v4267 = vpop.trf.xlu0
    %v4268 = vpop.trf.xlu0
    %v4269 = vpop.trf.xlu0
    %v4270 = vpop.trf.xlu0
    %v4271 = vpop.trf.xlu0
    %v4272 = vpop.trf.xlu0
    %v4273 = vpop.trf.xlu0
    %v4274 = vpop.trf.xlu0
    %v4275 = vpop.trf.xlu0
    %v4276 = vpop.trf.xlu0
    %v4277 = vpop.trf.xlu0
    %4278 = vxpose.xlu0.b32.start [1/16] %v3877, 128
    %4279 = vxpose.xlu0.b32.cont [2/16] %v3878, 128
    %4280 = vxpose.xlu0.b32.cont [3/16] %v3879, 128
    %4281 = vxpose.xlu0.b32.cont [4/16] %v3880, 128
    %4282 = vxpose.xlu0.b32.cont [5/16] %v3881, 128
    %4283 = vxpose.xlu0.b32.cont [6/16] %v3882, 128
    %4284 = vxpose.xlu0.b32.cont [7/16] %v3883, 128
    %4285 = vxpose.xlu0.b32.cont [8/16] %v3884, 128
    %4286 = vxpose.xlu0.b32.cont [9/16] %v3885, 128
    %4287 = vxpose.xlu0.b32.cont [10/16] %v3886, 128
    %4288 = vxpose.xlu0.b32.cont [11/16] %v3887, 128
    %4289 = vxpose.xlu0.b32.cont [12/16] %v3888, 128
    %4290 = vxpose.xlu0.b32.cont [13/16] %v3889, 128
    %4291 = vxpose.xlu0.b32.cont [14/16] %v3890, 128
    %4292 = vxpose.xlu0.b32.cont [15/16] %v3891, 128
    %4293 = vxpose.xlu0.b32.end [16/16] %v3892, 128
    %v4294 = vpop.trf.xlu0
    %v4295 = vpop.trf.xlu0
    %v4296 = vpop.trf.xlu0
    %v4297 = vpop.trf.xlu0
    %v4298 = vpop.trf.xlu0
    %v4299 = vpop.trf.xlu0
    %v4300 = vpop.trf.xlu0
    %v4301 = vpop.trf.xlu0
    %v4302 = vpop.trf.xlu0
    %v4303 = vpop.trf.xlu0
    %v4304 = vpop.trf.xlu0
    %v4305 = vpop.trf.xlu0
    %v4306 = vpop.trf.xlu0
    %v4307 = vpop.trf.xlu0
    %v4308 = vpop.trf.xlu0
    %v4309 = vpop.trf.xlu0
    %4310 = vxpose.xlu0.b32.start [1/16] %v3893, 128
    %4311 = vxpose.xlu0.b32.cont [2/16] %v3894, 128
    %4312 = vxpose.xlu0.b32.cont [3/16] %v3895, 128
    %4313 = vxpose.xlu0.b32.cont [4/16] %v3896, 128
    %4314 = vxpose.xlu0.b32.cont [5/16] %v3897, 128
    %4315 = vxpose.xlu0.b32.cont [6/16] %v3898, 128
    %4316 = vxpose.xlu0.b32.cont [7/16] %v3899, 128
    %4317 = vxpose.xlu0.b32.cont [8/16] %v3900, 128
    %4318 = vxpose.xlu0.b32.cont [9/16] %v3901, 128
    %4319 = vxpose.xlu0.b32.cont [10/16] %v3902, 128
    %4320 = vxpose.xlu0.b32.cont [11/16] %v3903, 128
    %4321 = vxpose.xlu0.b32.cont [12/16] %v3904, 128
    %4322 = vxpose.xlu0.b32.cont [13/16] %v3905, 128
    %4323 = vxpose.xlu0.b32.cont [14/16] %v3906, 128
    %4324 = vxpose.xlu0.b32.cont [15/16] %v3907, 128
    %4325 = vxpose.xlu0.b32.end [16/16] %v3908, 128
    %v4326 = vpop.trf.xlu0
    %v4327 = vpop.trf.xlu0
    %v4328 = vpop.trf.xlu0
    %v4329 = vpop.trf.xlu0
    %v4330 = vpop.trf.xlu0
    %v4331 = vpop.trf.xlu0
    %v4332 = vpop.trf.xlu0
    %v4333 = vpop.trf.xlu0
    %v4334 = vpop.trf.xlu0
    %v4335 = vpop.trf.xlu0
    %v4336 = vpop.trf.xlu0
    %v4337 = vpop.trf.xlu0
    %v4338 = vpop.trf.xlu0
    %v4339 = vpop.trf.xlu0
    %v4340 = vpop.trf.xlu0
    %v4341 = vpop.trf.xlu0
    %4342 = vxpose.xlu0.b32.start [1/16] %v3909, 128
    %4343 = vxpose.xlu0.b32.cont [2/16] %v3910, 128
    %4344 = vxpose.xlu0.b32.cont [3/16] %v3911, 128
    %4345 = vxpose.xlu0.b32.cont [4/16] %v3912, 128
    %4346 = vxpose.xlu0.b32.cont [5/16] %v3913, 128
    %4347 = vxpose.xlu0.b32.cont [6/16] %v3914, 128
    %4348 = vxpose.xlu0.b32.cont [7/16] %v3915, 128
    %4349 = vxpose.xlu0.b32.cont [8/16] %v3916, 128
    %4350 = vxpose.xlu0.b32.cont [9/16] %v3917, 128
    %4351 = vxpose.xlu0.b32.cont [10/16] %v3918, 128
    %4352 = vxpose.xlu0.b32.cont [11/16] %v3919, 128
    %4353 = vxpose.xlu0.b32.cont [12/16] %v3920, 128
    %4354 = vxpose.xlu0.b32.cont [13/16] %v3921, 128
    %4355 = vxpose.xlu0.b32.cont [14/16] %v3922, 128
    %4356 = vxpose.xlu0.b32.cont [15/16] %v3923, 128
    %4357 = vxpose.xlu0.b32.end [16/16] %v3924, 128
    %v4358 = vpop.trf.xlu0
    %v4359 = vpop.trf.xlu0
    %v4360 = vpop.trf.xlu0
    %v4361 = vpop.trf.xlu0
    %v4362 = vpop.trf.xlu0
    %v4363 = vpop.trf.xlu0
    %v4364 = vpop.trf.xlu0
    %v4365 = vpop.trf.xlu0
    %v4366 = vpop.trf.xlu0
    %v4367 = vpop.trf.xlu0
    %v4368 = vpop.trf.xlu0
    %v4369 = vpop.trf.xlu0
    %v4370 = vpop.trf.xlu0
    %v4371 = vpop.trf.xlu0
    %v4372 = vpop.trf.xlu0
    %v4373 = vpop.trf.xlu0
    %4374 = vmatpush.msra.mxu0 %v2289
    %4375 = vmatpush.msra.mxu0 %v2288
    %4376 = vmatpush.msra.mxu0 %v2287
    %4377 = vmatpush.msra.mxu0 %v2286
    %4378 = vmatpush.msra.mxu0 %v2285
    %4379 = vmatpush.msra.mxu0 %v2284
    %4380 = vmatpush.msra.mxu0 %v2283
    %4381 = vmatpush.msra.mxu0 %v2282
    %4382 = vmatpush.msra.mxu0 %v2281
    %4383 = vmatpush.msra.mxu0 %v2280
    %4384 = vmatpush.msra.mxu0 %v2279
    %4385 = vmatpush.msra.mxu0 %v2278
    %4386 = vmatpush.msra.mxu0 %v2277
    %4387 = vmatpush.msra.mxu0 %v2276
    %4388 = vmatpush.msra.mxu0 %v2275
    %4389 = vmatpush.msra.mxu0 %v2274
    %4390 = vmatmul.f32.gmra.mxu0 %v4262
    %v4391 = vpop.f32.mrf.mxu0
    %v4392 = vadd.f32 0.0, %v4391
    %4393 = vdwg.mxu0
    %4394 = vmatpush.msra.mxu0 %v2305
    %4395 = vmatpush.msra.mxu0 %v2304
    %4396 = vmatpush.msra.mxu0 %v2303
    %4397 = vmatpush.msra.mxu0 %v2302
    %4398 = vmatpush.msra.mxu0 %v2301
    %4399 = vmatpush.msra.mxu0 %v2300
    %4400 = vmatpush.msra.mxu0 %v2299
    %4401 = vmatpush.msra.mxu0 %v2298
    %4402 = vmatpush.msra.mxu0 %v2297
    %4403 = vmatpush.msra.mxu0 %v2296
    %4404 = vmatpush.msra.mxu0 %v2295
    %4405 = vmatpush.msra.mxu0 %v2294
    %4406 = vmatpush.msra.mxu0 %v2293
    %4407 = vmatpush.msra.mxu0 %v2292
    %4408 = vmatpush.msra.mxu0 %v2291
    %4409 = vmatpush.msra.mxu0 %v2290
    %4410 = vmatmul.f32.gmra.mxu0 %v4294
    %v4411 = vpop.f32.mrf.mxu0
    %v4412 = vadd.f32 %v4392, %v4411
    %4413 = vdwg.mxu0
    %4414 = vmatpush.msra.mxu0 %v2321
    %4415 = vmatpush.msra.mxu0 %v2320
    %4416 = vmatpush.msra.mxu0 %v2319
    %4417 = vmatpush.msra.mxu0 %v2318
    %4418 = vmatpush.msra.mxu0 %v2317
    %4419 = vmatpush.msra.mxu0 %v2316
    %4420 = vmatpush.msra.mxu0 %v2315
    %4421 = vmatpush.msra.mxu0 %v2314
    %4422 = vmatpush.msra.mxu0 %v2313
    %4423 = vmatpush.msra.mxu0 %v2312
    %4424 = vmatpush.msra.mxu0 %v2311
    %4425 = vmatpush.msra.mxu0 %v2310
    %4426 = vmatpush.msra.mxu0 %v2309
    %4427 = vmatpush.msra.mxu0 %v2308
    %4428 = vmatpush.msra.mxu0 %v2307
    %4429 = vmatpush.msra.mxu0 %v2306
    %4430 = vmatmul.f32.gmra.mxu0 %v4326
    %v4431 = vpop.f32.mrf.mxu0
    %v4432 = vadd.f32 %v4412, %v4431
    %4433 = vdwg.mxu0
    %4434 = vmatpush.msra.mxu0 %v2337
    %4435 = vmatpush.msra.mxu0 %v2336
    %4436 = vmatpush.msra.mxu0 %v2335
    %4437 = vmatpush.msra.mxu0 %v2334
    %4438 = vmatpush.msra.mxu0 %v2333
    %4439 = vmatpush.msra.mxu0 %v2332
    %4440 = vmatpush.msra.mxu0 %v2331
    %4441 = vmatpush.msra.mxu0 %v2330
    %4442 = vmatpush.msra.mxu0 %v2329
    %4443 = vmatpush.msra.mxu0 %v2328
    %4444 = vmatpush.msra.mxu0 %v2327
    %4445 = vmatpush.msra.mxu0 %v2326
    %4446 = vmatpush.msra.mxu0 %v2325
    %4447 = vmatpush.msra.mxu0 %v2324
    %4448 = vmatpush.msra.mxu0 %v2323
    %4449 = vmatpush.msra.mxu0 %v2322
    %4450 = vmatmul.f32.gmra.mxu0 %v4358
    %v4451 = vpop.f32.mrf.mxu0
    %v4452 = vadd.f32 %v4432, %v4451
    %4453 = vdwg.mxu0
    %v4454 = vadd.f32 %v4245, %v4452
    %vm4455 = vcmask 254976
    %4456 = vst.msk [vmem:[#allocation3] sm:$0x3] %vm4455, %v4454
    %v4457 = vld [vmem:[#allocation4] sm:$0x3]
    %4458 = vmatpush.msra.mxu0 %v3876
    %4459 = vmatpush.msra.mxu0 %v3875
    %4460 = vmatpush.msra.mxu0 %v3874
    %4461 = vmatpush.msra.mxu0 %v3873
    %4462 = vmatpush.msra.mxu0 %v3872
    %4463 = vmatpush.msra.mxu0 %v3871
    %4464 = vmatpush.msra.mxu0 %v3870
    %4465 = vmatpush.msra.mxu0 %v3869
    %4466 = vmatpush.msra.mxu0 %v3868
    %4467 = vmatpush.msra.mxu0 %v3867
    %4468 = vmatpush.msra.mxu0 %v3866
    %4469 = vmatpush.msra.mxu0 %v3865
    %4470 = vmatpush.msra.mxu0 %v3864
    %4471 = vmatpush.msra.mxu0 %v3863
    %4472 = vmatpush.msra.mxu0 %v3862
    %4473 = vmatpush.msra.mxu0 %v3861
    %4474 = vmatmul.f32.gmra.mxu0 %v4262
    %v4475 = vpop.f32.mrf.mxu0
    %v4476 = vadd.f32 0.0, %v4475
    %4477 = vdwg.mxu0
    %4478 = vmatpush.msra.mxu0 %v3892
    %4479 = vmatpush.msra.mxu0 %v3891
    %4480 = vmatpush.msra.mxu0 %v3890
    %4481 = vmatpush.msra.mxu0 %v3889
    %4482 = vmatpush.msra.mxu0 %v3888
    %4483 = vmatpush.msra.mxu0 %v3887
    %4484 = vmatpush.msra.mxu0 %v3886
    %4485 = vmatpush.msra.mxu0 %v3885
    %4486 = vmatpush.msra.mxu0 %v3884
    %4487 = vmatpush.msra.mxu0 %v3883
    %4488 = vmatpush.msra.mxu0 %v3882
    %4489 = vmatpush.msra.mxu0 %v3881
    %4490 = vmatpush.msra.mxu0 %v3880
    %4491 = vmatpush.msra.mxu0 %v3879
    %4492 = vmatpush.msra.mxu0 %v3878
    %4493 = vmatpush.msra.mxu0 %v3877
    %4494 = vmatmul.f32.gmra.mxu0 %v4294
    %v4495 = vpop.f32.mrf.mxu0
    %v4496 = vadd.f32 %v4476, %v4495
    %4497 = vdwg.mxu0
    %4498 = vmatpush.msra.mxu0 %v3908
    %4499 = vmatpush.msra.mxu0 %v3907
    %4500 = vmatpush.msra.mxu0 %v3906
    %4501 = vmatpush.msra.mxu0 %v3905
    %4502 = vmatpush.msra.mxu0 %v3904
    %4503 = vmatpush.msra.mxu0 %v3903
    %4504 = vmatpush.msra.mxu0 %v3902
    %4505 = vmatpush.msra.mxu0 %v3901
    %4506 = vmatpush.msra.mxu0 %v3900
    %4507 = vmatpush.msra.mxu0 %v3899
    %4508 = vmatpush.msra.mxu0 %v3898
    %4509 = vmatpush.msra.mxu0 %v3897
    %4510 = vmatpush.msra.mxu0 %v3896
    %4511 = vmatpush.msra.mxu0 %v3895
    %4512 = vmatpush.msra.mxu0 %v3894
    %4513 = vmatpush.msra.mxu0 %v3893
    %4514 = vmatmul.f32.gmra.mxu0 %v4326
    %v4515 = vpop.f32.mrf.mxu0
    %v4516 = vadd.f32 %v4496, %v4515
    %4517 = vdwg.mxu0
    %4518 = vmatpush.msra.mxu0 %v3924
    %4519 = vmatpush.msra.mxu0 %v3923
    %4520 = vmatpush.msra.mxu0 %v3922
    %4521 = vmatpush.msra.mxu0 %v3921
    %4522 = vmatpush.msra.mxu0 %v3920
    %4523 = vmatpush.msra.mxu0 %v3919
    %4524 = vmatpush.msra.mxu0 %v3918
    %4525 = vmatpush.msra.mxu0 %v3917
    %4526 = vmatpush.msra.mxu0 %v3916
    %4527 = vmatpush.msra.mxu0 %v3915
    %4528 = vmatpush.msra.mxu0 %v3914
    %4529 = vmatpush.msra.mxu0 %v3913
    %4530 = vmatpush.msra.mxu0 %v3912
    %4531 = vmatpush.msra.mxu0 %v3911
    %4532 = vmatpush.msra.mxu0 %v3910
    %4533 = vmatpush.msra.mxu0 %v3909
    %4534 = vmatmul.f32.gmra.mxu0 %v4358
    %v4535 = vpop.f32.mrf.mxu0
    %v4536 = vadd.f32 %v4516, %v4535
    %4537 = vdwg.mxu0
    %v4538 = vadd.f32 %v4457, %v4536
    %vm4539 = vcmask 9216
    %4540 = vst.msk [vmem:[#allocation4] sm:$0x3] %vm4539, %v4538
    %v4541 = vld [vmem:[#allocation5] sm:$0xff]
    %v4542 = vpack.c.bf16 %v4182, %v4181
    %v4543 = vpack.c.bf16 %v4184, %v4183
    %v4544 = vpack.c.bf16 %v4186, %v4185
    %v4545 = vpack.c.bf16 %v4188, %v4187
    %v4546 = vpack.c.bf16 %v4190, %v4189
    %v4547 = vpack.c.bf16 %v4192, %v4191
    %v4548 = vpack.c.bf16 %v4194, %v4193
    %v4549 = vpack.c.bf16 %v4196, %v4195
    %v4550 = vpack.c.bf16 %v4198, %v4197
    %v4551 = vpack.c.bf16 %v4200, %v4199
    %v4552 = vpack.c.bf16 %v4202, %v4201
    %v4553 = vpack.c.bf16 %v4204, %v4203
    %v4554 = vpack.c.bf16 %v4206, %v4205
    %v4555 = vpack.c.bf16 %v4208, %v4207
    %v4556 = vpack.c.bf16 %v4210, %v4209
    %v4557 = vpack.c.bf16 %v4212, %v4211
    %v4558 = vpack.c.bf16 %v4214, %v4213
    %v4559 = vpack.c.bf16 %v4216, %v4215
    %v4560 = vpack.c.bf16 %v4218, %v4217
    %v4561 = vpack.c.bf16 %v4220, %v4219
    %v4562 = vpack.c.bf16 %v4222, %v4221
    %v4563 = vpack.c.bf16 %v4224, %v4223
    %v4564 = vpack.c.bf16 %v4226, %v4225
    %v4565 = vpack.c.bf16 %v4228, %v4227
    %v4566 = vpack.c.bf16 %v4230, %v4229
    %v4567 = vpack.c.bf16 %v4232, %v4231
    %v4568 = vpack.c.bf16 %v4234, %v4233
    %v4569 = vpack.c.bf16 %v4236, %v4235
    %v4570 = vpack.c.bf16 %v4238, %v4237
    %v4571 = vpack.c.bf16 %v4240, %v4239
    %v4572 = vpack.c.bf16 %v4242, %v4241
    %v4573 = vpack.c.bf16 %v4244, %v4243
    %4574 = vxpose.xlu0.c.b16.start [1/8] %v4542, 128
    %4575 = vxpose.xlu0.c.b16.cont [2/8] %v4543, 128
    %4576 = vxpose.xlu0.c.b16.cont [3/8] %v4544, 128
    %4577 = vxpose.xlu0.c.b16.cont [4/8] %v4545, 128
    %4578 = vxpose.xlu0.c.b16.cont [5/8] %v4546, 128
    %4579 = vxpose.xlu0.c.b16.cont [6/8] %v4547, 128
    %4580 = vxpose.xlu0.c.b16.cont [7/8] %v4548, 128
    %4581 = vxpose.xlu0.c.b16.end [8/8] %v4549, 128
    %v4582 = vpop.trf.xlu0
    %v4583 = vpop.trf.xlu0
    %v4584 = vpop.trf.xlu0
    %v4585 = vpop.trf.xlu0
    %v4586 = vpop.trf.xlu0
    %v4587 = vpop.trf.xlu0
    %v4588 = vpop.trf.xlu0
    %v4589 = vpop.trf.xlu0
    %4590 = vxpose.xlu0.c.b16.start [1/8] %v4550, 128
    %4591 = vxpose.xlu0.c.b16.cont [2/8] %v4551, 128
    %4592 = vxpose.xlu0.c.b16.cont [3/8] %v4552, 128
    %4593 = vxpose.xlu0.c.b16.cont [4/8] %v4553, 128
    %4594 = vxpose.xlu0.c.b16.cont [5/8] %v4554, 128
    %4595 = vxpose.xlu0.c.b16.cont [6/8] %v4555, 128
    %4596 = vxpose.xlu0.c.b16.cont [7/8] %v4556, 128
    %4597 = vxpose.xlu0.c.b16.end [8/8] %v4557, 128
    %v4598 = vpop.trf.xlu0
    %v4599 = vpop.trf.xlu0
    %v4600 = vpop.trf.xlu0
    %v4601 = vpop.trf.xlu0
    %v4602 = vpop.trf.xlu0
    %v4603 = vpop.trf.xlu0
    %v4604 = vpop.trf.xlu0
    %v4605 = vpop.trf.xlu0
    %4606 = vxpose.xlu0.c.b16.start [1/8] %v4558, 128
    %4607 = vxpose.xlu0.c.b16.cont [2/8] %v4559, 128
    %4608 = vxpose.xlu0.c.b16.cont [3/8] %v4560, 128
    %4609 = vxpose.xlu0.c.b16.cont [4/8] %v4561, 128
    %4610 = vxpose.xlu0.c.b16.cont [5/8] %v4562, 128
    %4611 = vxpose.xlu0.c.b16.cont [6/8] %v4563, 128
    %4612 = vxpose.xlu0.c.b16.cont [7/8] %v4564, 128
    %4613 = vxpose.xlu0.c.b16.end [8/8] %v4565, 128
    %v4614 = vpop.trf.xlu0
    %v4615 = vpop.trf.xlu0
    %v4616 = vpop.trf.xlu0
    %v4617 = vpop.trf.xlu0
    %v4618 = vpop.trf.xlu0
    %v4619 = vpop.trf.xlu0
    %v4620 = vpop.trf.xlu0
    %v4621 = vpop.trf.xlu0
    %4622 = vxpose.xlu0.c.b16.start [1/8] %v4566, 128
    %4623 = vxpose.xlu0.c.b16.cont [2/8] %v4567, 128
    %4624 = vxpose.xlu0.c.b16.cont [3/8] %v4568, 128
    %4625 = vxpose.xlu0.c.b16.cont [4/8] %v4569, 128
    %4626 = vxpose.xlu0.c.b16.cont [5/8] %v4570, 128
    %4627 = vxpose.xlu0.c.b16.cont [6/8] %v4571, 128
    %4628 = vxpose.xlu0.c.b16.cont [7/8] %v4572, 128
    %4629 = vxpose.xlu0.c.b16.end [8/8] %v4573, 128
    %v4630 = vpop.trf.xlu0
    %v4631 = vpop.trf.xlu0
    %v4632 = vpop.trf.xlu0
    %v4633 = vpop.trf.xlu0
    %v4634 = vpop.trf.xlu0
    %v4635 = vpop.trf.xlu0
    %v4636 = vpop.trf.xlu0
    %v4637 = vpop.trf.xlu0
    %4638 = vmatpush.bf16.msra.mxu0 %v790
    %4639 = vmatpush.bf16.msra.mxu0 %v786
    %4640 = vmatpush.bf16.msra.mxu0 %v782
    %4641 = vmatpush.bf16.msra.mxu0 %v778
    %4642 = vmatpush.bf16.msra.mxu0 %v774
    %4643 = vmatpush.bf16.msra.mxu0 %v770
    %4644 = vmatpush.bf16.msra.mxu0 %v766
    %4645 = vmatpush.bf16.msra.mxu0 %v762
    %4646 = vmatmul.bf16.gmra.mxu0 %v4582
    %v4647 = vpop.f32.mrf.mxu0
    %v4648 = vadd.f32 0.0, %v4647
    %v4649 = vpop.f32.mrf.mxu0
    %4650 = vdwg.mxu0
    %4651 = vmatpush.bf16.msra.mxu0 %v822
    %4652 = vmatpush.bf16.msra.mxu0 %v818
    %4653 = vmatpush.bf16.msra.mxu0 %v814
    %4654 = vmatpush.bf16.msra.mxu0 %v810
    %4655 = vmatpush.bf16.msra.mxu0 %v806
    %4656 = vmatpush.bf16.msra.mxu0 %v802
    %4657 = vmatpush.bf16.msra.mxu0 %v798
    %4658 = vmatpush.bf16.msra.mxu0 %v794
    %4659 = vmatmul.bf16.gmra.mxu0 %v4598
    %v4660 = vpop.f32.mrf.mxu0
    %v4661 = vadd.f32 %v4648, %v4660
    %v4662 = vpop.f32.mrf.mxu0
    %4663 = vdwg.mxu0
    %4664 = vmatpush.bf16.msra.mxu0 %v854
    %4665 = vmatpush.bf16.msra.mxu0 %v850
    %4666 = vmatpush.bf16.msra.mxu0 %v846
    %4667 = vmatpush.bf16.msra.mxu0 %v842
    %4668 = vmatpush.bf16.msra.mxu0 %v838
    %4669 = vmatpush.bf16.msra.mxu0 %v834
    %4670 = vmatpush.bf16.msra.mxu0 %v830
    %4671 = vmatpush.bf16.msra.mxu0 %v826
    %4672 = vmatmul.bf16.gmra.mxu0 %v4614
    %v4673 = vpop.f32.mrf.mxu0
    %v4674 = vadd.f32 %v4661, %v4673
    %v4675 = vpop.f32.mrf.mxu0
    %4676 = vdwg.mxu0
    %4677 = vmatpush.bf16.msra.mxu0 %v886
    %4678 = vmatpush.bf16.msra.mxu0 %v882
    %4679 = vmatpush.bf16.msra.mxu0 %v878
    %4680 = vmatpush.bf16.msra.mxu0 %v874
    %4681 = vmatpush.bf16.msra.mxu0 %v870
    %4682 = vmatpush.bf16.msra.mxu0 %v866
    %4683 = vmatpush.bf16.msra.mxu0 %v862
    %4684 = vmatpush.bf16.msra.mxu0 %v858
    %4685 = vmatmul.bf16.gmra.mxu0 %v4630
    %v4686 = vpop.f32.mrf.mxu0
    %v4687 = vadd.f32 %v4674, %v4686
    %v4688 = vpop.f32.mrf.mxu0
    %4689 = vdwg.mxu0
    %4690 = vmatpush.bf16.msra.mxu0 %v791
    %4691 = vmatpush.bf16.msra.mxu0 %v787
    %4692 = vmatpush.bf16.msra.mxu0 %v783
    %4693 = vmatpush.bf16.msra.mxu0 %v779
    %4694 = vmatpush.bf16.msra.mxu0 %v775
    %4695 = vmatpush.bf16.msra.mxu0 %v771
    %4696 = vmatpush.bf16.msra.mxu0 %v767
    %4697 = vmatpush.bf16.msra.mxu0 %v763
    %4698 = vmatmul.bf16.gmra.mxu0 %v4582
    %v4699 = vpop.f32.mrf.mxu0
    %v4700 = vadd.f32 0.0, %v4699
    %v4701 = vpop.f32.mrf.mxu0
    %4702 = vdwg.mxu0
    %4703 = vmatpush.bf16.msra.mxu0 %v823
    %4704 = vmatpush.bf16.msra.mxu0 %v819
    %4705 = vmatpush.bf16.msra.mxu0 %v815
    %4706 = vmatpush.bf16.msra.mxu0 %v811
    %4707 = vmatpush.bf16.msra.mxu0 %v807
    %4708 = vmatpush.bf16.msra.mxu0 %v803
    %4709 = vmatpush.bf16.msra.mxu0 %v799
    %4710 = vmatpush.bf16.msra.mxu0 %v795
    %4711 = vmatmul.bf16.gmra.mxu0 %v4598
    %v4712 = vpop.f32.mrf.mxu0
    %v4713 = vadd.f32 %v4700, %v4712
    %v4714 = vpop.f32.mrf.mxu0
    %4715 = vdwg.mxu0
    %4716 = vmatpush.bf16.msra.mxu0 %v855
    %4717 = vmatpush.bf16.msra.mxu0 %v851
    %4718 = vmatpush.bf16.msra.mxu0 %v847
    %4719 = vmatpush.bf16.msra.mxu0 %v843
    %4720 = vmatpush.bf16.msra.mxu0 %v839
    %4721 = vmatpush.bf16.msra.mxu0 %v835
    %4722 = vmatpush.bf16.msra.mxu0 %v831
    %4723 = vmatpush.bf16.msra.mxu0 %v827
    %4724 = vmatmul.bf16.gmra.mxu0 %v4614
    %v4725 = vpop.f32.mrf.mxu0
    %v4726 = vadd.f32 %v4713, %v4725
    %v4727 = vpop.f32.mrf.mxu0
    %4728 = vdwg.mxu0
    %4729 = vmatpush.bf16.msra.mxu0 %v887
    %4730 = vmatpush.bf16.msra.mxu0 %v883
    %4731 = vmatpush.bf16.msra.mxu0 %v879
    %4732 = vmatpush.bf16.msra.mxu0 %v875
    %4733 = vmatpush.bf16.msra.mxu0 %v871
    %4734 = vmatpush.bf16.msra.mxu0 %v867
    %4735 = vmatpush.bf16.msra.mxu0 %v863
    %4736 = vmatpush.bf16.msra.mxu0 %v859
    %4737 = vmatmul.bf16.gmra.mxu0 %v4630
    %v4738 = vpop.f32.mrf.mxu0
    %v4739 = vadd.f32 %v4726, %v4738
    %v4740 = vpop.f32.mrf.mxu0
    %4741 = vdwg.mxu0
    %4742 = vmatpush.bf16.msra.mxu0 %v792
    %4743 = vmatpush.bf16.msra.mxu0 %v788
    %4744 = vmatpush.bf16.msra.mxu0 %v784
    %4745 = vmatpush.bf16.msra.mxu0 %v780
    %4746 = vmatpush.bf16.msra.mxu0 %v776
    %4747 = vmatpush.bf16.msra.mxu0 %v772
    %4748 = vmatpush.bf16.msra.mxu0 %v768
    %4749 = vmatpush.bf16.msra.mxu0 %v764
    %4750 = vmatmul.bf16.gmra.mxu0 %v4582
    %v4751 = vpop.f32.mrf.mxu0
    %v4752 = vadd.f32 0.0, %v4751
    %v4753 = vpop.f32.mrf.mxu0
    %4754 = vdwg.mxu0
    %4755 = vmatpush.bf16.msra.mxu0 %v824
    %4756 = vmatpush.bf16.msra.mxu0 %v820
    %4757 = vmatpush.bf16.msra.mxu0 %v816
    %4758 = vmatpush.bf16.msra.mxu0 %v812
    %4759 = vmatpush.bf16.msra.mxu0 %v808
    %4760 = vmatpush.bf16.msra.mxu0 %v804
    %4761 = vmatpush.bf16.msra.mxu0 %v800
    %4762 = vmatpush.bf16.msra.mxu0 %v796
    %4763 = vmatmul.bf16.gmra.mxu0 %v4598
    %v4764 = vpop.f32.mrf.mxu0
    %v4765 = vadd.f32 %v4752, %v4764
    %v4766 = vpop.f32.mrf.mxu0
    %4767 = vdwg.mxu0
    %4768 = vmatpush.bf16.msra.mxu0 %v856
    %4769 = vmatpush.bf16.msra.mxu0 %v852
    %4770 = vmatpush.bf16.msra.mxu0 %v848
    %4771 = vmatpush.bf16.msra.mxu0 %v844
    %4772 = vmatpush.bf16.msra.mxu0 %v840
    %4773 = vmatpush.bf16.msra.mxu0 %v836
    %4774 = vmatpush.bf16.msra.mxu0 %v832
    %4775 = vmatpush.bf16.msra.mxu0 %v828
    %4776 = vmatmul.bf16.gmra.mxu0 %v4614
    %v4777 = vpop.f32.mrf.mxu0
    %v4778 = vadd.f32 %v4765, %v4777
    %v4779 = vpop.f32.mrf.mxu0
    %4780 = vdwg.mxu0
    %4781 = vmatpush.bf16.msra.mxu0 %v888
    %4782 = vmatpush.bf16.msra.mxu0 %v884
    %4783 = vmatpush.bf16.msra.mxu0 %v880
    %4784 = vmatpush.bf16.msra.mxu0 %v876
    %4785 = vmatpush.bf16.msra.mxu0 %v872
    %4786 = vmatpush.bf16.msra.mxu0 %v868
    %4787 = vmatpush.bf16.msra.mxu0 %v864
    %4788 = vmatpush.bf16.msra.mxu0 %v860
    %4789 = vmatmul.bf16.gmra.mxu0 %v4630
    %v4790 = vpop.f32.mrf.mxu0
    %v4791 = vadd.f32 %v4778, %v4790
    %v4792 = vpop.f32.mrf.mxu0
    %4793 = vdwg.mxu0
    %4794 = vmatpush.bf16.msra.mxu0 %v793
    %4795 = vmatpush.bf16.msra.mxu0 %v789
    %4796 = vmatpush.bf16.msra.mxu0 %v785
    %4797 = vmatpush.bf16.msra.mxu0 %v781
    %4798 = vmatpush.bf16.msra.mxu0 %v777
    %4799 = vmatpush.bf16.msra.mxu0 %v773
    %4800 = vmatpush.bf16.msra.mxu0 %v769
    %4801 = vmatpush.bf16.msra.mxu0 %v765
    %4802 = vmatmul.bf16.gmra.mxu0 %v4582
    %v4803 = vpop.f32.mrf.mxu0
    %v4804 = vadd.f32 0.0, %v4803
    %v4805 = vpop.f32.mrf.mxu0
    %4806 = vdwg.mxu0
    %4807 = vmatpush.bf16.msra.mxu0 %v825
    %4808 = vmatpush.bf16.msra.mxu0 %v821
    %4809 = vmatpush.bf16.msra.mxu0 %v817
    %4810 = vmatpush.bf16.msra.mxu0 %v813
    %4811 = vmatpush.bf16.msra.mxu0 %v809
    %4812 = vmatpush.bf16.msra.mxu0 %v805
    %4813 = vmatpush.bf16.msra.mxu0 %v801
    %4814 = vmatpush.bf16.msra.mxu0 %v797
    %4815 = vmatmul.bf16.gmra.mxu0 %v4598
    %v4816 = vpop.f32.mrf.mxu0
    %v4817 = vadd.f32 %v4804, %v4816
    %v4818 = vpop.f32.mrf.mxu0
    %4819 = vdwg.mxu0
    %4820 = vmatpush.bf16.msra.mxu0 %v857
    %4821 = vmatpush.bf16.msra.mxu0 %v853
    %4822 = vmatpush.bf16.msra.mxu0 %v849
    %4823 = vmatpush.bf16.msra.mxu0 %v845
    %4824 = vmatpush.bf16.msra.mxu0 %v841
    %4825 = vmatpush.bf16.msra.mxu0 %v837
    %4826 = vmatpush.bf16.msra.mxu0 %v833
    %4827 = vmatpush.bf16.msra.mxu0 %v829
    %4828 = vmatmul.bf16.gmra.mxu0 %v4614
    %v4829 = vpop.f32.mrf.mxu0
    %v4830 = vadd.f32 %v4817, %v4829
    %v4831 = vpop.f32.mrf.mxu0
    %4832 = vdwg.mxu0
    %4833 = vmatpush.bf16.msra.mxu0 %v889
    %4834 = vmatpush.bf16.msra.mxu0 %v885
    %4835 = vmatpush.bf16.msra.mxu0 %v881
    %4836 = vmatpush.bf16.msra.mxu0 %v877
    %4837 = vmatpush.bf16.msra.mxu0 %v873
    %4838 = vmatpush.bf16.msra.mxu0 %v869
    %4839 = vmatpush.bf16.msra.mxu0 %v865
    %4840 = vmatpush.bf16.msra.mxu0 %v861
    %4841 = vmatmul.bf16.gmra.mxu0 %v4630
    %v4842 = vpop.f32.mrf.mxu0
    %v4843 = vadd.f32 %v4830, %v4842
    %v4844 = vpop.f32.mrf.mxu0
    %4845 = vdwg.mxu0
    %v4850 = vrot.slane %v4739, 6
    %v4851 = vrot.slane %v4791, 4
    %v4852 = vrot.slane %v4843, 2
    %vm4853 = vcmask 1041408
    %v4854 = vsel %vm4853, %v4687, %v4850
    %vm4855 = vcmask 1045508
    %v4856 = vsel %vm4855, %v4851, %v4852
    %vm4857 = vcmask 1043456
    %v4858 = vsel %vm4857, %v4854, %v4856
    %v4860 = vadd.f32 %v4541, %v4858
    %4861 = vst [vmem:[#allocation5] sm:$0xff] %v4860
    %4862 = vxpose.xlu0.b32.start [1/16] %v4181, 128
    %4863 = vxpose.xlu0.b32.cont [2/16] %v4182, 128
    %4864 = vxpose.xlu0.b32.cont [3/16] %v4183, 128
    %4865 = vxpose.xlu0.b32.cont [4/16] %v4184, 128
    %4866 = vxpose.xlu0.b32.cont [5/16] %v4185, 128
    %4867 = vxpose.xlu0.b32.cont [6/16] %v4186, 128
    %4868 = vxpose.xlu0.b32.cont [7/16] %v4187, 128
    %4869 = vxpose.xlu0.b32.cont [8/16] %v4188, 128
    %4870 = vxpose.xlu0.b32.cont [9/16] %v4189, 128
    %4871 = vxpose.xlu0.b32.cont [10/16] %v4190, 128
    %4872 = vxpose.xlu0.b32.cont [11/16] %v4191, 128
    %4873 = vxpose.xlu0.b32.cont [12/16] %v4192, 128
    %4874 = vxpose.xlu0.b32.cont [13/16] %v4193, 128
    %4875 = vxpose.xlu0.b32.cont [14/16] %v4194, 128
    %4876 = vxpose.xlu0.b32.cont [15/16] %v4195, 128
    %4877 = vxpose.xlu0.b32.end [16/16] %v4196, 128
    %v4878 = vpop.trf.xlu0
    %v4879 = vpop.trf.xlu0
    %v4880 = vpop.trf.xlu0
    %v4881 = vpop.trf.xlu0
    %v4882 = vpop.trf.xlu0
    %v4883 = vpop.trf.xlu0
    %v4884 = vpop.trf.xlu0
    %v4885 = vpop.trf.xlu0
    %v4886 = vpop.trf.xlu0
    %v4887 = vpop.trf.xlu0
    %v4888 = vpop.trf.xlu0
    %v4889 = vpop.trf.xlu0
    %v4890 = vpop.trf.xlu0
    %v4891 = vpop.trf.xlu0
    %v4892 = vpop.trf.xlu0
    %v4893 = vpop.trf.xlu0
    %4894 = vxpose.xlu0.b32.start [1/16] %v4197, 128
    %4895 = vxpose.xlu0.b32.cont [2/16] %v4198, 128
    %4896 = vxpose.xlu0.b32.cont [3/16] %v4199, 128
    %4897 = vxpose.xlu0.b32.cont [4/16] %v4200, 128
    %4898 = vxpose.xlu0.b32.cont [5/16] %v4201, 128
    %4899 = vxpose.xlu0.b32.cont [6/16] %v4202, 128
    %4900 = vxpose.xlu0.b32.cont [7/16] %v4203, 128
    %4901 = vxpose.xlu0.b32.cont [8/16] %v4204, 128
    %4902 = vxpose.xlu0.b32.cont [9/16] %v4205, 128
    %4903 = vxpose.xlu0.b32.cont [10/16] %v4206, 128
    %4904 = vxpose.xlu0.b32.cont [11/16] %v4207, 128
    %4905 = vxpose.xlu0.b32.cont [12/16] %v4208, 128
    %4906 = vxpose.xlu0.b32.cont [13/16] %v4209, 128
    %4907 = vxpose.xlu0.b32.cont [14/16] %v4210, 128
    %4908 = vxpose.xlu0.b32.cont [15/16] %v4211, 128
    %4909 = vxpose.xlu0.b32.end [16/16] %v4212, 128
    %v4910 = vpop.trf.xlu0
    %v4911 = vpop.trf.xlu0
    %v4912 = vpop.trf.xlu0
    %v4913 = vpop.trf.xlu0
    %v4914 = vpop.trf.xlu0
    %v4915 = vpop.trf.xlu0
    %v4916 = vpop.trf.xlu0
    %v4917 = vpop.trf.xlu0
    %v4918 = vpop.trf.xlu0
    %v4919 = vpop.trf.xlu0
    %v4920 = vpop.trf.xlu0
    %v4921 = vpop.trf.xlu0
    %v4922 = vpop.trf.xlu0
    %v4923 = vpop.trf.xlu0
    %v4924 = vpop.trf.xlu0
    %v4925 = vpop.trf.xlu0
    %4926 = vxpose.xlu0.b32.start [1/16] %v4213, 128
    %4927 = vxpose.xlu0.b32.cont [2/16] %v4214, 128
    %4928 = vxpose.xlu0.b32.cont [3/16] %v4215, 128
    %4929 = vxpose.xlu0.b32.cont [4/16] %v4216, 128
    %4930 = vxpose.xlu0.b32.cont [5/16] %v4217, 128
    %4931 = vxpose.xlu0.b32.cont [6/16] %v4218, 128
    %4932 = vxpose.xlu0.b32.cont [7/16] %v4219, 128
    %4933 = vxpose.xlu0.b32.cont [8/16] %v4220, 128
    %4934 = vxpose.xlu0.b32.cont [9/16] %v4221, 128
    %4935 = vxpose.xlu0.b32.cont [10/16] %v4222, 128
    %4936 = vxpose.xlu0.b32.cont [11/16] %v4223, 128
    %4937 = vxpose.xlu0.b32.cont [12/16] %v4224, 128
    %4938 = vxpose.xlu0.b32.cont [13/16] %v4225, 128
    %4939 = vxpose.xlu0.b32.cont [14/16] %v4226, 128
    %4940 = vxpose.xlu0.b32.cont [15/16] %v4227, 128
    %4941 = vxpose.xlu0.b32.end [16/16] %v4228, 128
    %v4942 = vpop.trf.xlu0
    %v4943 = vpop.trf.xlu0
    %v4944 = vpop.trf.xlu0
    %v4945 = vpop.trf.xlu0
    %v4946 = vpop.trf.xlu0
    %v4947 = vpop.trf.xlu0
    %v4948 = vpop.trf.xlu0
    %v4949 = vpop.trf.xlu0
    %v4950 = vpop.trf.xlu0
    %v4951 = vpop.trf.xlu0
    %v4952 = vpop.trf.xlu0
    %v4953 = vpop.trf.xlu0
    %v4954 = vpop.trf.xlu0
    %v4955 = vpop.trf.xlu0
    %v4956 = vpop.trf.xlu0
    %v4957 = vpop.trf.xlu0
    %4958 = vxpose.xlu0.b32.start [1/16] %v4229, 128
    %4959 = vxpose.xlu0.b32.cont [2/16] %v4230, 128
    %4960 = vxpose.xlu0.b32.cont [3/16] %v4231, 128
    %4961 = vxpose.xlu0.b32.cont [4/16] %v4232, 128
    %4962 = vxpose.xlu0.b32.cont [5/16] %v4233, 128
    %4963 = vxpose.xlu0.b32.cont [6/16] %v4234, 128
    %4964 = vxpose.xlu0.b32.cont [7/16] %v4235, 128
    %4965 = vxpose.xlu0.b32.cont [8/16] %v4236, 128
    %4966 = vxpose.xlu0.b32.cont [9/16] %v4237, 128
    %4967 = vxpose.xlu0.b32.cont [10/16] %v4238, 128
    %4968 = vxpose.xlu0.b32.cont [11/16] %v4239, 128
    %4969 = vxpose.xlu0.b32.cont [12/16] %v4240, 128
    %4970 = vxpose.xlu0.b32.cont [13/16] %v4241, 128
    %4971 = vxpose.xlu0.b32.cont [14/16] %v4242, 128
    %4972 = vxpose.xlu0.b32.cont [15/16] %v4243, 128
    %4973 = vxpose.xlu0.b32.end [16/16] %v4244, 128
    %v4974 = vpop.trf.xlu0
    %v4975 = vpop.trf.xlu0
    %v4976 = vpop.trf.xlu0
    %v4977 = vpop.trf.xlu0
    %v4978 = vpop.trf.xlu0
    %v4979 = vpop.trf.xlu0
    %v4980 = vpop.trf.xlu0
    %v4981 = vpop.trf.xlu0
    %v4982 = vpop.trf.xlu0
    %v4983 = vpop.trf.xlu0
    %v4984 = vpop.trf.xlu0
    %v4985 = vpop.trf.xlu0
    %v4986 = vpop.trf.xlu0
    %v4987 = vpop.trf.xlu0
    %v4988 = vpop.trf.xlu0
    %v4989 = vpop.trf.xlu0
    %v4994 = vrot.slane %v4910, 6
    %v4995 = vrot.slane %v4942, 4
    %v4996 = vrot.slane %v4974, 2
    %v4997 = vsel %vm4853, %v4878, %v4994
    %v4998 = vsel %vm4855, %v4995, %v4996
    %v4999 = vsel %vm4857, %v4997, %v4998
    %5001 = vst [vmem:[#allocation2] sm:$0xff] %v4999
    // Predicated region
    $region42: #{tpu_custom_call.1} parent=1 // pred_check
      %p5002 = pneg %p49
    $region43: #{tpu_custom_call.1} parent=1 // pred_check_branch
      %5004 = sbr.rel (%p5002) target = $region45
    $region44: #{tpu_custom_call.1} parent=1 // pred_region
      %v5005 = vld [vmem:[#allocation4] sm:$0x3]
      %v5006 = vld [vmem:[#allocation5] sm:$0xff]
      %v5007 = vld [vmem:[#allocation2] sm:$0xff]
      %5009 = vst [vmem:[#allocation1] ss:$4 sm:$0xff] %v5006
      %v5010 = vld.sshfl [vmem:[#allocation1] sm:$0xff pattern:$0x73625140]
      %v5011 = vld.sshfl [vmem:[#allocation1 + $0x8] sm:$0xff pattern:$0x73625140]
      %v5012 = vld.sshfl [vmem:[#allocation1 + $0x10] sm:$0xff pattern:$0x73625140]
      %v5013 = vld.sshfl [vmem:[#allocation1 + $0x18] sm:$0xff pattern:$0x73625140]
      %5019 = vst [vmem:[#allocation1] ss:$4 sm:$0xff] %v5007
      %v5020 = vld.sshfl [vmem:[#allocation1] sm:$0xff pattern:$0x73625140]
      %v5021 = vld.sshfl [vmem:[#allocation1 + $0x8] sm:$0xff pattern:$0x73625140]
      %v5022 = vld.sshfl [vmem:[#allocation1 + $0x10] sm:$0xff pattern:$0x73625140]
      %v5023 = vld.sshfl [vmem:[#allocation1 + $0x18] sm:$0xff pattern:$0x73625140]
      %5028 = vmatpush.xpose.msra.mxu0 0.0
      %5029 = vmatpush.xpose.msra.mxu0 0.0
      %5030 = vmatpush.xpose.msra.mxu0 0.0
      %5031 = vmatpush.xpose.msra.mxu0 0.0
      %5032 = vmatpush.xpose.msra.mxu0 0.0
      %5033 = vmatpush.xpose.msra.mxu0 0.0
      %5034 = vmatpush.xpose.msra.mxu0 0.0
      %5035 = vmatpush.xpose.msra.mxu0 0.0
      %5036 = vmatpush.xpose.msra.mxu0 0.0
      %5037 = vmatpush.xpose.msra.mxu0 0.0
      %5038 = vmatpush.xpose.msra.mxu0 0.0
      %5039 = vmatpush.xpose.msra.mxu0 0.0
      %5040 = vmatpush.xpose.msra.mxu0 0.0
      %5041 = vmatpush.xpose.msra.mxu0 0.0
      %5042 = vmatpush.xpose.msra.mxu0 0.0
      %5043 = vmatpush.xpose.msra.mxu0 %v5020
      %5044 = vmatmul.f32.gmra.mxu0 %v5010
      %v5045 = vpop.f32.mrf.mxu0
      %v5046 = vadd.f32 0.0, %v5045
      %5047 = vdwg.mxu0
      %5048 = vmatpush.xpose.msra.mxu0 0.0
      %5049 = vmatpush.xpose.msra.mxu0 0.0
      %5050 = vmatpush.xpose.msra.mxu0 0.0
      %5051 = vmatpush.xpose.msra.mxu0 0.0
      %5052 = vmatpush.xpose.msra.mxu0 0.0
      %5053 = vmatpush.xpose.msra.mxu0 0.0
      %5054 = vmatpush.xpose.msra.mxu0 0.0
      %5055 = vmatpush.xpose.msra.mxu0 0.0
      %5056 = vmatpush.xpose.msra.mxu0 0.0
      %5057 = vmatpush.xpose.msra.mxu0 0.0
      %5058 = vmatpush.xpose.msra.mxu0 0.0
      %5059 = vmatpush.xpose.msra.mxu0 0.0
      %5060 = vmatpush.xpose.msra.mxu0 0.0
      %5061 = vmatpush.xpose.msra.mxu0 0.0
      %5062 = vmatpush.xpose.msra.mxu0 0.0
      %5063 = vmatpush.xpose.msra.mxu0 %v5021
      %5064 = vmatmul.f32.gmra.mxu0 %v5011
      %v5065 = vpop.f32.mrf.mxu0
      %v5066 = vadd.f32 %v5046, %v5065
      %5067 = vdwg.mxu0
      %5068 = vmatpush.xpose.msra.mxu0 0.0
      %5069 = vmatpush.xpose.msra.mxu0 0.0
      %5070 = vmatpush.xpose.msra.mxu0 0.0
      %5071 = vmatpush.xpose.msra.mxu0 0.0
      %5072 = vmatpush.xpose.msra.mxu0 0.0
      %5073 = vmatpush.xpose.msra.mxu0 0.0
      %5074 = vmatpush.xpose.msra.mxu0 0.0
      %5075 = vmatpush.xpose.msra.mxu0 0.0
      %5076 = vmatpush.xpose.msra.mxu0 0.0
      %5077 = vmatpush.xpose.msra.mxu0 0.0
      %5078 = vmatpush.xpose.msra.mxu0 0.0
      %5079 = vmatpush.xpose.msra.mxu0 0.0
      %5080 = vmatpush.xpose.msra.mxu0 0.0
      %5081 = vmatpush.xpose.msra.mxu0 0.0
      %5082 = vmatpush.xpose.msra.mxu0 0.0
      %5083 = vmatpush.xpose.msra.mxu0 %v5022
      %5084 = vmatmul.f32.gmra.mxu0 %v5012
      %v5085 = vpop.f32.mrf.mxu0
      %v5086 = vadd.f32 %v5066, %v5085
      %5087 = vdwg.mxu0
      %5088 = vmatpush.xpose.msra.mxu0 0.0
      %5089 = vmatpush.xpose.msra.mxu0 0.0
      %5090 = vmatpush.xpose.msra.mxu0 0.0
      %5091 = vmatpush.xpose.msra.mxu0 0.0
      %5092 = vmatpush.xpose.msra.mxu0 0.0
      %5093 = vmatpush.xpose.msra.mxu0 0.0
      %5094 = vmatpush.xpose.msra.mxu0 0.0
      %5095 = vmatpush.xpose.msra.mxu0 0.0
      %5096 = vmatpush.xpose.msra.mxu0 0.0
      %5097 = vmatpush.xpose.msra.mxu0 0.0
      %5098 = vmatpush.xpose.msra.mxu0 0.0
      %5099 = vmatpush.xpose.msra.mxu0 0.0
      %5100 = vmatpush.xpose.msra.mxu0 0.0
      %5101 = vmatpush.xpose.msra.mxu0 0.0
      %5102 = vmatpush.xpose.msra.mxu0 0.0
      %5103 = vmatpush.xpose.msra.mxu0 %v5023
      %5104 = vmatmul.f32.gmra.mxu0 %v5013
      %v5105 = vpop.f32.mrf.mxu0
      %v5106 = vadd.f32 %v5086, %v5105
      %5107 = vdwg.mxu0
      %v5108 = vsub.f32 %v5005, %v5106
      %v5109 = vand.u32 2147483647, %v5108
      %v5110 = vsel %vm4539, %v5109, 0.0
      %5111 = vadd.xlane.f32.xlu0 %v5110
      %v5112 = vpop.xlane.xlu0 %5111
      %v5113 = vmax.f32 %v5112, 1e-12
      %v5114 = vrcp.pop %v5113
      %v5115 = vmul.f32 %v5113, %v5114
      %v5116 = vsub.f32 1.0, %v5115
      %v5117 = vmul.f32 %v5114, %v5116
      %v5118 = vadd.f32 %v5114, %v5117
      %vm5119 = vweird.f32 %v5113
      %vm5120 = vweird.f32 %v5114
      %vm5121 = vmor %vm5119, %vm5120
      %v5122 = vsel %vm5121, %v5114, %v5118
      %v5123 = vand.u32 2147483647, %v5113
      %vm5124 = vcmp.eq.f32.partialorder %v5123, 8.507059e+37
      %v5125 = vand.u32 %v5113, 2147483648
      %v5126 = vor.u32 1.1754944e-38, %v5125
      %v5127 = vsel %vm5124, %v5126, %v5122
      %v5128 = vmul.f32 %v5108, %v5127
      %v5129 = vlaneseq
      %v5130 = vshrl.u32 %v5129, 7
      %v5131 = vlaneseq
      %v5132 = vand.u32 %v5131, 127
      %vm5133 = vcmp.eq.s32.totalorder %v5130, %v5132
      %v5134 = vsel %vm5133, 1, 0
      %v5135 = vcvt.s32.f32 %v5134
      %v5136 = vmul.f32 %v5128, %v5135
      %v5137 = vsel %vm4539, %v5136, 0.0
      %5138 = vadd.xlane.f32.xlu0 %v5137
      %v5139 = vpop.xlane.xlu0 %5138
      %v5140 = vsub.f32 %v5139, 1.0
      %v5141 = vmul.f32 %v5140, %v5140
      %vm5142 = vcmask 1024
      %v5143 = vsel %vm5142, %v5141, 0.0
      %5144 = vadd.xlane.f32.xlu0 %v5143
      %v5145 = vpop.xlane.xlu0 %5144
      %v5146 = vrot.slane %v5145, 4
      %v5147 = vadd.f32 %v5145, %v5146
      %v5148 = vrot.slane %v5147, 2
      %v5149 = vadd.f32 %v5147, %v5148
      %v5150 = vrot.slane %v5149, 1
      %v5151 = vadd.f32 %v5149, %v5150
      %s5152 = vtos %v5151
      %v5153 = vrcp.pop 2.0
      %v5154 = vmul.f32 2.0, %v5153
      %v5155 = vsub.f32 1.0, %v5154
      %v5156 = vmul.f32 %v5153, %v5155
      %v5157 = vadd.f32 %v5153, %v5156
      %vm5158 = vweird.f32 %v5153
      %v5159 = vsel %vm5158, %v5153, %v5157
      %s5160 = vtos %v5159
      %s5161 = smul.f32 %s5152, %s5160
      %v5162 = vstv %s5161
      %vm5163 = vcmask 0
      %5164 = vst.msk [vmem:[#allocation10] sm:$0x1] %vm5163, %v5162
      %v5165 = vld [vmem:[#allocation3] sm:$0x3]
      %v5166 = vsel %vm4455, %v5165, 0.0
      %v5167 = vrot.slane %v5166, 4
      %v5168 = vadd.f32 %v5166, %v5167
      %v5169 = vrot.slane %v5168, 2
      %v5170 = vadd.f32 %v5168, %v5169
      %v5171 = vrot.slane %v5170, 1
      %v5172 = vadd.f32 %v5170, %v5171
      %v5173 = vrcp.pop 2.0
      %v5174 = vmul.f32 2.0, %v5173
      %v5175 = vsub.f32 1.0, %v5174
      %v5176 = vmul.f32 %v5173, %v5175
      %v5177 = vadd.f32 %v5173, %v5176
      %vm5178 = vweird.f32 %v5173
      %v5179 = vsel %vm5178, %v5173, %v5177
      %v5180 = vmul.f32 %v5172, %v5179
      %vm5181 = vcmask 253952
      %5182 = vst.msk [vmem:[#allocation9] sm:$0x1] %vm5181, %v5180
    $region45: #{tpu_custom_call.1} parent=1 // pred_fallthru
      _
    // Predicated region
    $region46: #{tpu_custom_call.1} parent=1 // pred_check
      _
    $region47: #{tpu_custom_call.1} parent=1 // pred_check_branch
      %5184 = sbr.rel (0) target = $region49
    $region48: #{tpu_custom_call.1} parent=1 // pred_region
      %5186 = vsyncadd [#allocation8], 0
      %s5188 = sshll.u32 [#allocation9], 4
      %s5189 = int_to_ptr.vmem [resolvable:$true] %s5188
      %s5190 = sshll.u32 %s8, 4
      %s5191 = int_to_ptr.hbm [resolvable:$true] %s5190
      %5193 = dma.vmem_to_hbm [thread:$0]  %s5189, 16, %s5191, [#allocation8]
    $region49: #{tpu_custom_call.1} parent=1 // pred_fallthru
      _
    // Predicated region
    $region50: #{tpu_custom_call.1} parent=1 // pred_check
      _
    $region51: #{tpu_custom_call.1} parent=1 // pred_check_branch
      %5195 = sbr.rel (0) target = $region53
    $region52: #{tpu_custom_call.1} parent=1 // pred_region
      %5197 = vsyncadd [#allocation11], 0
      %s5199 = sshll.u32 [#allocation10], 4
      %s5200 = int_to_ptr.vmem [resolvable:$true] %s5199
      %s5201 = sshll.u32 %s9, 4
      %s5202 = int_to_ptr.hbm [resolvable:$true] %s5201
      %5204 = dma.vmem_to_hbm [thread:$0]  %s5200, 16, %s5202, [#allocation11]
    $region53: #{tpu_custom_call.1} parent=1 // pred_fallthru
      _
    // Predicated region
    $region54: #{tpu_custom_call.1} parent=1 // pred_check
      _
    $region55: #{tpu_custom_call.1} parent=1 // pred_check_branch
      %5206 = sbr.rel (0) target = $region57
    $region56: #{tpu_custom_call.1} parent=1 // pred_region
      %5208 = dma.done [#allocation8], 16
    $region57: #{tpu_custom_call.1} parent=1 // pred_fallthru
      _
    // Predicated region
    $region58: #{tpu_custom_call.1} parent=1 // pred_check
      _
    $region59: #{tpu_custom_call.1} parent=1 // pred_check_branch
      %5210 = sbr.rel (0) target = $region61
    $region60: #{tpu_custom_call.1} parent=1 // pred_region
      %5212 = dma.done [#allocation11], 16
    $region61: #{tpu_custom_call.1} parent=1 // pred_fallthru
      _
    %5213 = vsyncpa [#allocation7], 1
    %5214 = vsyncpa [#allocation8], 1
    %5215 = vsyncpa [#allocation11], 1

</llo_original>
